<compile_context>
chip_gen: v7x
topology: tpu7x:2x2x1
jax: 0.10.0
libtpu: 0.0.40
codegen_flags: <defaults>
</compile_context>

<pallas_src>
import functools

import jax
import jax.numpy as jnp
from jax import lax
from jax.experimental import pallas as pl
from jax.experimental.pallas import tpu as pltpu

H1 = 50    # hidden size of lstm_1 (per direction)
H2 = 1     # hidden size of lstm_2 (per direction)
HP = 128   # shared lane-padded block: fwd hidden at lanes 0:50, bwd at 64:114
BWD_OFF = 64


def lstm_decoder_kernel(x_ref, w1x_ref, b1_ref, whh1_ref,
                        w2a_ref, w2b_ref, b2_ref, whh2_ref,
                        out_ref,
                        o1f_scr, o1b_scr, xpf_scr, xpb_scr, h2f_scr, h2b_scr):
    # x_ref:    (Bp, E)
    # w1x_ref:  (E, 4*HP)   fused layer-1 input weights; gate blocks [i,f,g,o],
    #                       each 128 lanes: fwd at 0:50, bwd at 64:114, rest 0
    # b1_ref:   (1, 4*HP)   fused (b_ih+b_hh), same layout
    # whh1_ref: (HP, 4*HP)  packed recurrent weights (rows 0:50 fwd-h, 64:114 bwd-h)
    # w2a_ref:  (HP, 16)    layer-2 input weights consuming the fwd half of o1
    # w2b_ref:  (HP, 16)    layer-2 input weights consuming the bwd half of o1
    #                       cols 0:8 -> l2-fwd gates at even positions,
    #                       cols 8:16 -> l2-bwd gates at odd positions
    # b2_ref:   (1, 16)
    # whh2_ref: (1, 8)      layer-2 recurrent weights, [i_f,i_b,f_f,f_b,g_f,g_b,o_f,o_b]
    Bp = x_ref.shape[0]
    S = o1f_scr.shape[0]

    # ---- time-constant layer-1 input projection (both directions fused) ----
    xproj = jnp.dot(x_ref[...], w1x_ref[...],
                    preferred_element_type=jnp.float32) + b1_ref[...]   # (Bp, 512)
    whh1 = whh1_ref[...]                                                # (128, 512)

    h0 = jnp.zeros((Bp, HP), jnp.float32)

    # ---- layer 1: forward + reverse chains interleaved in one unrolled loop ----
    # Packed h: lanes 0:50 = fwd hidden at time t, lanes 64:114 = bwd hidden at
    # time S-1-t, pad lanes stay exactly 0 (zero weights/bias => tanh(0)=0).
    def l1_body(t, carry):
        h, c = carry                                         # (Bp, 128) each
        gates = xproj + jnp.dot(h, whh1,
                                preferred_element_type=jnp.float32)   # (Bp, 512)
        i = jax.nn.sigmoid(gates[:, 0 * HP:1 * HP])
        f = jax.nn.sigmoid(gates[:, 1 * HP:2 * HP])
        g = jnp.tanh(gates[:, 2 * HP:3 * HP])
        o = jax.nn.sigmoid(gates[:, 3 * HP:4 * HP])
        c = f * c + i * g
        h = o * jnp.tanh(c)
        # fwd hidden is valid for time t, bwd hidden for time S-1-t; store the
        # packed vector to both time-indexed scratches (layer-2 weights only
        # read the relevant half of each).
        o1f_scr[t] = h
        o1b_scr[S - 1 - t] = h
        return (h, c)

    lax.fori_loop(0, S, l1_body, (h0, h0), unroll=True)

    # ---- layer-2 input projections for all timesteps, both directions, at once ----
    o1f = o1f_scr[...].reshape(S * Bp, HP)
    o1b = o1b_scr[...].reshape(S * Bp, HP)
    xp16 = (jnp.dot(o1f, w2a_ref[...], preferred_element_type=jnp.float32)
            + jnp.dot(o1b, w2b_ref[...], preferred_element_type=jnp.float32)
            + b2_ref[...]).reshape(S, Bp, 16)
    xpf_scr[...] = xp16[:, :, 0:8]     # l2-fwd gate inputs (even cols), by time
    xpb_scr[...] = xp16[:, :, 8:16]    # l2-bwd gate inputs (odd cols), by time

    whh2 = whh2_ref[...]               # (1, 8)
    z2 = jnp.zeros((Bp, 2), jnp.float32)   # col 0 = fwd state, col 1 = bwd state

    # ---- layer 2: forward + reverse chains share one set of nonlinearities ----
    def l2_body(t, carry):
        h, c = carry                                       # (Bp, 2)
        xp = xpf_scr[t] + xpb_scr[S - 1 - t]               # (Bp, 8)
        hrep = jnp.concatenate([h, h, h, h], axis=-1)      # (Bp, 8): [hf,hb]*4
        gates = xp + hrep * whh2
        i = jax.nn.sigmoid(gates[:, 0:2])
        f = jax.nn.sigmoid(gates[:, 2:4])
        g = jnp.tanh(gates[:, 4:6])
        o = jax.nn.sigmoid(gates[:, 6:8])
        c = f * c + i * g
        h = o * jnp.tanh(c)
        h2f_scr[t] = h[:, 0]          # H2 == 1: "sum over hidden" is just h
        h2b_scr[S - 1 - t] = h[:, 1]
        return (h, c)

    lax.fori_loop(0, S, l2_body, (z2, z2), unroll=True)

    # single bulk output store: torch.sum over the two directions
    out_ref[...] = h2f_scr[...] + h2b_scr[...]


def pack_lstm_params(p):
    """Re-layout PyTorch-style LSTM params into fused / lane-packed forms.

    Call ONCE and cache the result; the .at[].set chains are host/one-time
    work and must not sit on the per-call forward path.
    """
    f32 = jnp.float32
    E = p["wih1f"].shape[1]
    GW = 4 * HP

    w1x = jnp.zeros((E, GW), f32)
    b1 = jnp.zeros((1, GW), f32)
    whh1 = jnp.zeros((HP, GW), f32)

    dirs = [
        (0,       p["wih1f"], p["whh1f"], p["bih1f"], p["bhh1f"]),
        (BWD_OFF, p["wih1b"], p["whh1b"], p["bih1b"], p["bhh1b"]),
    ]
    for off, wih, whh, bih, bhh in dirs:
        bias = (bih + bhh).astype(f32)
        for g in range(4):
            c0 = g * HP + off
            w1x = w1x.at[:, c0:c0 + H1].set(wih[g * H1:(g + 1) * H1, :].T.astype(f32))
            b1 = b1.at[0, c0:c0 + H1].set(bias[g * H1:(g + 1) * H1])
            whh1 = whh1.at[off:off + H1, c0:c0 + H1].set(
                whh[g * H1:(g + 1) * H1, :].T.astype(f32))

    # layer-2 weights: w2A consumes the fwd half (rows 0:50 of the packed o1),
    # w2B the bwd half (rows 64:114).  Columns 0:8 hold the l2-forward
    # direction gates at even positions, columns 8:16 the l2-backward gates at
    # odd positions, so the in-kernel merge is a single add.
    w2A = jnp.zeros((HP, 16), f32)
    w2B = jnp.zeros((HP, 16), f32)
    b2 = jnp.zeros((1, 16), f32)
    whh2 = jnp.zeros((1, 8), f32)
    for g in range(4):
        # layer-2 forward direction (gate g -> column 2g)
        w2A = w2A.at[0:H1, 2 * g].set(p["wih2f"][g, 0:H1].astype(f32))
        w2B = w2B.at[BWD_OFF:BWD_OFF + H1, 2 * g].set(p["wih2f"][g, H1:2 * H1].astype(f32))
        b2 = b2.at[0, 2 * g].set((p["bih2f"][g] + p["bhh2f"][g]).astype(f32))
        whh2 = whh2.at[0, 2 * g].set(p["whh2f"][g, 0].astype(f32))
        # layer-2 backward direction (gate g -> column 8 + 2g + 1)
        w2A = w2A.at[0:H1, 8 + 2 * g + 1].set(p["wih2b"][g, 0:H1].astype(f32))
        w2B = w2B.at[BWD_OFF:BWD_OFF + H1, 8 + 2 * g + 1].set(p["wih2b"][g, H1:2 * H1].astype(f32))
        b2 = b2.at[0, 8 + 2 * g + 1].set((p["bih2b"][g] + p["bhh2b"][g]).astype(f32))
        whh2 = whh2.at[0, 2 * g + 1].set(p["whh2b"][g, 0].astype(f32))

    return {"w1x": w1x, "b1": b1, "whh1": whh1,
            "w2A": w2A, "w2B": w2B, "b2": b2, "whh2": whh2}


def lstm_decoder_forward(x, packed, seq_len):
    """JAX wrapper matching LSTMDecoder.forward: x (B, E) -> (B, 1, seq_len)."""
    B, E = x.shape
    S = seq_len
    Bp = max(8, ((B + 7) // 8) * 8)               # pad batch to full sublanes
    x_pad = jnp.zeros((Bp, E), jnp.float32).at[:B].set(x.astype(jnp.float32))

    args = (x_pad, packed["w1x"], packed["b1"], packed["whh1"],
            packed["w2A"], packed["w2B"], packed["b2"], packed["whh2"])

    # No grid: single invocation, whole arrays resident in VMEM (no pipeline
    # double-buffering bookkeeping).
    vmem_spec = lambda: pl.BlockSpec(memory_space=pltpu.MemorySpace.VMEM)
    out = pl.pallas_call(
        lstm_decoder_kernel,
        out_shape=jax.ShapeDtypeStruct((S, Bp), jnp.float32),
        in_specs=[vmem_spec() for _ in args],
        out_specs=vmem_spec(),
        scratch_shapes=[
            pltpu.VMEM((S, Bp, HP), jnp.float32),   # packed layer-1 h, fwd time index
            pltpu.VMEM((S, Bp, HP), jnp.float32),   # packed layer-1 h, bwd time index
            pltpu.VMEM((S, Bp, 8), jnp.float32),    # layer-2 fwd-dir gate inputs (all t)
            pltpu.VMEM((S, Bp, 8), jnp.float32),    # layer-2 bwd-dir gate inputs (all t)
            pltpu.VMEM((S, Bp), jnp.float32),       # layer-2 fwd hidden per t
            pltpu.VMEM((S, Bp), jnp.float32),       # layer-2 bwd hidden per t
        ],
    )(*args)
    # (S, Bp) -> (B, S) -> (B, 1, S)  == outputs.permute(0, 2, 1) in PyTorch
    return jnp.transpose(out[:, :B], (1, 0))[:, None, :]


# ---------------- pure-JAX reference (mirrors torch.nn.LSTM) ----------------
def _ref_lstm_dir(xs, wih, whh, bih, bhh, H, reverse):
    B, T, _ = xs.shape
    b = bih + bhh
    h = jnp.zeros((B, H), jnp.float32)
    c = jnp.zeros((B, H), jnp.float32)
    outs = [None] * T
    ts = range(T - 1, -1, -1) if reverse else range(T)
    for t in ts:
        gates = xs[:, t] @ wih.T + h @ whh.T + b
        i = jax.nn.sigmoid(gates[:, 0:H])
        f = jax.nn.sigmoid(gates[:, H:2 * H])
        g = jnp.tanh(gates[:, 2 * H:3 * H])
        o = jax.nn.sigmoid(gates[:, 3 * H:4 * H])
        c = f * c + i * g
        h = o * jnp.tanh(c)
        outs[t] = h
    return jnp.stack(outs, axis=1)


def reference_forward(x, p, seq_len):
    xs = jnp.repeat(x[:, None, :], seq_len, axis=1)
    of = _ref_lstm_dir(xs, p["wih1f"], p["whh1f"], p["bih1f"], p["bhh1f"], H1, False)
    ob = _ref_lstm_dir(xs, p["wih1b"], p["whh1b"], p["bih1b"], p["bhh1b"], H1, True)
    o1 = jnp.concatenate([of, ob], axis=-1)
    of2 = _ref_lstm_dir(o1, p["wih2f"], p["whh2f"], p["bih2f"], p["bhh2f"], H2, False)
    ob2 = _ref_lstm_dir(o1, p["wih2b"], p["whh2b"], p["bih2b"], p["bhh2b"], H2, True)
    o2 = jnp.concatenate([of2, ob2], axis=-1)
    out = jnp.sum(o2, axis=-1)[:, :, None]
    return jnp.transpose(out, (0, 2, 1))


if __name__ == "__main__":
    B, E, S = 2, 32, 8          # batch, embedding_dim, seq_len

    key = jax.random.PRNGKey(0)
    keys = jax.random.split(key, 17)

    def u(k, shape, scale):
        return jax.random.uniform(k, shape, jnp.float32, -scale, scale)

    k1 = 1.0 / (H1 ** 0.5)
    k2 = 1.0 / (H2 ** 0.5)
    params = {
        # lstm_1 (input E -> hidden 50), forward & reverse directions
        "wih1f": u(keys[0], (4 * H1, E), k1),  "whh1f": u(keys[1], (4 * H1, H1), k1),
        "bih1f": u(keys[2], (4 * H1,), k1),    "bhh1f": u(keys[3], (4 * H1,), k1),
        "wih1b": u(keys[4], (4 * H1, E), k1),  "whh1b": u(keys[5], (4 * H1, H1), k1),
        "bih1b": u(keys[6], (4 * H1,), k1),    "bhh1b": u(keys[7], (4 * H1,), k1),
        # lstm_2 (input 100 -> hidden 1), forward & reverse directions
        "wih2f": u(keys[8], (4 * H2, 2 * H1), k2), "whh2f": u(keys[9], (4 * H2, H2), k2),
        "bih2f": u(keys[10], (4 * H2,), k2),       "bhh2f": u(keys[11], (4 * H2,), k2),
        "wih2b": u(keys[12], (4 * H2, 2 * H1), k2), "whh2b": u(keys[13], (4 * H2, H2), k2),
        "bih2b": u(keys[14], (4 * H2,), k2),        "bhh2b": u(keys[15], (4 * H2,), k2),
    }
    x = jax.random.normal(keys[16], (B, E), jnp.float32)

    # Pack weights ONCE (hoisted off the per-call forward path), then run the
    # jitted forward with the cached packed params.
    packed = jax.tree_util.tree_map(jax.block_until_ready, pack_lstm_params(params))
    forward = jax.jit(lstm_decoder_forward, static_argnums=(2,))

    out = forward(x, packed, S)
    out = jax.block_until_ready(out)

    ref = reference_forward(x, params, S)
    assert out.shape == (B, 1, S), out.shape
    assert jnp.allclose(out, ref, atol=1e-4, rtol=1e-4), (
        float(jnp.max(jnp.abs(out - ref))))
    print("KERNEL_OK")
</pallas_src>

<mosaic_0001>
module attributes {stable_mosaic.version = 11 : i64} {
  func.func @lstm_decoder_kernel(%arg0: memref<8x32xf32, #tpu.memory_space<vmem>>, %arg1: memref<32x512xf32, #tpu.memory_space<vmem>>, %arg2: memref<1x512xf32, #tpu.memory_space<vmem>>, %arg3: memref<128x512xf32, #tpu.memory_space<vmem>>, %arg4: memref<128x16xf32, #tpu.memory_space<vmem>>, %arg5: memref<128x16xf32, #tpu.memory_space<vmem>>, %arg6: memref<1x16xf32, #tpu.memory_space<vmem>>, %arg7: memref<1x8xf32, #tpu.memory_space<vmem>>, %arg8: memref<8x8xf32, #tpu.memory_space<vmem>>, %arg9: memref<8x8x128xf32, #tpu.memory_space<vmem>>, %arg10: memref<8x8x128xf32, #tpu.memory_space<vmem>>, %arg11: memref<8x8x8xf32, #tpu.memory_space<vmem>>, %arg12: memref<8x8x8xf32, #tpu.memory_space<vmem>>, %arg13: memref<8x8xf32, #tpu.memory_space<vmem>>, %arg14: memref<8x8xf32, #tpu.memory_space<vmem>>) attributes {dimension_semantics = [], scalar_prefetch = 0 : i64, scratch_operands = 6 : i64, tpu.core_type = #tpu.core_type<tc>} {
    %c0 = arith.constant 0 : index
    %c0_0 = arith.constant 0 : index
    %0 = vector.load %arg0[%c0, %c0_0] : memref<8x32xf32, #tpu.memory_space<vmem>>, vector<8x32xf32>
    %c0_1 = arith.constant 0 : index
    %c0_2 = arith.constant 0 : index
    %1 = vector.load %arg1[%c0_1, %c0_2] : memref<32x512xf32, #tpu.memory_space<vmem>>, vector<32x512xf32>
    %cst = arith.constant dense<0.000000e+00> : vector<8x512xf32>
    %2 = tpu.matmul %0, %1, %cst {dimension_numbers = #tpu.dot_dimension_numbers<[1], [0], [0], [1], [0, 0, 1, 1], [], []>} : vector<8x32xf32>, vector<32x512xf32>, vector<8x512xf32> -> vector<8x512xf32>
    %c0_3 = arith.constant 0 : index
    %c0_4 = arith.constant 0 : index
    %3 = vector.load %arg2[%c0_3, %c0_4] : memref<1x512xf32, #tpu.memory_space<vmem>>, vector<1x512xf32>
    %4 = vector.broadcast %3 : vector<1x512xf32> to vector<8x512xf32>
    %5 = arith.addf %2, %4 : vector<8x512xf32>
    %c0_5 = arith.constant 0 : index
    %c0_6 = arith.constant 0 : index
    %6 = vector.load %arg3[%c0_5, %c0_6] : memref<128x512xf32, #tpu.memory_space<vmem>>, vector<128x512xf32>
    %cst_7 = arith.constant 0.000000e+00 : f32
    %7 = vector.broadcast %cst_7 : f32 to vector<8x128xf32>
    %c0_i32 = arith.constant 0 : i32
    %cst_8 = arith.constant dense<0.000000e+00> : vector<8x512xf32>
    %8 = tpu.matmul %7, %6, %cst_8 {dimension_numbers = #tpu.dot_dimension_numbers<[1], [0], [0], [1], [0, 0, 1, 1], [], []>} : vector<8x128xf32>, vector<128x512xf32>, vector<8x512xf32> -> vector<8x512xf32>
    %9 = arith.addf %5, %8 : vector<8x512xf32>
    %10 = vector.extract_strided_slice %9 {offsets = [0, 0], sizes = [8, 128], strides = [1, 1]} : vector<8x512xf32> to vector<8x128xf32>
    %11 = arith.negf %10 : vector<8x128xf32>
    %12 = math.exp %11 : vector<8x128xf32>
    %cst_9 = arith.constant 1.000000e+00 : f32
    %13 = vector.broadcast %cst_9 : f32 to vector<8x128xf32>
    %14 = arith.addf %13, %12 : vector<8x128xf32>
    %15 = arith.divf %13, %14 : vector<8x128xf32>
    %16 = vector.extract_strided_slice %9 {offsets = [0, 128], sizes = [8, 128], strides = [1, 1]} : vector<8x512xf32> to vector<8x128xf32>
    %17 = arith.negf %16 : vector<8x128xf32>
    %18 = math.exp %17 : vector<8x128xf32>
    %cst_10 = arith.constant 1.000000e+00 : f32
    %19 = vector.broadcast %cst_10 : f32 to vector<8x128xf32>
    %20 = arith.addf %19, %18 : vector<8x128xf32>
    %21 = arith.divf %19, %20 : vector<8x128xf32>
    %22 = vector.extract_strided_slice %9 {offsets = [0, 256], sizes = [8, 128], strides = [1, 1]} : vector<8x512xf32> to vector<8x128xf32>
    %23 = math.tanh %22 : vector<8x128xf32>
    %24 = vector.extract_strided_slice %9 {offsets = [0, 384], sizes = [8, 128], strides = [1, 1]} : vector<8x512xf32> to vector<8x128xf32>
    %25 = arith.negf %24 : vector<8x128xf32>
    %26 = math.exp %25 : vector<8x128xf32>
    %cst_11 = arith.constant 1.000000e+00 : f32
    %27 = vector.broadcast %cst_11 : f32 to vector<8x128xf32>
    %28 = arith.addf %27, %26 : vector<8x128xf32>
    %29 = arith.divf %27, %28 : vector<8x128xf32>
    %30 = arith.mulf %21, %7 : vector<8x128xf32>
    %31 = arith.mulf %15, %23 : vector<8x128xf32>
    %32 = arith.addf %30, %31 : vector<8x128xf32>
    %33 = math.tanh %32 : vector<8x128xf32>
    %34 = arith.mulf %29, %33 : vector<8x128xf32>
    %35 = arith.index_cast %c0_i32 : i32 to index
    %c0_12 = arith.constant 0 : index
    %c0_13 = arith.constant 0 : index
    %36 = vector.load %arg9[%35, %c0_12, %c0_13] : memref<8x8x128xf32, #tpu.memory_space<vmem>>, vector<1x8x128xf32>
    %37 = vector.shape_cast %36 : vector<1x8x128xf32> to vector<8x128xf32>
    %38 = vector.shape_cast %34 : vector<8x128xf32> to vector<1x8x128xf32>
    tpu.vector_store %arg9[%35, %c0_12, %c0_13], %38 {strides = array<i32>} : memref<8x8x128xf32, #tpu.memory_space<vmem>>, vector<1x8x128xf32>,
    %c7_i32 = arith.constant 7 : i32
    %39 = arith.subi %c7_i32, %c0_i32 : i32
    %40 = arith.index_cast %39 : i32 to index
    %c0_14 = arith.constant 0 : index
    %c0_15 = arith.constant 0 : index
    %41 = vector.load %arg10[%40, %c0_14, %c0_15] : memref<8x8x128xf32, #tpu.memory_space<vmem>>, vector<1x8x128xf32>
    %42 = vector.shape_cast %41 : vector<1x8x128xf32> to vector<8x128xf32>
    %43 = vector.shape_cast %34 : vector<8x128xf32> to vector<1x8x128xf32>
    tpu.vector_store %arg10[%40, %c0_14, %c0_15], %43 {strides = array<i32>} : memref<8x8x128xf32, #tpu.memory_space<vmem>>, vector<1x8x128xf32>,
    %c1_i32 = arith.constant 1 : i32
    %cst_16 = arith.constant dense<0.000000e+00> : vector<8x512xf32>
    %44 = tpu.matmul %34, %6, %cst_16 {dimension_numbers = #tpu.dot_dimension_numbers<[1], [0], [0], [1], [0, 0, 1, 1], [], []>} : vector<8x128xf32>, vector<128x512xf32>, vector<8x512xf32> -> vector<8x512xf32>
    %45 = arith.addf %5, %44 : vector<8x512xf32>
    %46 = vector.extract_strided_slice %45 {offsets = [0, 0], sizes = [8, 128], strides = [1, 1]} : vector<8x512xf32> to vector<8x128xf32>
    %47 = arith.negf %46 : vector<8x128xf32>
    %48 = math.exp %47 : vector<8x128xf32>
    %cst_17 = arith.constant 1.000000e+00 : f32
    %49 = vector.broadcast %cst_17 : f32 to vector<8x128xf32>
    %50 = arith.addf %49, %48 : vector<8x128xf32>
    %51 = arith.divf %49, %50 : vector<8x128xf32>
    %52 = vector.extract_strided_slice %45 {offsets = [0, 128], sizes = [8, 128], strides = [1, 1]} : vector<8x512xf32> to vector<8x128xf32>
    %53 = arith.negf %52 : vector<8x128xf32>
    %54 = math.exp %53 : vector<8x128xf32>
    %cst_18 = arith.constant 1.000000e+00 : f32
    %55 = vector.broadcast %cst_18 : f32 to vector<8x128xf32>
    %56 = arith.addf %55, %54 : vector<8x128xf32>
    %57 = arith.divf %55, %56 : vector<8x128xf32>
    %58 = vector.extract_strided_slice %45 {offsets = [0, 256], sizes = [8, 128], strides = [1, 1]} : vector<8x512xf32> to vector<8x128xf32>
    %59 = math.tanh %58 : vector<8x128xf32>
    %60 = vector.extract_strided_slice %45 {offsets = [0, 384], sizes = [8, 128], strides = [1, 1]} : vector<8x512xf32> to vector<8x128xf32>
    %61 = arith.negf %60 : vector<8x128xf32>
    %62 = math.exp %61 : vector<8x128xf32>
    %cst_19 = arith.constant 1.000000e+00 : f32
    %63 = vector.broadcast %cst_19 : f32 to vector<8x128xf32>
    %64 = arith.addf %63, %62 : vector<8x128xf32>
    %65 = arith.divf %63, %64 : vector<8x128xf32>
    %66 = arith.mulf %57, %32 : vector<8x128xf32>
    %67 = arith.mulf %51, %59 : vector<8x128xf32>
    %68 = arith.addf %66, %67 : vector<8x128xf32>
    %69 = math.tanh %68 : vector<8x128xf32>
    %70 = arith.mulf %65, %69 : vector<8x128xf32>
    %71 = arith.index_cast %c1_i32 : i32 to index
    %c0_20 = arith.constant 0 : index
    %c0_21 = arith.constant 0 : index
    %72 = vector.load %arg9[%71, %c0_20, %c0_21] : memref<8x8x128xf32, #tpu.memory_space<vmem>>, vector<1x8x128xf32>
    %73 = vector.shape_cast %72 : vector<1x8x128xf32> to vector<8x128xf32>
    %74 = vector.shape_cast %70 : vector<8x128xf32> to vector<1x8x128xf32>
    tpu.vector_store %arg9[%71, %c0_20, %c0_21], %74 {strides = array<i32>} : memref<8x8x128xf32, #tpu.memory_space<vmem>>, vector<1x8x128xf32>,
    %c7_i32_22 = arith.constant 7 : i32
    %75 = arith.subi %c7_i32_22, %c1_i32 : i32
    %76 = arith.index_cast %75 : i32 to index
    %c0_23 = arith.constant 0 : index
    %c0_24 = arith.constant 0 : index
    %77 = vector.load %arg10[%76, %c0_23, %c0_24] : memref<8x8x128xf32, #tpu.memory_space<vmem>>, vector<1x8x128xf32>
    %78 = vector.shape_cast %77 : vector<1x8x128xf32> to vector<8x128xf32>
    %79 = vector.shape_cast %70 : vector<8x128xf32> to vector<1x8x128xf32>
    tpu.vector_store %arg10[%76, %c0_23, %c0_24], %79 {strides = array<i32>} : memref<8x8x128xf32, #tpu.memory_space<vmem>>, vector<1x8x128xf32>,
    %c2_i32 = arith.constant 2 : i32
    %cst_25 = arith.constant dense<0.000000e+00> : vector<8x512xf32>
    %80 = tpu.matmul %70, %6, %cst_25 {dimension_numbers = #tpu.dot_dimension_numbers<[1], [0], [0], [1], [0, 0, 1, 1], [], []>} : vector<8x128xf32>, vector<128x512xf32>, vector<8x512xf32> -> vector<8x512xf32>
    %81 = arith.addf %5, %80 : vector<8x512xf32>
    %82 = vector.extract_strided_slice %81 {offsets = [0, 0], sizes = [8, 128], strides = [1, 1]} : vector<8x512xf32> to vector<8x128xf32>
    %83 = arith.negf %82 : vector<8x128xf32>
    %84 = math.exp %83 : vector<8x128xf32>
    %cst_26 = arith.constant 1.000000e+00 : f32
    %85 = vector.broadcast %cst_26 : f32 to vector<8x128xf32>
    %86 = arith.addf %85, %84 : vector<8x128xf32>
    %87 = arith.divf %85, %86 : vector<8x128xf32>
    %88 = vector.extract_strided_slice %81 {offsets = [0, 128], sizes = [8, 128], strides = [1, 1]} : vector<8x512xf32> to vector<8x128xf32>
    %89 = arith.negf %88 : vector<8x128xf32>
    %90 = math.exp %89 : vector<8x128xf32>
    %cst_27 = arith.constant 1.000000e+00 : f32
    %91 = vector.broadcast %cst_27 : f32 to vector<8x128xf32>
    %92 = arith.addf %91, %90 : vector<8x128xf32>
    %93 = arith.divf %91, %92 : vector<8x128xf32>
    %94 = vector.extract_strided_slice %81 {offsets = [0, 256], sizes = [8, 128], strides = [1, 1]} : vector<8x512xf32> to vector<8x128xf32>
    %95 = math.tanh %94 : vector<8x128xf32>
    %96 = vector.extract_strided_slice %81 {offsets = [0, 384], sizes = [8, 128], strides = [1, 1]} : vector<8x512xf32> to vector<8x128xf32>
    %97 = arith.negf %96 : vector<8x128xf32>
    %98 = math.exp %97 : vector<8x128xf32>
    %cst_28 = arith.constant 1.000000e+00 : f32
    %99 = vector.broadcast %cst_28 : f32 to vector<8x128xf32>
    %100 = arith.addf %99, %98 : vector<8x128xf32>
    %101 = arith.divf %99, %100 : vector<8x128xf32>
    %102 = arith.mulf %93, %68 : vector<8x128xf32>
    %103 = arith.mulf %87, %95 : vector<8x128xf32>
    %104 = arith.addf %102, %103 : vector<8x128xf32>
    %105 = math.tanh %104 : vector<8x128xf32>
    %106 = arith.mulf %101, %105 : vector<8x128xf32>
    %107 = arith.index_cast %c2_i32 : i32 to index
    %c0_29 = arith.constant 0 : index
    %c0_30 = arith.constant 0 : index
    %108 = vector.load %arg9[%107, %c0_29, %c0_30] : memref<8x8x128xf32, #tpu.memory_space<vmem>>, vector<1x8x128xf32>
    %109 = vector.shape_cast %108 : vector<1x8x128xf32> to vector<8x128xf32>
    %110 = vector.shape_cast %106 : vector<8x128xf32> to vector<1x8x128xf32>
    tpu.vector_store %arg9[%107, %c0_29, %c0_30], %110 {strides = array<i32>} : memref<8x8x128xf32, #tpu.memory_space<vmem>>, vector<1x8x128xf32>,
    %c7_i32_31 = arith.constant 7 : i32
    %111 = arith.subi %c7_i32_31, %c2_i32 : i32
    %112 = arith.index_cast %111 : i32 to index
    %c0_32 = arith.constant 0 : index
    %c0_33 = arith.constant 0 : index
    %113 = vector.load %arg10[%112, %c0_32, %c0_33] : memref<8x8x128xf32, #tpu.memory_space<vmem>>, vector<1x8x128xf32>
    %114 = vector.shape_cast %113 : vector<1x8x128xf32> to vector<8x128xf32>
    %115 = vector.shape_cast %106 : vector<8x128xf32> to vector<1x8x128xf32>
    tpu.vector_store %arg10[%112, %c0_32, %c0_33], %115 {strides = array<i32>} : memref<8x8x128xf32, #tpu.memory_space<vmem>>, vector<1x8x128xf32>,
    %c3_i32 = arith.constant 3 : i32
    %cst_34 = arith.constant dense<0.000000e+00> : vector<8x512xf32>
    %116 = tpu.matmul %106, %6, %cst_34 {dimension_numbers = #tpu.dot_dimension_numbers<[1], [0], [0], [1], [0, 0, 1, 1], [], []>} : vector<8x128xf32>, vector<128x512xf32>, vector<8x512xf32> -> vector<8x512xf32>
    %117 = arith.addf %5, %116 : vector<8x512xf32>
    %118 = vector.extract_strided_slice %117 {offsets = [0, 0], sizes = [8, 128], strides = [1, 1]} : vector<8x512xf32> to vector<8x128xf32>
    %119 = arith.negf %118 : vector<8x128xf32>
    %120 = math.exp %119 : vector<8x128xf32>
    %cst_35 = arith.constant 1.000000e+00 : f32
    %121 = vector.broadcast %cst_35 : f32 to vector<8x128xf32>
    %122 = arith.addf %121, %120 : vector<8x128xf32>
    %123 = arith.divf %121, %122 : vector<8x128xf32>
    %124 = vector.extract_strided_slice %117 {offsets = [0, 128], sizes = [8, 128], strides = [1, 1]} : vector<8x512xf32> to vector<8x128xf32>
    %125 = arith.negf %124 : vector<8x128xf32>
    %126 = math.exp %125 : vector<8x128xf32>
    %cst_36 = arith.constant 1.000000e+00 : f32
    %127 = vector.broadcast %cst_36 : f32 to vector<8x128xf32>
    %128 = arith.addf %127, %126 : vector<8x128xf32>
    %129 = arith.divf %127, %128 : vector<8x128xf32>
    %130 = vector.extract_strided_slice %117 {offsets = [0, 256], sizes = [8, 128], strides = [1, 1]} : vector<8x512xf32> to vector<8x128xf32>
    %131 = math.tanh %130 : vector<8x128xf32>
    %132 = vector.extract_strided_slice %117 {offsets = [0, 384], sizes = [8, 128], strides = [1, 1]} : vector<8x512xf32> to vector<8x128xf32>
    %133 = arith.negf %132 : vector<8x128xf32>
    %134 = math.exp %133 : vector<8x128xf32>
    %cst_37 = arith.constant 1.000000e+00 : f32
    %135 = vector.broadcast %cst_37 : f32 to vector<8x128xf32>
    %136 = arith.addf %135, %134 : vector<8x128xf32>
    %137 = arith.divf %135, %136 : vector<8x128xf32>
    %138 = arith.mulf %129, %104 : vector<8x128xf32>
    %139 = arith.mulf %123, %131 : vector<8x128xf32>
    %140 = arith.addf %138, %139 : vector<8x128xf32>
    %141 = math.tanh %140 : vector<8x128xf32>
    %142 = arith.mulf %137, %141 : vector<8x128xf32>
    %143 = arith.index_cast %c3_i32 : i32 to index
    %c0_38 = arith.constant 0 : index
    %c0_39 = arith.constant 0 : index
    %144 = vector.load %arg9[%143, %c0_38, %c0_39] : memref<8x8x128xf32, #tpu.memory_space<vmem>>, vector<1x8x128xf32>
    %145 = vector.shape_cast %144 : vector<1x8x128xf32> to vector<8x128xf32>
    %146 = vector.shape_cast %142 : vector<8x128xf32> to vector<1x8x128xf32>
    tpu.vector_store %arg9[%143, %c0_38, %c0_39], %146 {strides = array<i32>} : memref<8x8x128xf32, #tpu.memory_space<vmem>>, vector<1x8x128xf32>,
    %c7_i32_40 = arith.constant 7 : i32
    %147 = arith.subi %c7_i32_40, %c3_i32 : i32
    %148 = arith.index_cast %147 : i32 to index
    %c0_41 = arith.constant 0 : index
    %c0_42 = arith.constant 0 : index
    %149 = vector.load %arg10[%148, %c0_41, %c0_42] : memref<8x8x128xf32, #tpu.memory_space<vmem>>, vector<1x8x128xf32>
    %150 = vector.shape_cast %149 : vector<1x8x128xf32> to vector<8x128xf32>
    %151 = vector.shape_cast %142 : vector<8x128xf32> to vector<1x8x128xf32>
    tpu.vector_store %arg10[%148, %c0_41, %c0_42], %151 {strides = array<i32>} : memref<8x8x128xf32, #tpu.memory_space<vmem>>, vector<1x8x128xf32>,
    %c4_i32 = arith.constant 4 : i32
    %cst_43 = arith.constant dense<0.000000e+00> : vector<8x512xf32>
    %152 = tpu.matmul %142, %6, %cst_43 {dimension_numbers = #tpu.dot_dimension_numbers<[1], [0], [0], [1], [0, 0, 1, 1], [], []>} : vector<8x128xf32>, vector<128x512xf32>, vector<8x512xf32> -> vector<8x512xf32>
    %153 = arith.addf %5, %152 : vector<8x512xf32>
    %154 = vector.extract_strided_slice %153 {offsets = [0, 0], sizes = [8, 128], strides = [1, 1]} : vector<8x512xf32> to vector<8x128xf32>
    %155 = arith.negf %154 : vector<8x128xf32>
    %156 = math.exp %155 : vector<8x128xf32>
    %cst_44 = arith.constant 1.000000e+00 : f32
    %157 = vector.broadcast %cst_44 : f32 to vector<8x128xf32>
    %158 = arith.addf %157, %156 : vector<8x128xf32>
    %159 = arith.divf %157, %158 : vector<8x128xf32>
    %160 = vector.extract_strided_slice %153 {offsets = [0, 128], sizes = [8, 128], strides = [1, 1]} : vector<8x512xf32> to vector<8x128xf32>
    %161 = arith.negf %160 : vector<8x128xf32>
    %162 = math.exp %161 : vector<8x128xf32>
    %cst_45 = arith.constant 1.000000e+00 : f32
    %163 = vector.broadcast %cst_45 : f32 to vector<8x128xf32>
    %164 = arith.addf %163, %162 : vector<8x128xf32>
    %165 = arith.divf %163, %164 : vector<8x128xf32>
    %166 = vector.extract_strided_slice %153 {offsets = [0, 256], sizes = [8, 128], strides = [1, 1]} : vector<8x512xf32> to vector<8x128xf32>
    %167 = math.tanh %166 : vector<8x128xf32>
    %168 = vector.extract_strided_slice %153 {offsets = [0, 384], sizes = [8, 128], strides = [1, 1]} : vector<8x512xf32> to vector<8x128xf32>
    %169 = arith.negf %168 : vector<8x128xf32>
    %170 = math.exp %169 : vector<8x128xf32>
    %cst_46 = arith.constant 1.000000e+00 : f32
    %171 = vector.broadcast %cst_46 : f32 to vector<8x128xf32>
    %172 = arith.addf %171, %170 : vector<8x128xf32>
    %173 = arith.divf %171, %172 : vector<8x128xf32>
    %174 = arith.mulf %165, %140 : vector<8x128xf32>
    %175 = arith.mulf %159, %167 : vector<8x128xf32>
    %176 = arith.addf %174, %175 : vector<8x128xf32>
    %177 = math.tanh %176 : vector<8x128xf32>
    %178 = arith.mulf %173, %177 : vector<8x128xf32>
    %179 = arith.index_cast %c4_i32 : i32 to index
    %c0_47 = arith.constant 0 : index
    %c0_48 = arith.constant 0 : index
    %180 = vector.load %arg9[%179, %c0_47, %c0_48] : memref<8x8x128xf32, #tpu.memory_space<vmem>>, vector<1x8x128xf32>
    %181 = vector.shape_cast %180 : vector<1x8x128xf32> to vector<8x128xf32>
    %182 = vector.shape_cast %178 : vector<8x128xf32> to vector<1x8x128xf32>
    tpu.vector_store %arg9[%179, %c0_47, %c0_48], %182 {strides = array<i32>} : memref<8x8x128xf32, #tpu.memory_space<vmem>>, vector<1x8x128xf32>,
    %c7_i32_49 = arith.constant 7 : i32
    %183 = arith.subi %c7_i32_49, %c4_i32 : i32
    %184 = arith.index_cast %183 : i32 to index
    %c0_50 = arith.constant 0 : index
    %c0_51 = arith.constant 0 : index
    %185 = vector.load %arg10[%184, %c0_50, %c0_51] : memref<8x8x128xf32, #tpu.memory_space<vmem>>, vector<1x8x128xf32>
    %186 = vector.shape_cast %185 : vector<1x8x128xf32> to vector<8x128xf32>
    %187 = vector.shape_cast %178 : vector<8x128xf32> to vector<1x8x128xf32>
    tpu.vector_store %arg10[%184, %c0_50, %c0_51], %187 {strides = array<i32>} : memref<8x8x128xf32, #tpu.memory_space<vmem>>, vector<1x8x128xf32>,
    %c5_i32 = arith.constant 5 : i32
    %cst_52 = arith.constant dense<0.000000e+00> : vector<8x512xf32>
    %188 = tpu.matmul %178, %6, %cst_52 {dimension_numbers = #tpu.dot_dimension_numbers<[1], [0], [0], [1], [0, 0, 1, 1], [], []>} : vector<8x128xf32>, vector<128x512xf32>, vector<8x512xf32> -> vector<8x512xf32>
    %189 = arith.addf %5, %188 : vector<8x512xf32>
    %190 = vector.extract_strided_slice %189 {offsets = [0, 0], sizes = [8, 128], strides = [1, 1]} : vector<8x512xf32> to vector<8x128xf32>
    %191 = arith.negf %190 : vector<8x128xf32>
    %192 = math.exp %191 : vector<8x128xf32>
    %cst_53 = arith.constant 1.000000e+00 : f32
    %193 = vector.broadcast %cst_53 : f32 to vector<8x128xf32>
    %194 = arith.addf %193, %192 : vector<8x128xf32>
    %195 = arith.divf %193, %194 : vector<8x128xf32>
    %196 = vector.extract_strided_slice %189 {offsets = [0, 128], sizes = [8, 128], strides = [1, 1]} : vector<8x512xf32> to vector<8x128xf32>
    %197 = arith.negf %196 : vector<8x128xf32>
    %198 = math.exp %197 : vector<8x128xf32>
    %cst_54 = arith.constant 1.000000e+00 : f32
    %199 = vector.broadcast %cst_54 : f32 to vector<8x128xf32>
    %200 = arith.addf %199, %198 : vector<8x128xf32>
    %201 = arith.divf %199, %200 : vector<8x128xf32>
    %202 = vector.extract_strided_slice %189 {offsets = [0, 256], sizes = [8, 128], strides = [1, 1]} : vector<8x512xf32> to vector<8x128xf32>
    %203 = math.tanh %202 : vector<8x128xf32>
    %204 = vector.extract_strided_slice %189 {offsets = [0, 384], sizes = [8, 128], strides = [1, 1]} : vector<8x512xf32> to vector<8x128xf32>
    %205 = arith.negf %204 : vector<8x128xf32>
    %206 = math.exp %205 : vector<8x128xf32>
    %cst_55 = arith.constant 1.000000e+00 : f32
    %207 = vector.broadcast %cst_55 : f32 to vector<8x128xf32>
    %208 = arith.addf %207, %206 : vector<8x128xf32>
    %209 = arith.divf %207, %208 : vector<8x128xf32>
    %210 = arith.mulf %201, %176 : vector<8x128xf32>
    %211 = arith.mulf %195, %203 : vector<8x128xf32>
    %212 = arith.addf %210, %211 : vector<8x128xf32>
    %213 = math.tanh %212 : vector<8x128xf32>
    %214 = arith.mulf %209, %213 : vector<8x128xf32>
    %215 = arith.index_cast %c5_i32 : i32 to index
    %c0_56 = arith.constant 0 : index
    %c0_57 = arith.constant 0 : index
    %216 = vector.load %arg9[%215, %c0_56, %c0_57] : memref<8x8x128xf32, #tpu.memory_space<vmem>>, vector<1x8x128xf32>
    %217 = vector.shape_cast %216 : vector<1x8x128xf32> to vector<8x128xf32>
    %218 = vector.shape_cast %214 : vector<8x128xf32> to vector<1x8x128xf32>
    tpu.vector_store %arg9[%215, %c0_56, %c0_57], %218 {strides = array<i32>} : memref<8x8x128xf32, #tpu.memory_space<vmem>>, vector<1x8x128xf32>,
    %c7_i32_58 = arith.constant 7 : i32
    %219 = arith.subi %c7_i32_58, %c5_i32 : i32
    %220 = arith.index_cast %219 : i32 to index
    %c0_59 = arith.constant 0 : index
    %c0_60 = arith.constant 0 : index
    %221 = vector.load %arg10[%220, %c0_59, %c0_60] : memref<8x8x128xf32, #tpu.memory_space<vmem>>, vector<1x8x128xf32>
    %222 = vector.shape_cast %221 : vector<1x8x128xf32> to vector<8x128xf32>
    %223 = vector.shape_cast %214 : vector<8x128xf32> to vector<1x8x128xf32>
    tpu.vector_store %arg10[%220, %c0_59, %c0_60], %223 {strides = array<i32>} : memref<8x8x128xf32, #tpu.memory_space<vmem>>, vector<1x8x128xf32>,
    %c6_i32 = arith.constant 6 : i32
    %cst_61 = arith.constant dense<0.000000e+00> : vector<8x512xf32>
    %224 = tpu.matmul %214, %6, %cst_61 {dimension_numbers = #tpu.dot_dimension_numbers<[1], [0], [0], [1], [0, 0, 1, 1], [], []>} : vector<8x128xf32>, vector<128x512xf32>, vector<8x512xf32> -> vector<8x512xf32>
    %225 = arith.addf %5, %224 : vector<8x512xf32>
    %226 = vector.extract_strided_slice %225 {offsets = [0, 0], sizes = [8, 128], strides = [1, 1]} : vector<8x512xf32> to vector<8x128xf32>
    %227 = arith.negf %226 : vector<8x128xf32>
    %228 = math.exp %227 : vector<8x128xf32>
    %cst_62 = arith.constant 1.000000e+00 : f32
    %229 = vector.broadcast %cst_62 : f32 to vector<8x128xf32>
    %230 = arith.addf %229, %228 : vector<8x128xf32>
    %231 = arith.divf %229, %230 : vector<8x128xf32>
    %232 = vector.extract_strided_slice %225 {offsets = [0, 128], sizes = [8, 128], strides = [1, 1]} : vector<8x512xf32> to vector<8x128xf32>
    %233 = arith.negf %232 : vector<8x128xf32>
    %234 = math.exp %233 : vector<8x128xf32>
    %cst_63 = arith.constant 1.000000e+00 : f32
    %235 = vector.broadcast %cst_63 : f32 to vector<8x128xf32>
    %236 = arith.addf %235, %234 : vector<8x128xf32>
    %237 = arith.divf %235, %236 : vector<8x128xf32>
    %238 = vector.extract_strided_slice %225 {offsets = [0, 256], sizes = [8, 128], strides = [1, 1]} : vector<8x512xf32> to vector<8x128xf32>
    %239 = math.tanh %238 : vector<8x128xf32>
    %240 = vector.extract_strided_slice %225 {offsets = [0, 384], sizes = [8, 128], strides = [1, 1]} : vector<8x512xf32> to vector<8x128xf32>
    %241 = arith.negf %240 : vector<8x128xf32>
    %242 = math.exp %241 : vector<8x128xf32>
    %cst_64 = arith.constant 1.000000e+00 : f32
    %243 = vector.broadcast %cst_64 : f32 to vector<8x128xf32>
    %244 = arith.addf %243, %242 : vector<8x128xf32>
    %245 = arith.divf %243, %244 : vector<8x128xf32>
    %246 = arith.mulf %237, %212 : vector<8x128xf32>
    %247 = arith.mulf %231, %239 : vector<8x128xf32>
    %248 = arith.addf %246, %247 : vector<8x128xf32>
    %249 = math.tanh %248 : vector<8x128xf32>
    %250 = arith.mulf %245, %249 : vector<8x128xf32>
    %251 = arith.index_cast %c6_i32 : i32 to index
    %c0_65 = arith.constant 0 : index
    %c0_66 = arith.constant 0 : index
    %252 = vector.load %arg9[%251, %c0_65, %c0_66] : memref<8x8x128xf32, #tpu.memory_space<vmem>>, vector<1x8x128xf32>
    %253 = vector.shape_cast %252 : vector<1x8x128xf32> to vector<8x128xf32>
    %254 = vector.shape_cast %250 : vector<8x128xf32> to vector<1x8x128xf32>
    tpu.vector_store %arg9[%251, %c0_65, %c0_66], %254 {strides = array<i32>} : memref<8x8x128xf32, #tpu.memory_space<vmem>>, vector<1x8x128xf32>,
    %c7_i32_67 = arith.constant 7 : i32
    %255 = arith.subi %c7_i32_67, %c6_i32 : i32
    %256 = arith.index_cast %255 : i32 to index
    %c0_68 = arith.constant 0 : index
    %c0_69 = arith.constant 0 : index
    %257 = vector.load %arg10[%256, %c0_68, %c0_69] : memref<8x8x128xf32, #tpu.memory_space<vmem>>, vector<1x8x128xf32>
    %258 = vector.shape_cast %257 : vector<1x8x128xf32> to vector<8x128xf32>
    %259 = vector.shape_cast %250 : vector<8x128xf32> to vector<1x8x128xf32>
    tpu.vector_store %arg10[%256, %c0_68, %c0_69], %259 {strides = array<i32>} : memref<8x8x128xf32, #tpu.memory_space<vmem>>, vector<1x8x128xf32>,
    %c7_i32_70 = arith.constant 7 : i32
    %cst_71 = arith.constant dense<0.000000e+00> : vector<8x512xf32>
    %260 = tpu.matmul %250, %6, %cst_71 {dimension_numbers = #tpu.dot_dimension_numbers<[1], [0], [0], [1], [0, 0, 1, 1], [], []>} : vector<8x128xf32>, vector<128x512xf32>, vector<8x512xf32> -> vector<8x512xf32>
    %261 = arith.addf %5, %260 : vector<8x512xf32>
    %262 = vector.extract_strided_slice %261 {offsets = [0, 0], sizes = [8, 128], strides = [1, 1]} : vector<8x512xf32> to vector<8x128xf32>
    %263 = arith.negf %262 : vector<8x128xf32>
    %264 = math.exp %263 : vector<8x128xf32>
    %cst_72 = arith.constant 1.000000e+00 : f32
    %265 = vector.broadcast %cst_72 : f32 to vector<8x128xf32>
    %266 = arith.addf %265, %264 : vector<8x128xf32>
    %267 = arith.divf %265, %266 : vector<8x128xf32>
    %268 = vector.extract_strided_slice %261 {offsets = [0, 128], sizes = [8, 128], strides = [1, 1]} : vector<8x512xf32> to vector<8x128xf32>
    %269 = arith.negf %268 : vector<8x128xf32>
    %270 = math.exp %269 : vector<8x128xf32>
    %cst_73 = arith.constant 1.000000e+00 : f32
    %271 = vector.broadcast %cst_73 : f32 to vector<8x128xf32>
    %272 = arith.addf %271, %270 : vector<8x128xf32>
    %273 = arith.divf %271, %272 : vector<8x128xf32>
    %274 = vector.extract_strided_slice %261 {offsets = [0, 256], sizes = [8, 128], strides = [1, 1]} : vector<8x512xf32> to vector<8x128xf32>
    %275 = math.tanh %274 : vector<8x128xf32>
    %276 = vector.extract_strided_slice %261 {offsets = [0, 384], sizes = [8, 128], strides = [1, 1]} : vector<8x512xf32> to vector<8x128xf32>
    %277 = arith.negf %276 : vector<8x128xf32>
    %278 = math.exp %277 : vector<8x128xf32>
    %cst_74 = arith.constant 1.000000e+00 : f32
    %279 = vector.broadcast %cst_74 : f32 to vector<8x128xf32>
    %280 = arith.addf %279, %278 : vector<8x128xf32>
    %281 = arith.divf %279, %280 : vector<8x128xf32>
    %282 = arith.mulf %273, %248 : vector<8x128xf32>
    %283 = arith.mulf %267, %275 : vector<8x128xf32>
    %284 = arith.addf %282, %283 : vector<8x128xf32>
    %285 = math.tanh %284 : vector<8x128xf32>
    %286 = arith.mulf %281, %285 : vector<8x128xf32>
    %287 = arith.index_cast %c7_i32_70 : i32 to index
    %c0_75 = arith.constant 0 : index
    %c0_76 = arith.constant 0 : index
    %288 = vector.load %arg9[%287, %c0_75, %c0_76] : memref<8x8x128xf32, #tpu.memory_space<vmem>>, vector<1x8x128xf32>
    %289 = vector.shape_cast %288 : vector<1x8x128xf32> to vector<8x128xf32>
    %290 = vector.shape_cast %286 : vector<8x128xf32> to vector<1x8x128xf32>
    tpu.vector_store %arg9[%287, %c0_75, %c0_76], %290 {strides = array<i32>} : memref<8x8x128xf32, #tpu.memory_space<vmem>>, vector<1x8x128xf32>,
    %c7_i32_77 = arith.constant 7 : i32
    %291 = arith.subi %c7_i32_77, %c7_i32_70 : i32
    %292 = arith.index_cast %291 : i32 to index
    %c0_78 = arith.constant 0 : index
    %c0_79 = arith.constant 0 : index
    %293 = vector.load %arg10[%292, %c0_78, %c0_79] : memref<8x8x128xf32, #tpu.memory_space<vmem>>, vector<1x8x128xf32>
    %294 = vector.shape_cast %293 : vector<1x8x128xf32> to vector<8x128xf32>
    %295 = vector.shape_cast %286 : vector<8x128xf32> to vector<1x8x128xf32>
    tpu.vector_store %arg10[%292, %c0_78, %c0_79], %295 {strides = array<i32>} : memref<8x8x128xf32, #tpu.memory_space<vmem>>, vector<1x8x128xf32>,
    %c8_i32 = arith.constant 8 : i32
    %c0_80 = arith.constant 0 : index
    %c0_81 = arith.constant 0 : index
    %c0_82 = arith.constant 0 : index
    %296 = vector.load %arg9[%c0_80, %c0_81, %c0_82] : memref<8x8x128xf32, #tpu.memory_space<vmem>>, vector<8x8x128xf32>
    %297 = vector.shape_cast %296 : vector<8x8x128xf32> to vector<64x128xf32>
    %c0_83 = arith.constant 0 : index
    %c0_84 = arith.constant 0 : index
    %c0_85 = arith.constant 0 : index
    %298 = vector.load %arg10[%c0_83, %c0_84, %c0_85] : memref<8x8x128xf32, #tpu.memory_space<vmem>>, vector<8x8x128xf32>
    %299 = vector.shape_cast %298 : vector<8x8x128xf32> to vector<64x128xf32>
    %c0_86 = arith.constant 0 : index
    %c0_87 = arith.constant 0 : index
    %300 = vector.load %arg4[%c0_86, %c0_87] : memref<128x16xf32, #tpu.memory_space<vmem>>, vector<128x16xf32>
    %cst_88 = arith.constant dense<0.000000e+00> : vector<64x16xf32>
    %301 = tpu.matmul %297, %300, %cst_88 {dimension_numbers = #tpu.dot_dimension_numbers<[1], [0], [0], [1], [0, 0, 1, 1], [], []>} : vector<64x128xf32>, vector<128x16xf32>, vector<64x16xf32> -> vector<64x16xf32>
    %c0_89 = arith.constant 0 : index
    %c0_90 = arith.constant 0 : index
    %302 = vector.load %arg5[%c0_89, %c0_90] : memref<128x16xf32, #tpu.memory_space<vmem>>, vector<128x16xf32>
    %cst_91 = arith.constant dense<0.000000e+00> : vector<64x16xf32>
    %303 = tpu.matmul %299, %302, %cst_91 {dimension_numbers = #tpu.dot_dimension_numbers<[1], [0], [0], [1], [0, 0, 1, 1], [], []>} : vector<64x128xf32>, vector<128x16xf32>, vector<64x16xf32> -> vector<64x16xf32>
    %304 = arith.addf %301, %303 : vector<64x16xf32>
    %c0_92 = arith.constant 0 : index
    %c0_93 = arith.constant 0 : index
    %305 = vector.load %arg6[%c0_92, %c0_93] : memref<1x16xf32, #tpu.memory_space<vmem>>, vector<1x16xf32>
    %306 = vector.broadcast %305 : vector<1x16xf32> to vector<64x16xf32>
    %307 = arith.addf %304, %306 : vector<64x16xf32>
    %308 = vector.shape_cast %307 : vector<64x16xf32> to vector<8x8x16xf32>
    %309 = vector.extract_strided_slice %308 {offsets = [0, 0, 0], sizes = [8, 8, 8], strides = [1, 1, 1]} : vector<8x8x16xf32> to vector<8x8x8xf32>
    %c0_94 = arith.constant 0 : index
    %c0_95 = arith.constant 0 : index
    %c0_96 = arith.constant 0 : index
    %310 = vector.load %arg11[%c0_94, %c0_95, %c0_96] : memref<8x8x8xf32, #tpu.memory_space<vmem>>, vector<8x8x8xf32>
    tpu.vector_store %arg11[%c0_94, %c0_95, %c0_96], %309 {strides = array<i32>} : memref<8x8x8xf32, #tpu.memory_space<vmem>>, vector<8x8x8xf32>,
    %311 = vector.extract_strided_slice %308 {offsets = [0, 0, 8], sizes = [8, 8, 8], strides = [1, 1, 1]} : vector<8x8x16xf32> to vector<8x8x8xf32>
    %c0_97 = arith.constant 0 : index
    %c0_98 = arith.constant 0 : index
    %c0_99 = arith.constant 0 : index
    %312 = vector.load %arg12[%c0_97, %c0_98, %c0_99] : memref<8x8x8xf32, #tpu.memory_space<vmem>>, vector<8x8x8xf32>
    tpu.vector_store %arg12[%c0_97, %c0_98, %c0_99], %311 {strides = array<i32>} : memref<8x8x8xf32, #tpu.memory_space<vmem>>, vector<8x8x8xf32>,
    %c0_100 = arith.constant 0 : index
    %c0_101 = arith.constant 0 : index
    %313 = vector.load %arg7[%c0_100, %c0_101] : memref<1x8xf32, #tpu.memory_space<vmem>>, vector<1x8xf32>
    %cst_102 = arith.constant 0.000000e+00 : f32
    %314 = vector.broadcast %cst_102 : f32 to vector<8x2xf32>
    %c0_i32_103 = arith.constant 0 : i32
    %315 = arith.index_cast %c0_i32_103 : i32 to index
    %c0_104 = arith.constant 0 : index
    %c0_105 = arith.constant 0 : index
    %316 = vector.load %arg11[%315, %c0_104, %c0_105] : memref<8x8x8xf32, #tpu.memory_space<vmem>>, vector<1x8x8xf32>
    %317 = vector.shape_cast %316 : vector<1x8x8xf32> to vector<8x8xf32>
    %c7_i32_106 = arith.constant 7 : i32
    %318 = arith.subi %c7_i32_106, %c0_i32_103 : i32
    %319 = arith.index_cast %318 : i32 to index
    %c0_107 = arith.constant 0 : index
    %c0_108 = arith.constant 0 : index
    %320 = vector.load %arg12[%319, %c0_107, %c0_108] : memref<8x8x8xf32, #tpu.memory_space<vmem>>, vector<1x8x8xf32>
    %321 = vector.shape_cast %320 : vector<1x8x8xf32> to vector<8x8xf32>
    %322 = arith.addf %317, %321 : vector<8x8xf32>
    %323 = tpu.concatenate %314, %314, %314, %314 in 1 : vector<8x2xf32>, vector<8x2xf32>, vector<8x2xf32>, vector<8x2xf32> -> vector<8x8xf32>
    %324 = vector.broadcast %313 : vector<1x8xf32> to vector<8x8xf32>
    %325 = arith.mulf %323, %324 : vector<8x8xf32>
    %326 = arith.addf %322, %325 : vector<8x8xf32>
    %327 = vector.extract_strided_slice %326 {offsets = [0, 0], sizes = [8, 2], strides = [1, 1]} : vector<8x8xf32> to vector<8x2xf32>
    %328 = arith.negf %327 : vector<8x2xf32>
    %329 = math.exp %328 : vector<8x2xf32>
    %cst_109 = arith.constant 1.000000e+00 : f32
    %330 = vector.broadcast %cst_109 : f32 to vector<8x2xf32>
    %331 = arith.addf %330, %329 : vector<8x2xf32>
    %332 = arith.divf %330, %331 : vector<8x2xf32>
    %333 = vector.extract_strided_slice %326 {offsets = [0, 2], sizes = [8, 2], strides = [1, 1]} : vector<8x8xf32> to vector<8x2xf32>
    %334 = arith.negf %333 : vector<8x2xf32>
    %335 = math.exp %334 : vector<8x2xf32>
    %cst_110 = arith.constant 1.000000e+00 : f32
    %336 = vector.broadcast %cst_110 : f32 to vector<8x2xf32>
    %337 = arith.addf %336, %335 : vector<8x2xf32>
    %338 = arith.divf %336, %337 : vector<8x2xf32>
    %339 = vector.extract_strided_slice %326 {offsets = [0, 4], sizes = [8, 2], strides = [1, 1]} : vector<8x8xf32> to vector<8x2xf32>
    %340 = math.tanh %339 : vector<8x2xf32>
    %341 = vector.extract_strided_slice %326 {offsets = [0, 6], sizes = [8, 2], strides = [1, 1]} : vector<8x8xf32> to vector<8x2xf32>
    %342 = arith.negf %341 : vector<8x2xf32>
    %343 = math.exp %342 : vector<8x2xf32>
    %cst_111 = arith.constant 1.000000e+00 : f32
    %344 = vector.broadcast %cst_111 : f32 to vector<8x2xf32>
    %345 = arith.addf %344, %343 : vector<8x2xf32>
    %346 = arith.divf %344, %345 : vector<8x2xf32>
    %347 = arith.mulf %338, %314 : vector<8x2xf32>
    %348 = arith.mulf %332, %340 : vector<8x2xf32>
    %349 = arith.addf %347, %348 : vector<8x2xf32>
    %350 = math.tanh %349 : vector<8x2xf32>
    %351 = arith.mulf %346, %350 : vector<8x2xf32>
    %352 = vector.extract_strided_slice %351 {offsets = [0, 0], sizes = [8, 1], strides = [1, 1]} : vector<8x2xf32> to vector<8x1xf32>
    %353 = vector.shape_cast %352 : vector<8x1xf32> to vector<8xf32>
    %354 = arith.index_cast %c0_i32_103 : i32 to index
    %c0_112 = arith.constant 0 : index
    %355 = vector.load %arg13[%354, %c0_112] : memref<8x8xf32, #tpu.memory_space<vmem>>, vector<1x8xf32>
    %356 = vector.shape_cast %355 : vector<1x8xf32> to vector<8xf32>
    %357 = vector.shape_cast %353 : vector<8xf32> to vector<1x8xf32>
    tpu.vector_store %arg13[%354, %c0_112], %357 {strides = array<i32>} : memref<8x8xf32, #tpu.memory_space<vmem>>, vector<1x8xf32>,
    %358 = vector.extract_strided_slice %351 {offsets = [0, 1], sizes = [8, 1], strides = [1, 1]} : vector<8x2xf32> to vector<8x1xf32>
    %359 = vector.shape_cast %358 : vector<8x1xf32> to vector<8xf32>
    %c7_i32_113 = arith.constant 7 : i32
    %360 = arith.subi %c7_i32_113, %c0_i32_103 : i32
    %361 = arith.index_cast %360 : i32 to index
    %c0_114 = arith.constant 0 : index
    %362 = vector.load %arg14[%361, %c0_114] : memref<8x8xf32, #tpu.memory_space<vmem>>, vector<1x8xf32>
    %363 = vector.shape_cast %362 : vector<1x8xf32> to vector<8xf32>
    %364 = vector.shape_cast %359 : vector<8xf32> to vector<1x8xf32>
    tpu.vector_store %arg14[%361, %c0_114], %364 {strides = array<i32>} : memref<8x8xf32, #tpu.memory_space<vmem>>, vector<1x8xf32>,
    %c1_i32_115 = arith.constant 1 : i32
    %365 = arith.index_cast %c1_i32_115 : i32 to index
    %c0_116 = arith.constant 0 : index
    %c0_117 = arith.constant 0 : index
    %366 = vector.load %arg11[%365, %c0_116, %c0_117] : memref<8x8x8xf32, #tpu.memory_space<vmem>>, vector<1x8x8xf32>
    %367 = vector.shape_cast %366 : vector<1x8x8xf32> to vector<8x8xf32>
    %c7_i32_118 = arith.constant 7 : i32
    %368 = arith.subi %c7_i32_118, %c1_i32_115 : i32
    %369 = arith.index_cast %368 : i32 to index
    %c0_119 = arith.constant 0 : index
    %c0_120 = arith.constant 0 : index
    %370 = vector.load %arg12[%369, %c0_119, %c0_120] : memref<8x8x8xf32, #tpu.memory_space<vmem>>, vector<1x8x8xf32>
    %371 = vector.shape_cast %370 : vector<1x8x8xf32> to vector<8x8xf32>
    %372 = arith.addf %367, %371 : vector<8x8xf32>
    %373 = tpu.concatenate %351, %351, %351, %351 in 1 : vector<8x2xf32>, vector<8x2xf32>, vector<8x2xf32>, vector<8x2xf32> -> vector<8x8xf32>
    %374 = vector.broadcast %313 : vector<1x8xf32> to vector<8x8xf32>
    %375 = arith.mulf %373, %374 : vector<8x8xf32>
    %376 = arith.addf %372, %375 : vector<8x8xf32>
    %377 = vector.extract_strided_slice %376 {offsets = [0, 0], sizes = [8, 2], strides = [1, 1]} : vector<8x8xf32> to vector<8x2xf32>
    %378 = arith.negf %377 : vector<8x2xf32>
    %379 = math.exp %378 : vector<8x2xf32>
    %cst_121 = arith.constant 1.000000e+00 : f32
    %380 = vector.broadcast %cst_121 : f32 to vector<8x2xf32>
    %381 = arith.addf %380, %379 : vector<8x2xf32>
    %382 = arith.divf %380, %381 : vector<8x2xf32>
    %383 = vector.extract_strided_slice %376 {offsets = [0, 2], sizes = [8, 2], strides = [1, 1]} : vector<8x8xf32> to vector<8x2xf32>
    %384 = arith.negf %383 : vector<8x2xf32>
    %385 = math.exp %384 : vector<8x2xf32>
    %cst_122 = arith.constant 1.000000e+00 : f32
    %386 = vector.broadcast %cst_122 : f32 to vector<8x2xf32>
    %387 = arith.addf %386, %385 : vector<8x2xf32>
    %388 = arith.divf %386, %387 : vector<8x2xf32>
    %389 = vector.extract_strided_slice %376 {offsets = [0, 4], sizes = [8, 2], strides = [1, 1]} : vector<8x8xf32> to vector<8x2xf32>
    %390 = math.tanh %389 : vector<8x2xf32>
    %391 = vector.extract_strided_slice %376 {offsets = [0, 6], sizes = [8, 2], strides = [1, 1]} : vector<8x8xf32> to vector<8x2xf32>
    %392 = arith.negf %391 : vector<8x2xf32>
    %393 = math.exp %392 : vector<8x2xf32>
    %cst_123 = arith.constant 1.000000e+00 : f32
    %394 = vector.broadcast %cst_123 : f32 to vector<8x2xf32>
    %395 = arith.addf %394, %393 : vector<8x2xf32>
    %396 = arith.divf %394, %395 : vector<8x2xf32>
    %397 = arith.mulf %388, %349 : vector<8x2xf32>
    %398 = arith.mulf %382, %390 : vector<8x2xf32>
    %399 = arith.addf %397, %398 : vector<8x2xf32>
    %400 = math.tanh %399 : vector<8x2xf32>
    %401 = arith.mulf %396, %400 : vector<8x2xf32>
    %402 = vector.extract_strided_slice %401 {offsets = [0, 0], sizes = [8, 1], strides = [1, 1]} : vector<8x2xf32> to vector<8x1xf32>
    %403 = vector.shape_cast %402 : vector<8x1xf32> to vector<8xf32>
    %404 = arith.index_cast %c1_i32_115 : i32 to index
    %c0_124 = arith.constant 0 : index
    %405 = vector.load %arg13[%404, %c0_124] : memref<8x8xf32, #tpu.memory_space<vmem>>, vector<1x8xf32>
    %406 = vector.shape_cast %405 : vector<1x8xf32> to vector<8xf32>
    %407 = vector.shape_cast %403 : vector<8xf32> to vector<1x8xf32>
    tpu.vector_store %arg13[%404, %c0_124], %407 {strides = array<i32>} : memref<8x8xf32, #tpu.memory_space<vmem>>, vector<1x8xf32>,
    %408 = vector.extract_strided_slice %401 {offsets = [0, 1], sizes = [8, 1], strides = [1, 1]} : vector<8x2xf32> to vector<8x1xf32>
    %409 = vector.shape_cast %408 : vector<8x1xf32> to vector<8xf32>
    %c7_i32_125 = arith.constant 7 : i32
    %410 = arith.subi %c7_i32_125, %c1_i32_115 : i32
    %411 = arith.index_cast %410 : i32 to index
    %c0_126 = arith.constant 0 : index
    %412 = vector.load %arg14[%411, %c0_126] : memref<8x8xf32, #tpu.memory_space<vmem>>, vector<1x8xf32>
    %413 = vector.shape_cast %412 : vector<1x8xf32> to vector<8xf32>
    %414 = vector.shape_cast %409 : vector<8xf32> to vector<1x8xf32>
    tpu.vector_store %arg14[%411, %c0_126], %414 {strides = array<i32>} : memref<8x8xf32, #tpu.memory_space<vmem>>, vector<1x8xf32>,
    %c2_i32_127 = arith.constant 2 : i32
    %415 = arith.index_cast %c2_i32_127 : i32 to index
    %c0_128 = arith.constant 0 : index
    %c0_129 = arith.constant 0 : index
    %416 = vector.load %arg11[%415, %c0_128, %c0_129] : memref<8x8x8xf32, #tpu.memory_space<vmem>>, vector<1x8x8xf32>
    %417 = vector.shape_cast %416 : vector<1x8x8xf32> to vector<8x8xf32>
    %c7_i32_130 = arith.constant 7 : i32
    %418 = arith.subi %c7_i32_130, %c2_i32_127 : i32
    %419 = arith.index_cast %418 : i32 to index
    %c0_131 = arith.constant 0 : index
    %c0_132 = arith.constant 0 : index
    %420 = vector.load %arg12[%419, %c0_131, %c0_132] : memref<8x8x8xf32, #tpu.memory_space<vmem>>, vector<1x8x8xf32>
    %421 = vector.shape_cast %420 : vector<1x8x8xf32> to vector<8x8xf32>
    %422 = arith.addf %417, %421 : vector<8x8xf32>
    %423 = tpu.concatenate %401, %401, %401, %401 in 1 : vector<8x2xf32>, vector<8x2xf32>, vector<8x2xf32>, vector<8x2xf32> -> vector<8x8xf32>
    %424 = vector.broadcast %313 : vector<1x8xf32> to vector<8x8xf32>
    %425 = arith.mulf %423, %424 : vector<8x8xf32>
    %426 = arith.addf %422, %425 : vector<8x8xf32>
    %427 = vector.extract_strided_slice %426 {offsets = [0, 0], sizes = [8, 2], strides = [1, 1]} : vector<8x8xf32> to vector<8x2xf32>
    %428 = arith.negf %427 : vector<8x2xf32>
    %429 = math.exp %428 : vector<8x2xf32>
    %cst_133 = arith.constant 1.000000e+00 : f32
    %430 = vector.broadcast %cst_133 : f32 to vector<8x2xf32>
    %431 = arith.addf %430, %429 : vector<8x2xf32>
    %432 = arith.divf %430, %431 : vector<8x2xf32>
    %433 = vector.extract_strided_slice %426 {offsets = [0, 2], sizes = [8, 2], strides = [1, 1]} : vector<8x8xf32> to vector<8x2xf32>
    %434 = arith.negf %433 : vector<8x2xf32>
    %435 = math.exp %434 : vector<8x2xf32>
    %cst_134 = arith.constant 1.000000e+00 : f32
    %436 = vector.broadcast %cst_134 : f32 to vector<8x2xf32>
    %437 = arith.addf %436, %435 : vector<8x2xf32>
    %438 = arith.divf %436, %437 : vector<8x2xf32>
    %439 = vector.extract_strided_slice %426 {offsets = [0, 4], sizes = [8, 2], strides = [1, 1]} : vector<8x8xf32> to vector<8x2xf32>
    %440 = math.tanh %439 : vector<8x2xf32>
    %441 = vector.extract_strided_slice %426 {offsets = [0, 6], sizes = [8, 2], strides = [1, 1]} : vector<8x8xf32> to vector<8x2xf32>
    %442 = arith.negf %441 : vector<8x2xf32>
    %443 = math.exp %442 : vector<8x2xf32>
    %cst_135 = arith.constant 1.000000e+00 : f32
    %444 = vector.broadcast %cst_135 : f32 to vector<8x2xf32>
    %445 = arith.addf %444, %443 : vector<8x2xf32>
    %446 = arith.divf %444, %445 : vector<8x2xf32>
    %447 = arith.mulf %438, %399 : vector<8x2xf32>
    %448 = arith.mulf %432, %440 : vector<8x2xf32>
    %449 = arith.addf %447, %448 : vector<8x2xf32>
    %450 = math.tanh %449 : vector<8x2xf32>
    %451 = arith.mulf %446, %450 : vector<8x2xf32>
    %452 = vector.extract_strided_slice %451 {offsets = [0, 0], sizes = [8, 1], strides = [1, 1]} : vector<8x2xf32> to vector<8x1xf32>
    %453 = vector.shape_cast %452 : vector<8x1xf32> to vector<8xf32>
    %454 = arith.index_cast %c2_i32_127 : i32 to index
    %c0_136 = arith.constant 0 : index
    %455 = vector.load %arg13[%454, %c0_136] : memref<8x8xf32, #tpu.memory_space<vmem>>, vector<1x8xf32>
    %456 = vector.shape_cast %455 : vector<1x8xf32> to vector<8xf32>
    %457 = vector.shape_cast %453 : vector<8xf32> to vector<1x8xf32>
    tpu.vector_store %arg13[%454, %c0_136], %457 {strides = array<i32>} : memref<8x8xf32, #tpu.memory_space<vmem>>, vector<1x8xf32>,
    %458 = vector.extract_strided_slice %451 {offsets = [0, 1], sizes = [8, 1], strides = [1, 1]} : vector<8x2xf32> to vector<8x1xf32>
    %459 = vector.shape_cast %458 : vector<8x1xf32> to vector<8xf32>
    %c7_i32_137 = arith.constant 7 : i32
    %460 = arith.subi %c7_i32_137, %c2_i32_127 : i32
    %461 = arith.index_cast %460 : i32 to index
    %c0_138 = arith.constant 0 : index
    %462 = vector.load %arg14[%461, %c0_138] : memref<8x8xf32, #tpu.memory_space<vmem>>, vector<1x8xf32>
    %463 = vector.shape_cast %462 : vector<1x8xf32> to vector<8xf32>
    %464 = vector.shape_cast %459 : vector<8xf32> to vector<1x8xf32>
    tpu.vector_store %arg14[%461, %c0_138], %464 {strides = array<i32>} : memref<8x8xf32, #tpu.memory_space<vmem>>, vector<1x8xf32>,
    %c3_i32_139 = arith.constant 3 : i32
    %465 = arith.index_cast %c3_i32_139 : i32 to index
    %c0_140 = arith.constant 0 : index
    %c0_141 = arith.constant 0 : index
    %466 = vector.load %arg11[%465, %c0_140, %c0_141] : memref<8x8x8xf32, #tpu.memory_space<vmem>>, vector<1x8x8xf32>
    %467 = vector.shape_cast %466 : vector<1x8x8xf32> to vector<8x8xf32>
    %c7_i32_142 = arith.constant 7 : i32
    %468 = arith.subi %c7_i32_142, %c3_i32_139 : i32
    %469 = arith.index_cast %468 : i32 to index
    %c0_143 = arith.constant 0 : index
    %c0_144 = arith.constant 0 : index
    %470 = vector.load %arg12[%469, %c0_143, %c0_144] : memref<8x8x8xf32, #tpu.memory_space<vmem>>, vector<1x8x8xf32>
    %471 = vector.shape_cast %470 : vector<1x8x8xf32> to vector<8x8xf32>
    %472 = arith.addf %467, %471 : vector<8x8xf32>
    %473 = tpu.concatenate %451, %451, %451, %451 in 1 : vector<8x2xf32>, vector<8x2xf32>, vector<8x2xf32>, vector<8x2xf32> -> vector<8x8xf32>
    %474 = vector.broadcast %313 : vector<1x8xf32> to vector<8x8xf32>
    %475 = arith.mulf %473, %474 : vector<8x8xf32>
    %476 = arith.addf %472, %475 : vector<8x8xf32>
    %477 = vector.extract_strided_slice %476 {offsets = [0, 0], sizes = [8, 2], strides = [1, 1]} : vector<8x8xf32> to vector<8x2xf32>
    %478 = arith.negf %477 : vector<8x2xf32>
    %479 = math.exp %478 : vector<8x2xf32>
    %cst_145 = arith.constant 1.000000e+00 : f32
    %480 = vector.broadcast %cst_145 : f32 to vector<8x2xf32>
    %481 = arith.addf %480, %479 : vector<8x2xf32>
    %482 = arith.divf %480, %481 : vector<8x2xf32>
    %483 = vector.extract_strided_slice %476 {offsets = [0, 2], sizes = [8, 2], strides = [1, 1]} : vector<8x8xf32> to vector<8x2xf32>
    %484 = arith.negf %483 : vector<8x2xf32>
    %485 = math.exp %484 : vector<8x2xf32>
    %cst_146 = arith.constant 1.000000e+00 : f32
    %486 = vector.broadcast %cst_146 : f32 to vector<8x2xf32>
    %487 = arith.addf %486, %485 : vector<8x2xf32>
    %488 = arith.divf %486, %487 : vector<8x2xf32>
    %489 = vector.extract_strided_slice %476 {offsets = [0, 4], sizes = [8, 2], strides = [1, 1]} : vector<8x8xf32> to vector<8x2xf32>
    %490 = math.tanh %489 : vector<8x2xf32>
    %491 = vector.extract_strided_slice %476 {offsets = [0, 6], sizes = [8, 2], strides = [1, 1]} : vector<8x8xf32> to vector<8x2xf32>
    %492 = arith.negf %491 : vector<8x2xf32>
    %493 = math.exp %492 : vector<8x2xf32>
    %cst_147 = arith.constant 1.000000e+00 : f32
    %494 = vector.broadcast %cst_147 : f32 to vector<8x2xf32>
    %495 = arith.addf %494, %493 : vector<8x2xf32>
    %496 = arith.divf %494, %495 : vector<8x2xf32>
    %497 = arith.mulf %488, %449 : vector<8x2xf32>
    %498 = arith.mulf %482, %490 : vector<8x2xf32>
    %499 = arith.addf %497, %498 : vector<8x2xf32>
    %500 = math.tanh %499 : vector<8x2xf32>
    %501 = arith.mulf %496, %500 : vector<8x2xf32>
    %502 = vector.extract_strided_slice %501 {offsets = [0, 0], sizes = [8, 1], strides = [1, 1]} : vector<8x2xf32> to vector<8x1xf32>
    %503 = vector.shape_cast %502 : vector<8x1xf32> to vector<8xf32>
    %504 = arith.index_cast %c3_i32_139 : i32 to index
    %c0_148 = arith.constant 0 : index
    %505 = vector.load %arg13[%504, %c0_148] : memref<8x8xf32, #tpu.memory_space<vmem>>, vector<1x8xf32>
    %506 = vector.shape_cast %505 : vector<1x8xf32> to vector<8xf32>
    %507 = vector.shape_cast %503 : vector<8xf32> to vector<1x8xf32>
    tpu.vector_store %arg13[%504, %c0_148], %507 {strides = array<i32>} : memref<8x8xf32, #tpu.memory_space<vmem>>, vector<1x8xf32>,
    %508 = vector.extract_strided_slice %501 {offsets = [0, 1], sizes = [8, 1], strides = [1, 1]} : vector<8x2xf32> to vector<8x1xf32>
    %509 = vector.shape_cast %508 : vector<8x1xf32> to vector<8xf32>
    %c7_i32_149 = arith.constant 7 : i32
    %510 = arith.subi %c7_i32_149, %c3_i32_139 : i32
    %511 = arith.index_cast %510 : i32 to index
    %c0_150 = arith.constant 0 : index
    %512 = vector.load %arg14[%511, %c0_150] : memref<8x8xf32, #tpu.memory_space<vmem>>, vector<1x8xf32>
    %513 = vector.shape_cast %512 : vector<1x8xf32> to vector<8xf32>
    %514 = vector.shape_cast %509 : vector<8xf32> to vector<1x8xf32>
    tpu.vector_store %arg14[%511, %c0_150], %514 {strides = array<i32>} : memref<8x8xf32, #tpu.memory_space<vmem>>, vector<1x8xf32>,
    %c4_i32_151 = arith.constant 4 : i32
    %515 = arith.index_cast %c4_i32_151 : i32 to index
    %c0_152 = arith.constant 0 : index
    %c0_153 = arith.constant 0 : index
    %516 = vector.load %arg11[%515, %c0_152, %c0_153] : memref<8x8x8xf32, #tpu.memory_space<vmem>>, vector<1x8x8xf32>
    %517 = vector.shape_cast %516 : vector<1x8x8xf32> to vector<8x8xf32>
    %c7_i32_154 = arith.constant 7 : i32
    %518 = arith.subi %c7_i32_154, %c4_i32_151 : i32
    %519 = arith.index_cast %518 : i32 to index
    %c0_155 = arith.constant 0 : index
    %c0_156 = arith.constant 0 : index
    %520 = vector.load %arg12[%519, %c0_155, %c0_156] : memref<8x8x8xf32, #tpu.memory_space<vmem>>, vector<1x8x8xf32>
    %521 = vector.shape_cast %520 : vector<1x8x8xf32> to vector<8x8xf32>
    %522 = arith.addf %517, %521 : vector<8x8xf32>
    %523 = tpu.concatenate %501, %501, %501, %501 in 1 : vector<8x2xf32>, vector<8x2xf32>, vector<8x2xf32>, vector<8x2xf32> -> vector<8x8xf32>
    %524 = vector.broadcast %313 : vector<1x8xf32> to vector<8x8xf32>
    %525 = arith.mulf %523, %524 : vector<8x8xf32>
    %526 = arith.addf %522, %525 : vector<8x8xf32>
    %527 = vector.extract_strided_slice %526 {offsets = [0, 0], sizes = [8, 2], strides = [1, 1]} : vector<8x8xf32> to vector<8x2xf32>
    %528 = arith.negf %527 : vector<8x2xf32>
    %529 = math.exp %528 : vector<8x2xf32>
    %cst_157 = arith.constant 1.000000e+00 : f32
    %530 = vector.broadcast %cst_157 : f32 to vector<8x2xf32>
    %531 = arith.addf %530, %529 : vector<8x2xf32>
    %532 = arith.divf %530, %531 : vector<8x2xf32>
    %533 = vector.extract_strided_slice %526 {offsets = [0, 2], sizes = [8, 2], strides = [1, 1]} : vector<8x8xf32> to vector<8x2xf32>
    %534 = arith.negf %533 : vector<8x2xf32>
    %535 = math.exp %534 : vector<8x2xf32>
    %cst_158 = arith.constant 1.000000e+00 : f32
    %536 = vector.broadcast %cst_158 : f32 to vector<8x2xf32>
    %537 = arith.addf %536, %535 : vector<8x2xf32>
    %538 = arith.divf %536, %537 : vector<8x2xf32>
    %539 = vector.extract_strided_slice %526 {offsets = [0, 4], sizes = [8, 2], strides = [1, 1]} : vector<8x8xf32> to vector<8x2xf32>
    %540 = math.tanh %539 : vector<8x2xf32>
    %541 = vector.extract_strided_slice %526 {offsets = [0, 6], sizes = [8, 2], strides = [1, 1]} : vector<8x8xf32> to vector<8x2xf32>
    %542 = arith.negf %541 : vector<8x2xf32>
    %543 = math.exp %542 : vector<8x2xf32>
    %cst_159 = arith.constant 1.000000e+00 : f32
    %544 = vector.broadcast %cst_159 : f32 to vector<8x2xf32>
    %545 = arith.addf %544, %543 : vector<8x2xf32>
    %546 = arith.divf %544, %545 : vector<8x2xf32>
    %547 = arith.mulf %538, %499 : vector<8x2xf32>
    %548 = arith.mulf %532, %540 : vector<8x2xf32>
    %549 = arith.addf %547, %548 : vector<8x2xf32>
    %550 = math.tanh %549 : vector<8x2xf32>
    %551 = arith.mulf %546, %550 : vector<8x2xf32>
    %552 = vector.extract_strided_slice %551 {offsets = [0, 0], sizes = [8, 1], strides = [1, 1]} : vector<8x2xf32> to vector<8x1xf32>
    %553 = vector.shape_cast %552 : vector<8x1xf32> to vector<8xf32>
    %554 = arith.index_cast %c4_i32_151 : i32 to index
    %c0_160 = arith.constant 0 : index
    %555 = vector.load %arg13[%554, %c0_160] : memref<8x8xf32, #tpu.memory_space<vmem>>, vector<1x8xf32>
    %556 = vector.shape_cast %555 : vector<1x8xf32> to vector<8xf32>
    %557 = vector.shape_cast %553 : vector<8xf32> to vector<1x8xf32>
    tpu.vector_store %arg13[%554, %c0_160], %557 {strides = array<i32>} : memref<8x8xf32, #tpu.memory_space<vmem>>, vector<1x8xf32>,
    %558 = vector.extract_strided_slice %551 {offsets = [0, 1], sizes = [8, 1], strides = [1, 1]} : vector<8x2xf32> to vector<8x1xf32>
    %559 = vector.shape_cast %558 : vector<8x1xf32> to vector<8xf32>
    %c7_i32_161 = arith.constant 7 : i32
    %560 = arith.subi %c7_i32_161, %c4_i32_151 : i32
    %561 = arith.index_cast %560 : i32 to index
    %c0_162 = arith.constant 0 : index
    %562 = vector.load %arg14[%561, %c0_162] : memref<8x8xf32, #tpu.memory_space<vmem>>, vector<1x8xf32>
    %563 = vector.shape_cast %562 : vector<1x8xf32> to vector<8xf32>
    %564 = vector.shape_cast %559 : vector<8xf32> to vector<1x8xf32>
    tpu.vector_store %arg14[%561, %c0_162], %564 {strides = array<i32>} : memref<8x8xf32, #tpu.memory_space<vmem>>, vector<1x8xf32>,
    %c5_i32_163 = arith.constant 5 : i32
    %565 = arith.index_cast %c5_i32_163 : i32 to index
    %c0_164 = arith.constant 0 : index
    %c0_165 = arith.constant 0 : index
    %566 = vector.load %arg11[%565, %c0_164, %c0_165] : memref<8x8x8xf32, #tpu.memory_space<vmem>>, vector<1x8x8xf32>
    %567 = vector.shape_cast %566 : vector<1x8x8xf32> to vector<8x8xf32>
    %c7_i32_166 = arith.constant 7 : i32
    %568 = arith.subi %c7_i32_166, %c5_i32_163 : i32
    %569 = arith.index_cast %568 : i32 to index
    %c0_167 = arith.constant 0 : index
    %c0_168 = arith.constant 0 : index
    %570 = vector.load %arg12[%569, %c0_167, %c0_168] : memref<8x8x8xf32, #tpu.memory_space<vmem>>, vector<1x8x8xf32>
    %571 = vector.shape_cast %570 : vector<1x8x8xf32> to vector<8x8xf32>
    %572 = arith.addf %567, %571 : vector<8x8xf32>
    %573 = tpu.concatenate %551, %551, %551, %551 in 1 : vector<8x2xf32>, vector<8x2xf32>, vector<8x2xf32>, vector<8x2xf32> -> vector<8x8xf32>
    %574 = vector.broadcast %313 : vector<1x8xf32> to vector<8x8xf32>
    %575 = arith.mulf %573, %574 : vector<8x8xf32>
    %576 = arith.addf %572, %575 : vector<8x8xf32>
    %577 = vector.extract_strided_slice %576 {offsets = [0, 0], sizes = [8, 2], strides = [1, 1]} : vector<8x8xf32> to vector<8x2xf32>
    %578 = arith.negf %577 : vector<8x2xf32>
    %579 = math.exp %578 : vector<8x2xf32>
    %cst_169 = arith.constant 1.000000e+00 : f32
    %580 = vector.broadcast %cst_169 : f32 to vector<8x2xf32>
    %581 = arith.addf %580, %579 : vector<8x2xf32>
    %582 = arith.divf %580, %581 : vector<8x2xf32>
    %583 = vector.extract_strided_slice %576 {offsets = [0, 2], sizes = [8, 2], strides = [1, 1]} : vector<8x8xf32> to vector<8x2xf32>
    %584 = arith.negf %583 : vector<8x2xf32>
    %585 = math.exp %584 : vector<8x2xf32>
    %cst_170 = arith.constant 1.000000e+00 : f32
    %586 = vector.broadcast %cst_170 : f32 to vector<8x2xf32>
    %587 = arith.addf %586, %585 : vector<8x2xf32>
    %588 = arith.divf %586, %587 : vector<8x2xf32>
    %589 = vector.extract_strided_slice %576 {offsets = [0, 4], sizes = [8, 2], strides = [1, 1]} : vector<8x8xf32> to vector<8x2xf32>
    %590 = math.tanh %589 : vector<8x2xf32>
    %591 = vector.extract_strided_slice %576 {offsets = [0, 6], sizes = [8, 2], strides = [1, 1]} : vector<8x8xf32> to vector<8x2xf32>
    %592 = arith.negf %591 : vector<8x2xf32>
    %593 = math.exp %592 : vector<8x2xf32>
    %cst_171 = arith.constant 1.000000e+00 : f32
    %594 = vector.broadcast %cst_171 : f32 to vector<8x2xf32>
    %595 = arith.addf %594, %593 : vector<8x2xf32>
    %596 = arith.divf %594, %595 : vector<8x2xf32>
    %597 = arith.mulf %588, %549 : vector<8x2xf32>
    %598 = arith.mulf %582, %590 : vector<8x2xf32>
    %599 = arith.addf %597, %598 : vector<8x2xf32>
    %600 = math.tanh %599 : vector<8x2xf32>
    %601 = arith.mulf %596, %600 : vector<8x2xf32>
    %602 = vector.extract_strided_slice %601 {offsets = [0, 0], sizes = [8, 1], strides = [1, 1]} : vector<8x2xf32> to vector<8x1xf32>
    %603 = vector.shape_cast %602 : vector<8x1xf32> to vector<8xf32>
    %604 = arith.index_cast %c5_i32_163 : i32 to index
    %c0_172 = arith.constant 0 : index
    %605 = vector.load %arg13[%604, %c0_172] : memref<8x8xf32, #tpu.memory_space<vmem>>, vector<1x8xf32>
    %606 = vector.shape_cast %605 : vector<1x8xf32> to vector<8xf32>
    %607 = vector.shape_cast %603 : vector<8xf32> to vector<1x8xf32>
    tpu.vector_store %arg13[%604, %c0_172], %607 {strides = array<i32>} : memref<8x8xf32, #tpu.memory_space<vmem>>, vector<1x8xf32>,
    %608 = vector.extract_strided_slice %601 {offsets = [0, 1], sizes = [8, 1], strides = [1, 1]} : vector<8x2xf32> to vector<8x1xf32>
    %609 = vector.shape_cast %608 : vector<8x1xf32> to vector<8xf32>
    %c7_i32_173 = arith.constant 7 : i32
    %610 = arith.subi %c7_i32_173, %c5_i32_163 : i32
    %611 = arith.index_cast %610 : i32 to index
    %c0_174 = arith.constant 0 : index
    %612 = vector.load %arg14[%611, %c0_174] : memref<8x8xf32, #tpu.memory_space<vmem>>, vector<1x8xf32>
    %613 = vector.shape_cast %612 : vector<1x8xf32> to vector<8xf32>
    %614 = vector.shape_cast %609 : vector<8xf32> to vector<1x8xf32>
    tpu.vector_store %arg14[%611, %c0_174], %614 {strides = array<i32>} : memref<8x8xf32, #tpu.memory_space<vmem>>, vector<1x8xf32>,
    %c6_i32_175 = arith.constant 6 : i32
    %615 = arith.index_cast %c6_i32_175 : i32 to index
    %c0_176 = arith.constant 0 : index
    %c0_177 = arith.constant 0 : index
    %616 = vector.load %arg11[%615, %c0_176, %c0_177] : memref<8x8x8xf32, #tpu.memory_space<vmem>>, vector<1x8x8xf32>
    %617 = vector.shape_cast %616 : vector<1x8x8xf32> to vector<8x8xf32>
    %c7_i32_178 = arith.constant 7 : i32
    %618 = arith.subi %c7_i32_178, %c6_i32_175 : i32
    %619 = arith.index_cast %618 : i32 to index
    %c0_179 = arith.constant 0 : index
    %c0_180 = arith.constant 0 : index
    %620 = vector.load %arg12[%619, %c0_179, %c0_180] : memref<8x8x8xf32, #tpu.memory_space<vmem>>, vector<1x8x8xf32>
    %621 = vector.shape_cast %620 : vector<1x8x8xf32> to vector<8x8xf32>
    %622 = arith.addf %617, %621 : vector<8x8xf32>
    %623 = tpu.concatenate %601, %601, %601, %601 in 1 : vector<8x2xf32>, vector<8x2xf32>, vector<8x2xf32>, vector<8x2xf32> -> vector<8x8xf32>
    %624 = vector.broadcast %313 : vector<1x8xf32> to vector<8x8xf32>
    %625 = arith.mulf %623, %624 : vector<8x8xf32>
    %626 = arith.addf %622, %625 : vector<8x8xf32>
    %627 = vector.extract_strided_slice %626 {offsets = [0, 0], sizes = [8, 2], strides = [1, 1]} : vector<8x8xf32> to vector<8x2xf32>
    %628 = arith.negf %627 : vector<8x2xf32>
    %629 = math.exp %628 : vector<8x2xf32>
    %cst_181 = arith.constant 1.000000e+00 : f32
    %630 = vector.broadcast %cst_181 : f32 to vector<8x2xf32>
    %631 = arith.addf %630, %629 : vector<8x2xf32>
    %632 = arith.divf %630, %631 : vector<8x2xf32>
    %633 = vector.extract_strided_slice %626 {offsets = [0, 2], sizes = [8, 2], strides = [1, 1]} : vector<8x8xf32> to vector<8x2xf32>
    %634 = arith.negf %633 : vector<8x2xf32>
    %635 = math.exp %634 : vector<8x2xf32>
    %cst_182 = arith.constant 1.000000e+00 : f32
    %636 = vector.broadcast %cst_182 : f32 to vector<8x2xf32>
    %637 = arith.addf %636, %635 : vector<8x2xf32>
    %638 = arith.divf %636, %637 : vector<8x2xf32>
    %639 = vector.extract_strided_slice %626 {offsets = [0, 4], sizes = [8, 2], strides = [1, 1]} : vector<8x8xf32> to vector<8x2xf32>
    %640 = math.tanh %639 : vector<8x2xf32>
    %641 = vector.extract_strided_slice %626 {offsets = [0, 6], sizes = [8, 2], strides = [1, 1]} : vector<8x8xf32> to vector<8x2xf32>
    %642 = arith.negf %641 : vector<8x2xf32>
    %643 = math.exp %642 : vector<8x2xf32>
    %cst_183 = arith.constant 1.000000e+00 : f32
    %644 = vector.broadcast %cst_183 : f32 to vector<8x2xf32>
    %645 = arith.addf %644, %643 : vector<8x2xf32>
    %646 = arith.divf %644, %645 : vector<8x2xf32>
    %647 = arith.mulf %638, %599 : vector<8x2xf32>
    %648 = arith.mulf %632, %640 : vector<8x2xf32>
    %649 = arith.addf %647, %648 : vector<8x2xf32>
    %650 = math.tanh %649 : vector<8x2xf32>
    %651 = arith.mulf %646, %650 : vector<8x2xf32>
    %652 = vector.extract_strided_slice %651 {offsets = [0, 0], sizes = [8, 1], strides = [1, 1]} : vector<8x2xf32> to vector<8x1xf32>
    %653 = vector.shape_cast %652 : vector<8x1xf32> to vector<8xf32>
    %654 = arith.index_cast %c6_i32_175 : i32 to index
    %c0_184 = arith.constant 0 : index
    %655 = vector.load %arg13[%654, %c0_184] : memref<8x8xf32, #tpu.memory_space<vmem>>, vector<1x8xf32>
    %656 = vector.shape_cast %655 : vector<1x8xf32> to vector<8xf32>
    %657 = vector.shape_cast %653 : vector<8xf32> to vector<1x8xf32>
    tpu.vector_store %arg13[%654, %c0_184], %657 {strides = array<i32>} : memref<8x8xf32, #tpu.memory_space<vmem>>, vector<1x8xf32>,
    %658 = vector.extract_strided_slice %651 {offsets = [0, 1], sizes = [8, 1], strides = [1, 1]} : vector<8x2xf32> to vector<8x1xf32>
    %659 = vector.shape_cast %658 : vector<8x1xf32> to vector<8xf32>
    %c7_i32_185 = arith.constant 7 : i32
    %660 = arith.subi %c7_i32_185, %c6_i32_175 : i32
    %661 = arith.index_cast %660 : i32 to index
    %c0_186 = arith.constant 0 : index
    %662 = vector.load %arg14[%661, %c0_186] : memref<8x8xf32, #tpu.memory_space<vmem>>, vector<1x8xf32>
    %663 = vector.shape_cast %662 : vector<1x8xf32> to vector<8xf32>
    %664 = vector.shape_cast %659 : vector<8xf32> to vector<1x8xf32>
    tpu.vector_store %arg14[%661, %c0_186], %664 {strides = array<i32>} : memref<8x8xf32, #tpu.memory_space<vmem>>, vector<1x8xf32>,
    %c7_i32_187 = arith.constant 7 : i32
    %665 = arith.index_cast %c7_i32_187 : i32 to index
    %c0_188 = arith.constant 0 : index
    %c0_189 = arith.constant 0 : index
    %666 = vector.load %arg11[%665, %c0_188, %c0_189] : memref<8x8x8xf32, #tpu.memory_space<vmem>>, vector<1x8x8xf32>
    %667 = vector.shape_cast %666 : vector<1x8x8xf32> to vector<8x8xf32>
    %c7_i32_190 = arith.constant 7 : i32
    %668 = arith.subi %c7_i32_190, %c7_i32_187 : i32
    %669 = arith.index_cast %668 : i32 to index
    %c0_191 = arith.constant 0 : index
    %c0_192 = arith.constant 0 : index
    %670 = vector.load %arg12[%669, %c0_191, %c0_192] : memref<8x8x8xf32, #tpu.memory_space<vmem>>, vector<1x8x8xf32>
    %671 = vector.shape_cast %670 : vector<1x8x8xf32> to vector<8x8xf32>
    %672 = arith.addf %667, %671 : vector<8x8xf32>
    %673 = tpu.concatenate %651, %651, %651, %651 in 1 : vector<8x2xf32>, vector<8x2xf32>, vector<8x2xf32>, vector<8x2xf32> -> vector<8x8xf32>
    %674 = vector.broadcast %313 : vector<1x8xf32> to vector<8x8xf32>
    %675 = arith.mulf %673, %674 : vector<8x8xf32>
    %676 = arith.addf %672, %675 : vector<8x8xf32>
    %677 = vector.extract_strided_slice %676 {offsets = [0, 0], sizes = [8, 2], strides = [1, 1]} : vector<8x8xf32> to vector<8x2xf32>
    %678 = arith.negf %677 : vector<8x2xf32>
    %679 = math.exp %678 : vector<8x2xf32>
    %cst_193 = arith.constant 1.000000e+00 : f32
    %680 = vector.broadcast %cst_193 : f32 to vector<8x2xf32>
    %681 = arith.addf %680, %679 : vector<8x2xf32>
    %682 = arith.divf %680, %681 : vector<8x2xf32>
    %683 = vector.extract_strided_slice %676 {offsets = [0, 2], sizes = [8, 2], strides = [1, 1]} : vector<8x8xf32> to vector<8x2xf32>
    %684 = arith.negf %683 : vector<8x2xf32>
    %685 = math.exp %684 : vector<8x2xf32>
    %cst_194 = arith.constant 1.000000e+00 : f32
    %686 = vector.broadcast %cst_194 : f32 to vector<8x2xf32>
    %687 = arith.addf %686, %685 : vector<8x2xf32>
    %688 = arith.divf %686, %687 : vector<8x2xf32>
    %689 = vector.extract_strided_slice %676 {offsets = [0, 4], sizes = [8, 2], strides = [1, 1]} : vector<8x8xf32> to vector<8x2xf32>
    %690 = math.tanh %689 : vector<8x2xf32>
    %691 = vector.extract_strided_slice %676 {offsets = [0, 6], sizes = [8, 2], strides = [1, 1]} : vector<8x8xf32> to vector<8x2xf32>
    %692 = arith.negf %691 : vector<8x2xf32>
    %693 = math.exp %692 : vector<8x2xf32>
    %cst_195 = arith.constant 1.000000e+00 : f32
    %694 = vector.broadcast %cst_195 : f32 to vector<8x2xf32>
    %695 = arith.addf %694, %693 : vector<8x2xf32>
    %696 = arith.divf %694, %695 : vector<8x2xf32>
    %697 = arith.mulf %688, %649 : vector<8x2xf32>
    %698 = arith.mulf %682, %690 : vector<8x2xf32>
    %699 = arith.addf %697, %698 : vector<8x2xf32>
    %700 = math.tanh %699 : vector<8x2xf32>
    %701 = arith.mulf %696, %700 : vector<8x2xf32>
    %702 = vector.extract_strided_slice %701 {offsets = [0, 0], sizes = [8, 1], strides = [1, 1]} : vector<8x2xf32> to vector<8x1xf32>
    %703 = vector.shape_cast %702 : vector<8x1xf32> to vector<8xf32>
    %704 = arith.index_cast %c7_i32_187 : i32 to index
    %c0_196 = arith.constant 0 : index
    %705 = vector.load %arg13[%704, %c0_196] : memref<8x8xf32, #tpu.memory_space<vmem>>, vector<1x8xf32>
    %706 = vector.shape_cast %705 : vector<1x8xf32> to vector<8xf32>
    %707 = vector.shape_cast %703 : vector<8xf32> to vector<1x8xf32>
    tpu.vector_store %arg13[%704, %c0_196], %707 {strides = array<i32>} : memref<8x8xf32, #tpu.memory_space<vmem>>, vector<1x8xf32>,
    %708 = vector.extract_strided_slice %701 {offsets = [0, 1], sizes = [8, 1], strides = [1, 1]} : vector<8x2xf32> to vector<8x1xf32>
    %709 = vector.shape_cast %708 : vector<8x1xf32> to vector<8xf32>
    %c7_i32_197 = arith.constant 7 : i32
    %710 = arith.subi %c7_i32_197, %c7_i32_187 : i32
    %711 = arith.index_cast %710 : i32 to index
    %c0_198 = arith.constant 0 : index
    %712 = vector.load %arg14[%711, %c0_198] : memref<8x8xf32, #tpu.memory_space<vmem>>, vector<1x8xf32>
    %713 = vector.shape_cast %712 : vector<1x8xf32> to vector<8xf32>
    %714 = vector.shape_cast %709 : vector<8xf32> to vector<1x8xf32>
    tpu.vector_store %arg14[%711, %c0_198], %714 {strides = array<i32>} : memref<8x8xf32, #tpu.memory_space<vmem>>, vector<1x8xf32>,
    %c8_i32_199 = arith.constant 8 : i32
    %c0_200 = arith.constant 0 : index
    %c0_201 = arith.constant 0 : index
    %715 = vector.load %arg13[%c0_200, %c0_201] : memref<8x8xf32, #tpu.memory_space<vmem>>, vector<8x8xf32>
    %c0_202 = arith.constant 0 : index
    %c0_203 = arith.constant 0 : index
    %716 = vector.load %arg14[%c0_202, %c0_203] : memref<8x8xf32, #tpu.memory_space<vmem>>, vector<8x8xf32>
    %717 = arith.addf %715, %716 : vector<8x8xf32>
    %c0_204 = arith.constant 0 : index
    %c0_205 = arith.constant 0 : index
    %718 = vector.load %arg8[%c0_204, %c0_205] : memref<8x8xf32, #tpu.memory_space<vmem>>, vector<8x8xf32>
    tpu.vector_store %arg8[%c0_204, %c0_205], %717 {strides = array<i32>} : memref<8x8xf32, #tpu.memory_space<vmem>>, vector<8x8xf32>,
    return
  }
}

</mosaic_0001>

<llo_original>
// kernel: lstm_decoder_forward.1
$region0: #{lstm_decoder_forward.1}
  #allocation0 [shape = 'u32[]', space=smem, size = 0x4, offset = 0x4, fixed_abs, tag = 'smem constant byte address 0x4 - core index']
  #allocation1 [shape = 'u32[144,128]{1,0:T(1,128)}', space=vmem, size = 0x12000, scoped, tag = 'internal scratch']
  #allocation2 [shape = 'f32[8,8,128]{2,1,0:T(8,128)}', space=vmem, size = 0x8000, scoped, tag = 'scratch operand']
  #allocation3 [shape = 'f32[8,8,128]{2,1,0:T(8,128)}', space=vmem, size = 0x8000, scoped, tag = 'scratch operand']
  #allocation4 [shape = 'f32[8,8,8]{2,1,0:T(8,128)}', space=vmem, size = 0x8000, scoped, tag = 'scratch operand']
  #allocation5 [shape = 'f32[8,8,8]{2,1,0:T(8,128)}', space=vmem, size = 0x8000, scoped, tag = 'scratch operand']
  #allocation6 [shape = 'f32[8,8]{1,0:T(8,128)}', space=vmem, size = 0x1000, scoped, tag = 'scratch operand']
  #allocation7 [shape = 'f32[8,8]{1,0:T(8,128)}', space=vmem, size = 0x1000, scoped, tag = 'scratch operand']
  %s0 = inlined_call_operand.vmem [shape: f32[8,32], index: 0, kind: input, shape index: {}]
  %s1 = inlined_call_operand.vmem [shape: f32[32,512], index: 1, kind: input, shape index: {}]
  %s2 = inlined_call_operand.vmem [shape: f32[1,512], index: 2, kind: input, shape index: {}]
  %s3 = inlined_call_operand.hbm [shape: f32[128,512], index: 3, kind: input, shape index: {}]
  %s4 = inlined_call_operand.vmem [shape: f32[128,16], index: 4, kind: input, shape index: {}]
  %s5 = inlined_call_operand.vmem [shape: f32[128,16], index: 5, kind: input, shape index: {}]
  %s6 = inlined_call_operand.vmem [shape: f32[1,16], index: 6, kind: input, shape index: {}]
  %s7 = inlined_call_operand.vmem [shape: f32[1,8], index: 7, kind: input, shape index: {}]
  %s8 = inlined_call_operand.vmem [shape: f32[8,8], index: 8, kind: output, shape index: {}]
  %s9 = sld [smem:[#allocation0]]
  $region46: #{lstm_decoder_forward.1} parent=0
    _
  %s11 = ssub.s32 1, %s9
  %s12 = scalar_select 0, %s11, %s9
  $region1: #{lstm_decoder_forward.1} parent=0
    #allocation8 [shape = 'u8[262144]{0}', space=vmem, size = 0x40000, scoped, tag = 'input window, operand 3, single buffered']
    #allocation9 [shape = 's32[1]{0}', space=sflag, size = 0x4, scoped, tag = 'scoped memory for lstm_decoder_forward.1']
    %13 = vsyncpa [#allocation9], 0
    // Predicated region
    $region2: #{lstm_decoder_forward.1} parent=1 // pred_check
      _
    $region3: #{lstm_decoder_forward.1} parent=1 // pred_check_branch
      %15 = sbr.rel (0) target = $region5
    $region4: #{lstm_decoder_forward.1} parent=1 // pred_region
      _
    $region5: #{lstm_decoder_forward.1} parent=1 // pred_fallthru
      _
    // Predicated region
    $region6: #{lstm_decoder_forward.1} parent=1 // pred_check
      _
    $region7: #{lstm_decoder_forward.1} parent=1 // pred_check_branch
      %17 = sbr.rel (0) target = $region9
    $region8: #{lstm_decoder_forward.1} parent=1 // pred_region
      _
    $region9: #{lstm_decoder_forward.1} parent=1 // pred_fallthru
      _
    // Predicated region
    $region10: #{lstm_decoder_forward.1} parent=1 // pred_check
      _
    $region11: #{lstm_decoder_forward.1} parent=1 // pred_check_branch
      %19 = sbr.rel (0) target = $region13
    $region12: #{lstm_decoder_forward.1} parent=1 // pred_region
      _
    $region13: #{lstm_decoder_forward.1} parent=1 // pred_fallthru
      _
    // Predicated region
    $region14: #{lstm_decoder_forward.1} parent=1 // pred_check
      _
    $region15: #{lstm_decoder_forward.1} parent=1 // pred_check_branch
      %21 = sbr.rel (0) target = $region17
    $region16: #{lstm_decoder_forward.1} parent=1 // pred_region
      %s23 = ssub.s32 8192, 8192
      %24 = vsyncadd [#allocation9], %s23
      %s25 = sshll.u32 [#allocation8], 4
      %s26 = int_to_ptr.vmem [resolvable:$true] %s25
      %31 = dma.hbm_to_vmem [thread:$0]  %s3, 8192, %s26, [#allocation9], 512, 512, 32
    $region17: #{lstm_decoder_forward.1} parent=1 // pred_fallthru
      _
    // Predicated region
    $region18: #{lstm_decoder_forward.1} parent=1 // pred_check
      _
    $region19: #{lstm_decoder_forward.1} parent=1 // pred_check_branch
      %33 = sbr.rel (0) target = $region21
    $region20: #{lstm_decoder_forward.1} parent=1 // pred_region
      _
    $region21: #{lstm_decoder_forward.1} parent=1 // pred_fallthru
      _
    // Predicated region
    $region22: #{lstm_decoder_forward.1} parent=1 // pred_check
      _
    $region23: #{lstm_decoder_forward.1} parent=1 // pred_check_branch
      %35 = sbr.rel (0) target = $region25
    $region24: #{lstm_decoder_forward.1} parent=1 // pred_region
      _
    $region25: #{lstm_decoder_forward.1} parent=1 // pred_fallthru
      _
    // Predicated region
    $region26: #{lstm_decoder_forward.1} parent=1 // pred_check
      _
    $region27: #{lstm_decoder_forward.1} parent=1 // pred_check_branch
      %37 = sbr.rel (0) target = $region29
    $region28: #{lstm_decoder_forward.1} parent=1 // pred_region
      _
    $region29: #{lstm_decoder_forward.1} parent=1 // pred_fallthru
      _
    // Predicated region
    $region30: #{lstm_decoder_forward.1} parent=1 // pred_check
      _
    $region31: #{lstm_decoder_forward.1} parent=1 // pred_check_branch
      %39 = sbr.rel (0) target = $region33
    $region32: #{lstm_decoder_forward.1} parent=1 // pred_region
      _
    $region33: #{lstm_decoder_forward.1} parent=1 // pred_fallthru
      _
    // Predicated region
    $region34: #{lstm_decoder_forward.1} parent=1 // pred_check
      _
    $region35: #{lstm_decoder_forward.1} parent=1 // pred_check_branch
      %41 = sbr.rel (0) target = $region37
    $region36: #{lstm_decoder_forward.1} parent=1 // pred_region
      %42 = dma.done [#allocation9], 8192
    $region37: #{lstm_decoder_forward.1} parent=1 // pred_fallthru
      _
    %v43 = vld [vmem:[%s0] sm:$0xff]
    %v44 = vld [vmem:[%s1] sm:$0xff]
    %v45 = vld [vmem:[%s1 + $0x8] sm:$0xff]
    %v46 = vld [vmem:[%s1 + $0x10] sm:$0xff]
    %v47 = vld [vmem:[%s1 + $0x18] sm:$0xff]
    %v48 = vld [vmem:[%s1 + $0x20] sm:$0xff]
    %v49 = vld [vmem:[%s1 + $0x28] sm:$0xff]
    %v50 = vld [vmem:[%s1 + $0x30] sm:$0xff]
    %v51 = vld [vmem:[%s1 + $0x38] sm:$0xff]
    %v52 = vld [vmem:[%s1 + $0x40] sm:$0xff]
    %v53 = vld [vmem:[%s1 + $0x48] sm:$0xff]
    %v54 = vld [vmem:[%s1 + $0x50] sm:$0xff]
    %v55 = vld [vmem:[%s1 + $0x58] sm:$0xff]
    %v56 = vld [vmem:[%s1 + $0x60] sm:$0xff]
    %v57 = vld [vmem:[%s1 + $0x68] sm:$0xff]
    %v58 = vld [vmem:[%s1 + $0x70] sm:$0xff]
    %v59 = vld [vmem:[%s1 + $0x78] sm:$0xff]
    %v60 = vld [vmem:[%s2] sm:$0xf]
    %v62 = vlaneseq
    %v63 = vshrl.u32 %v62, 7
    %v64 = vsub.s32 0, %v63
    %v65 = vrot.slane %v60, %v64
    %v66 = vlaneseq
    %v67 = vshrl.u32 %v66, 7
    %v68 = vsub.s32 1, %v67
    %v69 = vrot.slane %v60, %v68
    %v70 = vlaneseq
    %v71 = vshrl.u32 %v70, 7
    %v72 = vsub.s32 2, %v71
    %v73 = vrot.slane %v60, %v72
    %v74 = vlaneseq
    %v75 = vshrl.u32 %v74, 7
    %v76 = vsub.s32 3, %v75
    %v77 = vrot.slane %v60, %v76
    %vm82 = vcmask 261120
    %v84 = vsel %vm82, %v43, 0
    %86 = vmatprep.subr.mxu0 %v45
    %87 = vmatpush1.msra.mxu0 %v44
    %88 = vmatprep.subr.mxu0 %v49
    %89 = vmatpush1.msra.mxu0 %v48
    %90 = vmatprep.subr.mxu0 %v53
    %91 = vmatpush1.msra.mxu0 %v52
    %92 = vmatprep.subr.mxu0 %v57
    %93 = vmatpush1.msra.mxu0 %v56
    %94 = vmatprep.subr.mxu0 0.0
    %95 = vmatpush1.msra.mxu0 0.0
    %96 = vmatprep.subr.mxu0 0.0
    %97 = vmatpush1.msra.mxu0 0.0
    %98 = vmatprep.subr.mxu0 0.0
    %99 = vmatpush1.msra.mxu0 0.0
    %100 = vmatprep.subr.mxu0 0.0
    %101 = vmatpush1.msra.mxu0 0.0
    %102 = vmatprep.subr.mxu0 0.0
    %103 = vmatpush1.msra.mxu0 0.0
    %104 = vmatprep.subr.mxu0 0.0
    %105 = vmatpush1.msra.mxu0 0.0
    %106 = vmatprep.subr.mxu0 0.0
    %107 = vmatpush1.msra.mxu0 0.0
    %108 = vmatprep.subr.mxu0 0.0
    %109 = vmatpush1.msra.mxu0 0.0
    %110 = vmatprep.subr.mxu0 0.0
    %111 = vmatpush1.msra.mxu0 0.0
    %112 = vmatprep.subr.mxu0 0.0
    %113 = vmatpush1.msra.mxu0 0.0
    %114 = vmatprep.subr.mxu0 0.0
    %115 = vmatpush1.msra.mxu0 0.0
    %116 = vmatprep.subr.mxu0 0.0
    %117 = vmatpush1.msra.mxu0 0.0
    %118 = vmatprep.subr.mxu0 0.0
    %119 = vmatpush1.msra.mxu0 0.0
    %120 = vmatprep.subr.mxu0 0.0
    %121 = vmatpush1.msra.mxu0 0.0
    %122 = vmatprep.subr.mxu0 0.0
    %123 = vmatpush1.msra.mxu0 0.0
    %124 = vmatprep.subr.mxu0 0.0
    %125 = vmatpush1.msra.mxu0 0.0
    %126 = vmatprep.subr.mxu0 0.0
    %127 = vmatpush1.msra.mxu0 0.0
    %128 = vmatprep.subr.mxu0 0.0
    %129 = vmatpush1.msra.mxu0 0.0
    %130 = vmatprep.subr.mxu0 0.0
    %131 = vmatpush1.msra.mxu0 0.0
    %132 = vmatprep.subr.mxu0 0.0
    %133 = vmatpush1.msra.mxu0 0.0
    %134 = vmatprep.subr.mxu0 0.0
    %135 = vmatpush1.msra.mxu0 0.0
    %136 = vmatprep.subr.mxu0 0.0
    %137 = vmatpush1.msra.mxu0 0.0
    %138 = vmatprep.subr.mxu0 0.0
    %139 = vmatpush1.msra.mxu0 0.0
    %140 = vmatprep.subr.mxu0 0.0
    %141 = vmatpush1.msra.mxu0 0.0
    %142 = vmatprep.subr.mxu0 0.0
    %143 = vmatpush1.msra.mxu0 0.0
    %144 = vmatprep.subr.mxu0 0.0
    %145 = vmatpush1.msra.mxu0 0.0
    %146 = vmatprep.subr.mxu0 0.0
    %147 = vmatpush1.msra.mxu0 0.0
    %148 = vmatprep.subr.mxu0 0.0
    %149 = vmatpush1.msra.mxu0 0.0
    %150 = vmatprep.mubr.f32.mxu0 0.0
    %151 = vmatmul.mubr.f32.gmra.mrb[0].mxu0 %v84
    %v152 = vpop.f32.mrb[0].mxu0
    %v153 = vadd.f32 %v65, %v152
    %v154 = vpop.f32.mrb[0].mxu0
    %v155 = vadd.f32 %v69, %v154
    %156 = vdwg.mxu0
    %157 = vmatprep.subr.mxu0 %v47
    %158 = vmatpush1.msra.mxu0 %v46
    %159 = vmatprep.subr.mxu0 %v51
    %160 = vmatpush1.msra.mxu0 %v50
    %161 = vmatprep.subr.mxu0 %v55
    %162 = vmatpush1.msra.mxu0 %v54
    %163 = vmatprep.subr.mxu0 %v59
    %164 = vmatpush1.msra.mxu0 %v58
    %165 = vmatprep.subr.mxu0 0.0
    %166 = vmatpush1.msra.mxu0 0.0
    %167 = vmatprep.subr.mxu0 0.0
    %168 = vmatpush1.msra.mxu0 0.0
    %169 = vmatprep.subr.mxu0 0.0
    %170 = vmatpush1.msra.mxu0 0.0
    %171 = vmatprep.subr.mxu0 0.0
    %172 = vmatpush1.msra.mxu0 0.0
    %173 = vmatprep.subr.mxu0 0.0
    %174 = vmatpush1.msra.mxu0 0.0
    %175 = vmatprep.subr.mxu0 0.0
    %176 = vmatpush1.msra.mxu0 0.0
    %177 = vmatprep.subr.mxu0 0.0
    %178 = vmatpush1.msra.mxu0 0.0
    %179 = vmatprep.subr.mxu0 0.0
    %180 = vmatpush1.msra.mxu0 0.0
    %181 = vmatprep.subr.mxu0 0.0
    %182 = vmatpush1.msra.mxu0 0.0
    %183 = vmatprep.subr.mxu0 0.0
    %184 = vmatpush1.msra.mxu0 0.0
    %185 = vmatprep.subr.mxu0 0.0
    %186 = vmatpush1.msra.mxu0 0.0
    %187 = vmatprep.subr.mxu0 0.0
    %188 = vmatpush1.msra.mxu0 0.0
    %189 = vmatprep.subr.mxu0 0.0
    %190 = vmatpush1.msra.mxu0 0.0
    %191 = vmatprep.subr.mxu0 0.0
    %192 = vmatpush1.msra.mxu0 0.0
    %193 = vmatprep.subr.mxu0 0.0
    %194 = vmatpush1.msra.mxu0 0.0
    %195 = vmatprep.subr.mxu0 0.0
    %196 = vmatpush1.msra.mxu0 0.0
    %197 = vmatprep.subr.mxu0 0.0
    %198 = vmatpush1.msra.mxu0 0.0
    %199 = vmatprep.subr.mxu0 0.0
    %200 = vmatpush1.msra.mxu0 0.0
    %201 = vmatprep.subr.mxu0 0.0
    %202 = vmatpush1.msra.mxu0 0.0
    %203 = vmatprep.subr.mxu0 0.0
    %204 = vmatpush1.msra.mxu0 0.0
    %205 = vmatprep.subr.mxu0 0.0
    %206 = vmatpush1.msra.mxu0 0.0
    %207 = vmatprep.subr.mxu0 0.0
    %208 = vmatpush1.msra.mxu0 0.0
    %209 = vmatprep.subr.mxu0 0.0
    %210 = vmatpush1.msra.mxu0 0.0
    %211 = vmatprep.subr.mxu0 0.0
    %212 = vmatpush1.msra.mxu0 0.0
    %213 = vmatprep.subr.mxu0 0.0
    %214 = vmatpush1.msra.mxu0 0.0
    %215 = vmatprep.subr.mxu0 0.0
    %216 = vmatpush1.msra.mxu0 0.0
    %217 = vmatprep.subr.mxu0 0.0
    %218 = vmatpush1.msra.mxu0 0.0
    %219 = vmatprep.subr.mxu0 0.0
    %220 = vmatpush1.msra.mxu0 0.0
    %221 = vmatprep.mubr.f32.mxu0 0.0
    %222 = vmatmul.mubr.f32.gmra.mrb[0].mxu0 %v84
    %v223 = vpop.f32.mrb[0].mxu0
    %v224 = vadd.f32 %v73, %v223
    %v225 = vpop.f32.mrb[0].mxu0
    %v226 = vadd.f32 %v77, %v225
    %227 = vdwg.mxu0
    %v228 = vld [vmem:[#allocation8] sm:$0xff]
    %v229 = vld [vmem:[#allocation8 + $0x8] sm:$0xff]
    %v230 = vld [vmem:[#allocation8 + $0x10] sm:$0xff]
    %v231 = vld [vmem:[#allocation8 + $0x18] sm:$0xff]
    %v232 = vld [vmem:[#allocation8 + $0x20] sm:$0xff]
    %v233 = vld [vmem:[#allocation8 + $0x28] sm:$0xff]
    %v234 = vld [vmem:[#allocation8 + $0x30] sm:$0xff]
    %v235 = vld [vmem:[#allocation8 + $0x38] sm:$0xff]
    %v236 = vld [vmem:[#allocation8 + $0x40] sm:$0xff]
    %v237 = vld [vmem:[#allocation8 + $0x48] sm:$0xff]
    %v238 = vld [vmem:[#allocation8 + $0x50] sm:$0xff]
    %v239 = vld [vmem:[#allocation8 + $0x58] sm:$0xff]
    %v240 = vld [vmem:[#allocation8 + $0x60] sm:$0xff]
    %v241 = vld [vmem:[#allocation8 + $0x68] sm:$0xff]
    %v242 = vld [vmem:[#allocation8 + $0x70] sm:$0xff]
    %v243 = vld [vmem:[#allocation8 + $0x78] sm:$0xff]
    %v244 = vld [vmem:[#allocation8 + $0x80] sm:$0xff]
    %v245 = vld [vmem:[#allocation8 + $0x88] sm:$0xff]
    %v246 = vld [vmem:[#allocation8 + $0x90] sm:$0xff]
    %v247 = vld [vmem:[#allocation8 + $0x98] sm:$0xff]
    %v248 = vld [vmem:[#allocation8 + $0xa0] sm:$0xff]
    %v249 = vld [vmem:[#allocation8 + $0xa8] sm:$0xff]
    %v250 = vld [vmem:[#allocation8 + $0xb0] sm:$0xff]
    %v251 = vld [vmem:[#allocation8 + $0xb8] sm:$0xff]
    %v252 = vld [vmem:[#allocation8 + $0xc0] sm:$0xff]
    %v253 = vld [vmem:[#allocation8 + $0xc8] sm:$0xff]
    %v254 = vld [vmem:[#allocation8 + $0xd0] sm:$0xff]
    %v255 = vld [vmem:[#allocation8 + $0xd8] sm:$0xff]
    %v256 = vld [vmem:[#allocation8 + $0xe0] sm:$0xff]
    %v257 = vld [vmem:[#allocation8 + $0xe8] sm:$0xff]
    %v258 = vld [vmem:[#allocation8 + $0xf0] sm:$0xff]
    %v259 = vld [vmem:[#allocation8 + $0xf8] sm:$0xff]
    %v260 = vld [vmem:[#allocation8 + $0x100] sm:$0xff]
    %v261 = vld [vmem:[#allocation8 + $0x108] sm:$0xff]
    %v262 = vld [vmem:[#allocation8 + $0x110] sm:$0xff]
    %v263 = vld [vmem:[#allocation8 + $0x118] sm:$0xff]
    %v264 = vld [vmem:[#allocation8 + $0x120] sm:$0xff]
    %v265 = vld [vmem:[#allocation8 + $0x128] sm:$0xff]
    %v266 = vld [vmem:[#allocation8 + $0x130] sm:$0xff]
    %v267 = vld [vmem:[#allocation8 + $0x138] sm:$0xff]
    %v268 = vld [vmem:[#allocation8 + $0x140] sm:$0xff]
    %v269 = vld [vmem:[#allocation8 + $0x148] sm:$0xff]
    %v270 = vld [vmem:[#allocation8 + $0x150] sm:$0xff]
    %v271 = vld [vmem:[#allocation8 + $0x158] sm:$0xff]
    %v272 = vld [vmem:[#allocation8 + $0x160] sm:$0xff]
    %v273 = vld [vmem:[#allocation8 + $0x168] sm:$0xff]
    %v274 = vld [vmem:[#allocation8 + $0x170] sm:$0xff]
    %v275 = vld [vmem:[#allocation8 + $0x178] sm:$0xff]
    %v276 = vld [vmem:[#allocation8 + $0x180] sm:$0xff]
    %v277 = vld [vmem:[#allocation8 + $0x188] sm:$0xff]
    %v278 = vld [vmem:[#allocation8 + $0x190] sm:$0xff]
    %v279 = vld [vmem:[#allocation8 + $0x198] sm:$0xff]
    %v280 = vld [vmem:[#allocation8 + $0x1a0] sm:$0xff]
    %v281 = vld [vmem:[#allocation8 + $0x1a8] sm:$0xff]
    %v282 = vld [vmem:[#allocation8 + $0x1b0] sm:$0xff]
    %v283 = vld [vmem:[#allocation8 + $0x1b8] sm:$0xff]
    %v284 = vld [vmem:[#allocation8 + $0x1c0] sm:$0xff]
    %v285 = vld [vmem:[#allocation8 + $0x1c8] sm:$0xff]
    %v286 = vld [vmem:[#allocation8 + $0x1d0] sm:$0xff]
    %v287 = vld [vmem:[#allocation8 + $0x1d8] sm:$0xff]
    %v288 = vld [vmem:[#allocation8 + $0x1e0] sm:$0xff]
    %v289 = vld [vmem:[#allocation8 + $0x1e8] sm:$0xff]
    %v290 = vld [vmem:[#allocation8 + $0x1f0] sm:$0xff]
    %v291 = vld [vmem:[#allocation8 + $0x1f8] sm:$0xff]
    %292 = vmatprep.subr.mxu0 %v229
    %293 = vmatpush1.msra.mxu0 %v228
    %294 = vmatprep.subr.mxu0 %v233
    %295 = vmatpush1.msra.mxu0 %v232
    %296 = vmatprep.subr.mxu0 %v237
    %297 = vmatpush1.msra.mxu0 %v236
    %298 = vmatprep.subr.mxu0 %v241
    %299 = vmatpush1.msra.mxu0 %v240
    %300 = vmatprep.subr.mxu0 %v245
    %301 = vmatpush1.msra.mxu0 %v244
    %302 = vmatprep.subr.mxu0 %v249
    %303 = vmatpush1.msra.mxu0 %v248
    %304 = vmatprep.subr.mxu0 %v253
    %305 = vmatpush1.msra.mxu0 %v252
    %306 = vmatprep.subr.mxu0 %v257
    %307 = vmatpush1.msra.mxu0 %v256
    %308 = vmatprep.subr.mxu0 %v261
    %309 = vmatpush1.msra.mxu0 %v260
    %310 = vmatprep.subr.mxu0 %v265
    %311 = vmatpush1.msra.mxu0 %v264
    %312 = vmatprep.subr.mxu0 %v269
    %313 = vmatpush1.msra.mxu0 %v268
    %314 = vmatprep.subr.mxu0 %v273
    %315 = vmatpush1.msra.mxu0 %v272
    %316 = vmatprep.subr.mxu0 %v277
    %317 = vmatpush1.msra.mxu0 %v276
    %318 = vmatprep.subr.mxu0 %v281
    %319 = vmatpush1.msra.mxu0 %v280
    %320 = vmatprep.subr.mxu0 %v285
    %321 = vmatpush1.msra.mxu0 %v284
    %322 = vmatprep.subr.mxu0 %v289
    %323 = vmatpush1.msra.mxu0 %v288
    %324 = vmatprep.subr.mxu0 0.0
    %325 = vmatpush1.msra.mxu0 0.0
    %326 = vmatprep.subr.mxu0 0.0
    %327 = vmatpush1.msra.mxu0 0.0
    %328 = vmatprep.subr.mxu0 0.0
    %329 = vmatpush1.msra.mxu0 0.0
    %330 = vmatprep.subr.mxu0 0.0
    %331 = vmatpush1.msra.mxu0 0.0
    %332 = vmatprep.subr.mxu0 0.0
    %333 = vmatpush1.msra.mxu0 0.0
    %334 = vmatprep.subr.mxu0 0.0
    %335 = vmatpush1.msra.mxu0 0.0
    %336 = vmatprep.subr.mxu0 0.0
    %337 = vmatpush1.msra.mxu0 0.0
    %338 = vmatprep.subr.mxu0 0.0
    %339 = vmatpush1.msra.mxu0 0.0
    %340 = vmatprep.subr.mxu0 0.0
    %341 = vmatpush1.msra.mxu0 0.0
    %342 = vmatprep.subr.mxu0 0.0
    %343 = vmatpush1.msra.mxu0 0.0
    %344 = vmatprep.subr.mxu0 0.0
    %345 = vmatpush1.msra.mxu0 0.0
    %346 = vmatprep.subr.mxu0 0.0
    %347 = vmatpush1.msra.mxu0 0.0
    %348 = vmatprep.subr.mxu0 0.0
    %349 = vmatpush1.msra.mxu0 0.0
    %350 = vmatprep.subr.mxu0 0.0
    %351 = vmatpush1.msra.mxu0 0.0
    %352 = vmatprep.subr.mxu0 0.0
    %353 = vmatpush1.msra.mxu0 0.0
    %354 = vmatprep.subr.mxu0 0.0
    %355 = vmatpush1.msra.mxu0 0.0
    %356 = vmatprep.mubr.f32.mxu0 0.0
    %357 = vmatmul.mubr.f32.gmra.mrb[0].mxu0 0.0
    %v358 = vpop.f32.mrb[0].mxu0
    %v359 = vadd.f32 0.0, %v358
    %v360 = vpop.f32.mrb[0].mxu0
    %v361 = vadd.f32 0.0, %v360
    %362 = vdwg.mxu0
    %363 = vmatprep.subr.mxu0 %v231
    %364 = vmatpush1.msra.mxu0 %v230
    %365 = vmatprep.subr.mxu0 %v235
    %366 = vmatpush1.msra.mxu0 %v234
    %367 = vmatprep.subr.mxu0 %v239
    %368 = vmatpush1.msra.mxu0 %v238
    %369 = vmatprep.subr.mxu0 %v243
    %370 = vmatpush1.msra.mxu0 %v242
    %371 = vmatprep.subr.mxu0 %v247
    %372 = vmatpush1.msra.mxu0 %v246
    %373 = vmatprep.subr.mxu0 %v251
    %374 = vmatpush1.msra.mxu0 %v250
    %375 = vmatprep.subr.mxu0 %v255
    %376 = vmatpush1.msra.mxu0 %v254
    %377 = vmatprep.subr.mxu0 %v259
    %378 = vmatpush1.msra.mxu0 %v258
    %379 = vmatprep.subr.mxu0 %v263
    %380 = vmatpush1.msra.mxu0 %v262
    %381 = vmatprep.subr.mxu0 %v267
    %382 = vmatpush1.msra.mxu0 %v266
    %383 = vmatprep.subr.mxu0 %v271
    %384 = vmatpush1.msra.mxu0 %v270
    %385 = vmatprep.subr.mxu0 %v275
    %386 = vmatpush1.msra.mxu0 %v274
    %387 = vmatprep.subr.mxu0 %v279
    %388 = vmatpush1.msra.mxu0 %v278
    %389 = vmatprep.subr.mxu0 %v283
    %390 = vmatpush1.msra.mxu0 %v282
    %391 = vmatprep.subr.mxu0 %v287
    %392 = vmatpush1.msra.mxu0 %v286
    %393 = vmatprep.subr.mxu0 %v291
    %394 = vmatpush1.msra.mxu0 %v290
    %395 = vmatprep.subr.mxu0 0.0
    %396 = vmatpush1.msra.mxu0 0.0
    %397 = vmatprep.subr.mxu0 0.0
    %398 = vmatpush1.msra.mxu0 0.0
    %399 = vmatprep.subr.mxu0 0.0
    %400 = vmatpush1.msra.mxu0 0.0
    %401 = vmatprep.subr.mxu0 0.0
    %402 = vmatpush1.msra.mxu0 0.0
    %403 = vmatprep.subr.mxu0 0.0
    %404 = vmatpush1.msra.mxu0 0.0
    %405 = vmatprep.subr.mxu0 0.0
    %406 = vmatpush1.msra.mxu0 0.0
    %407 = vmatprep.subr.mxu0 0.0
    %408 = vmatpush1.msra.mxu0 0.0
    %409 = vmatprep.subr.mxu0 0.0
    %410 = vmatpush1.msra.mxu0 0.0
    %411 = vmatprep.subr.mxu0 0.0
    %412 = vmatpush1.msra.mxu0 0.0
    %413 = vmatprep.subr.mxu0 0.0
    %414 = vmatpush1.msra.mxu0 0.0
    %415 = vmatprep.subr.mxu0 0.0
    %416 = vmatpush1.msra.mxu0 0.0
    %417 = vmatprep.subr.mxu0 0.0
    %418 = vmatpush1.msra.mxu0 0.0
    %419 = vmatprep.subr.mxu0 0.0
    %420 = vmatpush1.msra.mxu0 0.0
    %421 = vmatprep.subr.mxu0 0.0
    %422 = vmatpush1.msra.mxu0 0.0
    %423 = vmatprep.subr.mxu0 0.0
    %424 = vmatpush1.msra.mxu0 0.0
    %425 = vmatprep.subr.mxu0 0.0
    %426 = vmatpush1.msra.mxu0 0.0
    %427 = vmatprep.mubr.f32.mxu0 0.0
    %428 = vmatmul.mubr.f32.gmra.mrb[0].mxu0 0.0
    %v429 = vpop.f32.mrb[0].mxu0
    %v430 = vadd.f32 0.0, %v429
    %v431 = vpop.f32.mrb[0].mxu0
    %v432 = vadd.f32 0.0, %v431
    %433 = vdwg.mxu0
    %v434 = vadd.f32 %v153, %v359
    %v435 = vadd.f32 %v155, %v361
    %v436 = vadd.f32 %v224, %v430
    %v437 = vadd.f32 %v226, %v432
    %v438 = vxor.u32 %v434, 2147483648
    %v439 = vmul.f32 %v438, 1.442695
    %v440 = vpow.pop %v439
    %v441 = vadd.f32 %v440, 1.0
    %v442 = vrcp.pop %v441
    %v443 = vmul.f32 1.0, %v442
    %v444 = vxor.u32 %v435, 2147483648
    %v445 = vmul.f32 %v444, 1.442695
    %v446 = vpow.pop %v445
    %v447 = vadd.f32 %v446, 1.0
    %v448 = vrcp.pop %v447
    %v449 = vmul.f32 1.0, %v448
    %v450 = vtanh.pop %v436
    %v451 = vxor.u32 %v437, 2147483648
    %v452 = vmul.f32 %v451, 1.442695
    %v453 = vpow.pop %v452
    %v454 = vadd.f32 %v453, 1.0
    %v455 = vrcp.pop %v454
    %v456 = vmul.f32 1.0, %v455
    %v457 = vmul.f32 %v449, 0.0
    %v458 = vmul.f32 %v443, %v450
    %v459 = vadd.f32 %v457, %v458
    %v460 = vtanh.pop %v459
    %v461 = vmul.f32 %v456, %v460
    %462 = vst [vmem:[#allocation2] sm:$0xff] %v461
    %s463 = scalar_lea.vmem [#allocation3], 56
    %464 = vst [vmem:[%s463] sm:$0xff] %v461
    %465 = vmatprep.subr.mxu0 %v229
    %466 = vmatpush1.msra.mxu0 %v228
    %467 = vmatprep.subr.mxu0 %v233
    %468 = vmatpush1.msra.mxu0 %v232
    %469 = vmatprep.subr.mxu0 %v237
    %470 = vmatpush1.msra.mxu0 %v236
    %471 = vmatprep.subr.mxu0 %v241
    %472 = vmatpush1.msra.mxu0 %v240
    %473 = vmatprep.subr.mxu0 %v245
    %474 = vmatpush1.msra.mxu0 %v244
    %475 = vmatprep.subr.mxu0 %v249
    %476 = vmatpush1.msra.mxu0 %v248
    %477 = vmatprep.subr.mxu0 %v253
    %478 = vmatpush1.msra.mxu0 %v252
    %479 = vmatprep.subr.mxu0 %v257
    %480 = vmatpush1.msra.mxu0 %v256
    %481 = vmatprep.subr.mxu0 %v261
    %482 = vmatpush1.msra.mxu0 %v260
    %483 = vmatprep.subr.mxu0 %v265
    %484 = vmatpush1.msra.mxu0 %v264
    %485 = vmatprep.subr.mxu0 %v269
    %486 = vmatpush1.msra.mxu0 %v268
    %487 = vmatprep.subr.mxu0 %v273
    %488 = vmatpush1.msra.mxu0 %v272
    %489 = vmatprep.subr.mxu0 %v277
    %490 = vmatpush1.msra.mxu0 %v276
    %491 = vmatprep.subr.mxu0 %v281
    %492 = vmatpush1.msra.mxu0 %v280
    %493 = vmatprep.subr.mxu0 %v285
    %494 = vmatpush1.msra.mxu0 %v284
    %495 = vmatprep.subr.mxu0 %v289
    %496 = vmatpush1.msra.mxu0 %v288
    %497 = vmatprep.subr.mxu0 0.0
    %498 = vmatpush1.msra.mxu0 0.0
    %499 = vmatprep.subr.mxu0 0.0
    %500 = vmatpush1.msra.mxu0 0.0
    %501 = vmatprep.subr.mxu0 0.0
    %502 = vmatpush1.msra.mxu0 0.0
    %503 = vmatprep.subr.mxu0 0.0
    %504 = vmatpush1.msra.mxu0 0.0
    %505 = vmatprep.subr.mxu0 0.0
    %506 = vmatpush1.msra.mxu0 0.0
    %507 = vmatprep.subr.mxu0 0.0
    %508 = vmatpush1.msra.mxu0 0.0
    %509 = vmatprep.subr.mxu0 0.0
    %510 = vmatpush1.msra.mxu0 0.0
    %511 = vmatprep.subr.mxu0 0.0
    %512 = vmatpush1.msra.mxu0 0.0
    %513 = vmatprep.subr.mxu0 0.0
    %514 = vmatpush1.msra.mxu0 0.0
    %515 = vmatprep.subr.mxu0 0.0
    %516 = vmatpush1.msra.mxu0 0.0
    %517 = vmatprep.subr.mxu0 0.0
    %518 = vmatpush1.msra.mxu0 0.0
    %519 = vmatprep.subr.mxu0 0.0
    %520 = vmatpush1.msra.mxu0 0.0
    %521 = vmatprep.subr.mxu0 0.0
    %522 = vmatpush1.msra.mxu0 0.0
    %523 = vmatprep.subr.mxu0 0.0
    %524 = vmatpush1.msra.mxu0 0.0
    %525 = vmatprep.subr.mxu0 0.0
    %526 = vmatpush1.msra.mxu0 0.0
    %527 = vmatprep.subr.mxu0 0.0
    %528 = vmatpush1.msra.mxu0 0.0
    %529 = vmatprep.mubr.f32.mxu0 0.0
    %530 = vmatmul.mubr.f32.gmra.mrb[0].mxu0 %v461
    %v531 = vpop.f32.mrb[0].mxu0
    %v532 = vadd.f32 0.0, %v531
    %v533 = vpop.f32.mrb[0].mxu0
    %v534 = vadd.f32 0.0, %v533
    %535 = vdwg.mxu0
    %536 = vmatprep.subr.mxu0 %v231
    %537 = vmatpush1.msra.mxu0 %v230
    %538 = vmatprep.subr.mxu0 %v235
    %539 = vmatpush1.msra.mxu0 %v234
    %540 = vmatprep.subr.mxu0 %v239
    %541 = vmatpush1.msra.mxu0 %v238
    %542 = vmatprep.subr.mxu0 %v243
    %543 = vmatpush1.msra.mxu0 %v242
    %544 = vmatprep.subr.mxu0 %v247
    %545 = vmatpush1.msra.mxu0 %v246
    %546 = vmatprep.subr.mxu0 %v251
    %547 = vmatpush1.msra.mxu0 %v250
    %548 = vmatprep.subr.mxu0 %v255
    %549 = vmatpush1.msra.mxu0 %v254
    %550 = vmatprep.subr.mxu0 %v259
    %551 = vmatpush1.msra.mxu0 %v258
    %552 = vmatprep.subr.mxu0 %v263
    %553 = vmatpush1.msra.mxu0 %v262
    %554 = vmatprep.subr.mxu0 %v267
    %555 = vmatpush1.msra.mxu0 %v266
    %556 = vmatprep.subr.mxu0 %v271
    %557 = vmatpush1.msra.mxu0 %v270
    %558 = vmatprep.subr.mxu0 %v275
    %559 = vmatpush1.msra.mxu0 %v274
    %560 = vmatprep.subr.mxu0 %v279
    %561 = vmatpush1.msra.mxu0 %v278
    %562 = vmatprep.subr.mxu0 %v283
    %563 = vmatpush1.msra.mxu0 %v282
    %564 = vmatprep.subr.mxu0 %v287
    %565 = vmatpush1.msra.mxu0 %v286
    %566 = vmatprep.subr.mxu0 %v291
    %567 = vmatpush1.msra.mxu0 %v290
    %568 = vmatprep.subr.mxu0 0.0
    %569 = vmatpush1.msra.mxu0 0.0
    %570 = vmatprep.subr.mxu0 0.0
    %571 = vmatpush1.msra.mxu0 0.0
    %572 = vmatprep.subr.mxu0 0.0
    %573 = vmatpush1.msra.mxu0 0.0
    %574 = vmatprep.subr.mxu0 0.0
    %575 = vmatpush1.msra.mxu0 0.0
    %576 = vmatprep.subr.mxu0 0.0
    %577 = vmatpush1.msra.mxu0 0.0
    %578 = vmatprep.subr.mxu0 0.0
    %579 = vmatpush1.msra.mxu0 0.0
    %580 = vmatprep.subr.mxu0 0.0
    %581 = vmatpush1.msra.mxu0 0.0
    %582 = vmatprep.subr.mxu0 0.0
    %583 = vmatpush1.msra.mxu0 0.0
    %584 = vmatprep.subr.mxu0 0.0
    %585 = vmatpush1.msra.mxu0 0.0
    %586 = vmatprep.subr.mxu0 0.0
    %587 = vmatpush1.msra.mxu0 0.0
    %588 = vmatprep.subr.mxu0 0.0
    %589 = vmatpush1.msra.mxu0 0.0
    %590 = vmatprep.subr.mxu0 0.0
    %591 = vmatpush1.msra.mxu0 0.0
    %592 = vmatprep.subr.mxu0 0.0
    %593 = vmatpush1.msra.mxu0 0.0
    %594 = vmatprep.subr.mxu0 0.0
    %595 = vmatpush1.msra.mxu0 0.0
    %596 = vmatprep.subr.mxu0 0.0
    %597 = vmatpush1.msra.mxu0 0.0
    %598 = vmatprep.subr.mxu0 0.0
    %599 = vmatpush1.msra.mxu0 0.0
    %600 = vmatprep.mubr.f32.mxu0 0.0
    %601 = vmatmul.mubr.f32.gmra.mrb[0].mxu0 %v461
    %v602 = vpop.f32.mrb[0].mxu0
    %v603 = vadd.f32 0.0, %v602
    %v604 = vpop.f32.mrb[0].mxu0
    %v605 = vadd.f32 0.0, %v604
    %606 = vdwg.mxu0
    %v607 = vadd.f32 %v153, %v532
    %v608 = vadd.f32 %v155, %v534
    %v609 = vadd.f32 %v224, %v603
    %v610 = vadd.f32 %v226, %v605
    %v611 = vxor.u32 %v607, 2147483648
    %v612 = vmul.f32 %v611, 1.442695
    %v613 = vpow.pop %v612
    %v614 = vadd.f32 %v613, 1.0
    %v615 = vrcp.pop %v614
    %v616 = vmul.f32 1.0, %v615
    %v617 = vxor.u32 %v608, 2147483648
    %v618 = vmul.f32 %v617, 1.442695
    %v619 = vpow.pop %v618
    %v620 = vadd.f32 %v619, 1.0
    %v621 = vrcp.pop %v620
    %v622 = vmul.f32 1.0, %v621
    %v623 = vtanh.pop %v609
    %v624 = vxor.u32 %v610, 2147483648
    %v625 = vmul.f32 %v624, 1.442695
    %v626 = vpow.pop %v625
    %v627 = vadd.f32 %v626, 1.0
    %v628 = vrcp.pop %v627
    %v629 = vmul.f32 1.0, %v628
    %v630 = vmul.f32 %v622, %v459
    %v631 = vmul.f32 %v616, %v623
    %v632 = vadd.f32 %v630, %v631
    %v633 = vtanh.pop %v632
    %v634 = vmul.f32 %v629, %v633
    %s635 = scalar_lea.vmem [#allocation2], 8
    %636 = vst [vmem:[%s635] sm:$0xff] %v634
    %s637 = scalar_lea.vmem [#allocation3], 48
    %638 = vst [vmem:[%s637] sm:$0xff] %v634
    %639 = vmatprep.subr.mxu0 %v229
    %640 = vmatpush1.msra.mxu0 %v228
    %641 = vmatprep.subr.mxu0 %v233
    %642 = vmatpush1.msra.mxu0 %v232
    %643 = vmatprep.subr.mxu0 %v237
    %644 = vmatpush1.msra.mxu0 %v236
    %645 = vmatprep.subr.mxu0 %v241
    %646 = vmatpush1.msra.mxu0 %v240
    %647 = vmatprep.subr.mxu0 %v245
    %648 = vmatpush1.msra.mxu0 %v244
    %649 = vmatprep.subr.mxu0 %v249
    %650 = vmatpush1.msra.mxu0 %v248
    %651 = vmatprep.subr.mxu0 %v253
    %652 = vmatpush1.msra.mxu0 %v252
    %653 = vmatprep.subr.mxu0 %v257
    %654 = vmatpush1.msra.mxu0 %v256
    %655 = vmatprep.subr.mxu0 %v261
    %656 = vmatpush1.msra.mxu0 %v260
    %657 = vmatprep.subr.mxu0 %v265
    %658 = vmatpush1.msra.mxu0 %v264
    %659 = vmatprep.subr.mxu0 %v269
    %660 = vmatpush1.msra.mxu0 %v268
    %661 = vmatprep.subr.mxu0 %v273
    %662 = vmatpush1.msra.mxu0 %v272
    %663 = vmatprep.subr.mxu0 %v277
    %664 = vmatpush1.msra.mxu0 %v276
    %665 = vmatprep.subr.mxu0 %v281
    %666 = vmatpush1.msra.mxu0 %v280
    %667 = vmatprep.subr.mxu0 %v285
    %668 = vmatpush1.msra.mxu0 %v284
    %669 = vmatprep.subr.mxu0 %v289
    %670 = vmatpush1.msra.mxu0 %v288
    %671 = vmatprep.subr.mxu0 0.0
    %672 = vmatpush1.msra.mxu0 0.0
    %673 = vmatprep.subr.mxu0 0.0
    %674 = vmatpush1.msra.mxu0 0.0
    %675 = vmatprep.subr.mxu0 0.0
    %676 = vmatpush1.msra.mxu0 0.0
    %677 = vmatprep.subr.mxu0 0.0
    %678 = vmatpush1.msra.mxu0 0.0
    %679 = vmatprep.subr.mxu0 0.0
    %680 = vmatpush1.msra.mxu0 0.0
    %681 = vmatprep.subr.mxu0 0.0
    %682 = vmatpush1.msra.mxu0 0.0
    %683 = vmatprep.subr.mxu0 0.0
    %684 = vmatpush1.msra.mxu0 0.0
    %685 = vmatprep.subr.mxu0 0.0
    %686 = vmatpush1.msra.mxu0 0.0
    %687 = vmatprep.subr.mxu0 0.0
    %688 = vmatpush1.msra.mxu0 0.0
    %689 = vmatprep.subr.mxu0 0.0
    %690 = vmatpush1.msra.mxu0 0.0
    %691 = vmatprep.subr.mxu0 0.0
    %692 = vmatpush1.msra.mxu0 0.0
    %693 = vmatprep.subr.mxu0 0.0
    %694 = vmatpush1.msra.mxu0 0.0
    %695 = vmatprep.subr.mxu0 0.0
    %696 = vmatpush1.msra.mxu0 0.0
    %697 = vmatprep.subr.mxu0 0.0
    %698 = vmatpush1.msra.mxu0 0.0
    %699 = vmatprep.subr.mxu0 0.0
    %700 = vmatpush1.msra.mxu0 0.0
    %701 = vmatprep.subr.mxu0 0.0
    %702 = vmatpush1.msra.mxu0 0.0
    %703 = vmatprep.mubr.f32.mxu0 0.0
    %704 = vmatmul.mubr.f32.gmra.mrb[0].mxu0 %v634
    %v705 = vpop.f32.mrb[0].mxu0
    %v706 = vadd.f32 0.0, %v705
    %v707 = vpop.f32.mrb[0].mxu0
    %v708 = vadd.f32 0.0, %v707
    %709 = vdwg.mxu0
    %710 = vmatprep.subr.mxu0 %v231
    %711 = vmatpush1.msra.mxu0 %v230
    %712 = vmatprep.subr.mxu0 %v235
    %713 = vmatpush1.msra.mxu0 %v234
    %714 = vmatprep.subr.mxu0 %v239
    %715 = vmatpush1.msra.mxu0 %v238
    %716 = vmatprep.subr.mxu0 %v243
    %717 = vmatpush1.msra.mxu0 %v242
    %718 = vmatprep.subr.mxu0 %v247
    %719 = vmatpush1.msra.mxu0 %v246
    %720 = vmatprep.subr.mxu0 %v251
    %721 = vmatpush1.msra.mxu0 %v250
    %722 = vmatprep.subr.mxu0 %v255
    %723 = vmatpush1.msra.mxu0 %v254
    %724 = vmatprep.subr.mxu0 %v259
    %725 = vmatpush1.msra.mxu0 %v258
    %726 = vmatprep.subr.mxu0 %v263
    %727 = vmatpush1.msra.mxu0 %v262
    %728 = vmatprep.subr.mxu0 %v267
    %729 = vmatpush1.msra.mxu0 %v266
    %730 = vmatprep.subr.mxu0 %v271
    %731 = vmatpush1.msra.mxu0 %v270
    %732 = vmatprep.subr.mxu0 %v275
    %733 = vmatpush1.msra.mxu0 %v274
    %734 = vmatprep.subr.mxu0 %v279
    %735 = vmatpush1.msra.mxu0 %v278
    %736 = vmatprep.subr.mxu0 %v283
    %737 = vmatpush1.msra.mxu0 %v282
    %738 = vmatprep.subr.mxu0 %v287
    %739 = vmatpush1.msra.mxu0 %v286
    %740 = vmatprep.subr.mxu0 %v291
    %741 = vmatpush1.msra.mxu0 %v290
    %742 = vmatprep.subr.mxu0 0.0
    %743 = vmatpush1.msra.mxu0 0.0
    %744 = vmatprep.subr.mxu0 0.0
    %745 = vmatpush1.msra.mxu0 0.0
    %746 = vmatprep.subr.mxu0 0.0
    %747 = vmatpush1.msra.mxu0 0.0
    %748 = vmatprep.subr.mxu0 0.0
    %749 = vmatpush1.msra.mxu0 0.0
    %750 = vmatprep.subr.mxu0 0.0
    %751 = vmatpush1.msra.mxu0 0.0
    %752 = vmatprep.subr.mxu0 0.0
    %753 = vmatpush1.msra.mxu0 0.0
    %754 = vmatprep.subr.mxu0 0.0
    %755 = vmatpush1.msra.mxu0 0.0
    %756 = vmatprep.subr.mxu0 0.0
    %757 = vmatpush1.msra.mxu0 0.0
    %758 = vmatprep.subr.mxu0 0.0
    %759 = vmatpush1.msra.mxu0 0.0
    %760 = vmatprep.subr.mxu0 0.0
    %761 = vmatpush1.msra.mxu0 0.0
    %762 = vmatprep.subr.mxu0 0.0
    %763 = vmatpush1.msra.mxu0 0.0
    %764 = vmatprep.subr.mxu0 0.0
    %765 = vmatpush1.msra.mxu0 0.0
    %766 = vmatprep.subr.mxu0 0.0
    %767 = vmatpush1.msra.mxu0 0.0
    %768 = vmatprep.subr.mxu0 0.0
    %769 = vmatpush1.msra.mxu0 0.0
    %770 = vmatprep.subr.mxu0 0.0
    %771 = vmatpush1.msra.mxu0 0.0
    %772 = vmatprep.subr.mxu0 0.0
    %773 = vmatpush1.msra.mxu0 0.0
    %774 = vmatprep.mubr.f32.mxu0 0.0
    %775 = vmatmul.mubr.f32.gmra.mrb[0].mxu0 %v634
    %v776 = vpop.f32.mrb[0].mxu0
    %v777 = vadd.f32 0.0, %v776
    %v778 = vpop.f32.mrb[0].mxu0
    %v779 = vadd.f32 0.0, %v778
    %780 = vdwg.mxu0
    %v781 = vadd.f32 %v153, %v706
    %v782 = vadd.f32 %v155, %v708
    %v783 = vadd.f32 %v224, %v777
    %v784 = vadd.f32 %v226, %v779
    %v785 = vxor.u32 %v781, 2147483648
    %v786 = vmul.f32 %v785, 1.442695
    %v787 = vpow.pop %v786
    %v788 = vadd.f32 %v787, 1.0
    %v789 = vrcp.pop %v788
    %v790 = vmul.f32 1.0, %v789
    %v791 = vxor.u32 %v782, 2147483648
    %v792 = vmul.f32 %v791, 1.442695
    %v793 = vpow.pop %v792
    %v794 = vadd.f32 %v793, 1.0
    %v795 = vrcp.pop %v794
    %v796 = vmul.f32 1.0, %v795
    %v797 = vtanh.pop %v783
    %v798 = vxor.u32 %v784, 2147483648
    %v799 = vmul.f32 %v798, 1.442695
    %v800 = vpow.pop %v799
    %v801 = vadd.f32 %v800, 1.0
    %v802 = vrcp.pop %v801
    %v803 = vmul.f32 1.0, %v802
    %v804 = vmul.f32 %v796, %v632
    %v805 = vmul.f32 %v790, %v797
    %v806 = vadd.f32 %v804, %v805
    %v807 = vtanh.pop %v806
    %v808 = vmul.f32 %v803, %v807
    %s809 = scalar_lea.vmem [#allocation2], 16
    %810 = vst [vmem:[%s809] sm:$0xff] %v808
    %s811 = scalar_lea.vmem [#allocation3], 40
    %812 = vst [vmem:[%s811] sm:$0xff] %v808
    %813 = vmatprep.subr.mxu0 %v229
    %814 = vmatpush1.msra.mxu0 %v228
    %815 = vmatprep.subr.mxu0 %v233
    %816 = vmatpush1.msra.mxu0 %v232
    %817 = vmatprep.subr.mxu0 %v237
    %818 = vmatpush1.msra.mxu0 %v236
    %819 = vmatprep.subr.mxu0 %v241
    %820 = vmatpush1.msra.mxu0 %v240
    %821 = vmatprep.subr.mxu0 %v245
    %822 = vmatpush1.msra.mxu0 %v244
    %823 = vmatprep.subr.mxu0 %v249
    %824 = vmatpush1.msra.mxu0 %v248
    %825 = vmatprep.subr.mxu0 %v253
    %826 = vmatpush1.msra.mxu0 %v252
    %827 = vmatprep.subr.mxu0 %v257
    %828 = vmatpush1.msra.mxu0 %v256
    %829 = vmatprep.subr.mxu0 %v261
    %830 = vmatpush1.msra.mxu0 %v260
    %831 = vmatprep.subr.mxu0 %v265
    %832 = vmatpush1.msra.mxu0 %v264
    %833 = vmatprep.subr.mxu0 %v269
    %834 = vmatpush1.msra.mxu0 %v268
    %835 = vmatprep.subr.mxu0 %v273
    %836 = vmatpush1.msra.mxu0 %v272
    %837 = vmatprep.subr.mxu0 %v277
    %838 = vmatpush1.msra.mxu0 %v276
    %839 = vmatprep.subr.mxu0 %v281
    %840 = vmatpush1.msra.mxu0 %v280
    %841 = vmatprep.subr.mxu0 %v285
    %842 = vmatpush1.msra.mxu0 %v284
    %843 = vmatprep.subr.mxu0 %v289
    %844 = vmatpush1.msra.mxu0 %v288
    %845 = vmatprep.subr.mxu0 0.0
    %846 = vmatpush1.msra.mxu0 0.0
    %847 = vmatprep.subr.mxu0 0.0
    %848 = vmatpush1.msra.mxu0 0.0
    %849 = vmatprep.subr.mxu0 0.0
    %850 = vmatpush1.msra.mxu0 0.0
    %851 = vmatprep.subr.mxu0 0.0
    %852 = vmatpush1.msra.mxu0 0.0
    %853 = vmatprep.subr.mxu0 0.0
    %854 = vmatpush1.msra.mxu0 0.0
    %855 = vmatprep.subr.mxu0 0.0
    %856 = vmatpush1.msra.mxu0 0.0
    %857 = vmatprep.subr.mxu0 0.0
    %858 = vmatpush1.msra.mxu0 0.0
    %859 = vmatprep.subr.mxu0 0.0
    %860 = vmatpush1.msra.mxu0 0.0
    %861 = vmatprep.subr.mxu0 0.0
    %862 = vmatpush1.msra.mxu0 0.0
    %863 = vmatprep.subr.mxu0 0.0
    %864 = vmatpush1.msra.mxu0 0.0
    %865 = vmatprep.subr.mxu0 0.0
    %866 = vmatpush1.msra.mxu0 0.0
    %867 = vmatprep.subr.mxu0 0.0
    %868 = vmatpush1.msra.mxu0 0.0
    %869 = vmatprep.subr.mxu0 0.0
    %870 = vmatpush1.msra.mxu0 0.0
    %871 = vmatprep.subr.mxu0 0.0
    %872 = vmatpush1.msra.mxu0 0.0
    %873 = vmatprep.subr.mxu0 0.0
    %874 = vmatpush1.msra.mxu0 0.0
    %875 = vmatprep.subr.mxu0 0.0
    %876 = vmatpush1.msra.mxu0 0.0
    %877 = vmatprep.mubr.f32.mxu0 0.0
    %878 = vmatmul.mubr.f32.gmra.mrb[0].mxu0 %v808
    %v879 = vpop.f32.mrb[0].mxu0
    %v880 = vadd.f32 0.0, %v879
    %v881 = vpop.f32.mrb[0].mxu0
    %v882 = vadd.f32 0.0, %v881
    %883 = vdwg.mxu0
    %884 = vmatprep.subr.mxu0 %v231
    %885 = vmatpush1.msra.mxu0 %v230
    %886 = vmatprep.subr.mxu0 %v235
    %887 = vmatpush1.msra.mxu0 %v234
    %888 = vmatprep.subr.mxu0 %v239
    %889 = vmatpush1.msra.mxu0 %v238
    %890 = vmatprep.subr.mxu0 %v243
    %891 = vmatpush1.msra.mxu0 %v242
    %892 = vmatprep.subr.mxu0 %v247
    %893 = vmatpush1.msra.mxu0 %v246
    %894 = vmatprep.subr.mxu0 %v251
    %895 = vmatpush1.msra.mxu0 %v250
    %896 = vmatprep.subr.mxu0 %v255
    %897 = vmatpush1.msra.mxu0 %v254
    %898 = vmatprep.subr.mxu0 %v259
    %899 = vmatpush1.msra.mxu0 %v258
    %900 = vmatprep.subr.mxu0 %v263
    %901 = vmatpush1.msra.mxu0 %v262
    %902 = vmatprep.subr.mxu0 %v267
    %903 = vmatpush1.msra.mxu0 %v266
    %904 = vmatprep.subr.mxu0 %v271
    %905 = vmatpush1.msra.mxu0 %v270
    %906 = vmatprep.subr.mxu0 %v275
    %907 = vmatpush1.msra.mxu0 %v274
    %908 = vmatprep.subr.mxu0 %v279
    %909 = vmatpush1.msra.mxu0 %v278
    %910 = vmatprep.subr.mxu0 %v283
    %911 = vmatpush1.msra.mxu0 %v282
    %912 = vmatprep.subr.mxu0 %v287
    %913 = vmatpush1.msra.mxu0 %v286
    %914 = vmatprep.subr.mxu0 %v291
    %915 = vmatpush1.msra.mxu0 %v290
    %916 = vmatprep.subr.mxu0 0.0
    %917 = vmatpush1.msra.mxu0 0.0
    %918 = vmatprep.subr.mxu0 0.0
    %919 = vmatpush1.msra.mxu0 0.0
    %920 = vmatprep.subr.mxu0 0.0
    %921 = vmatpush1.msra.mxu0 0.0
    %922 = vmatprep.subr.mxu0 0.0
    %923 = vmatpush1.msra.mxu0 0.0
    %924 = vmatprep.subr.mxu0 0.0
    %925 = vmatpush1.msra.mxu0 0.0
    %926 = vmatprep.subr.mxu0 0.0
    %927 = vmatpush1.msra.mxu0 0.0
    %928 = vmatprep.subr.mxu0 0.0
    %929 = vmatpush1.msra.mxu0 0.0
    %930 = vmatprep.subr.mxu0 0.0
    %931 = vmatpush1.msra.mxu0 0.0
    %932 = vmatprep.subr.mxu0 0.0
    %933 = vmatpush1.msra.mxu0 0.0
    %934 = vmatprep.subr.mxu0 0.0
    %935 = vmatpush1.msra.mxu0 0.0
    %936 = vmatprep.subr.mxu0 0.0
    %937 = vmatpush1.msra.mxu0 0.0
    %938 = vmatprep.subr.mxu0 0.0
    %939 = vmatpush1.msra.mxu0 0.0
    %940 = vmatprep.subr.mxu0 0.0
    %941 = vmatpush1.msra.mxu0 0.0
    %942 = vmatprep.subr.mxu0 0.0
    %943 = vmatpush1.msra.mxu0 0.0
    %944 = vmatprep.subr.mxu0 0.0
    %945 = vmatpush1.msra.mxu0 0.0
    %946 = vmatprep.subr.mxu0 0.0
    %947 = vmatpush1.msra.mxu0 0.0
    %948 = vmatprep.mubr.f32.mxu0 0.0
    %949 = vmatmul.mubr.f32.gmra.mrb[0].mxu0 %v808
    %v950 = vpop.f32.mrb[0].mxu0
    %v951 = vadd.f32 0.0, %v950
    %v952 = vpop.f32.mrb[0].mxu0
    %v953 = vadd.f32 0.0, %v952
    %954 = vdwg.mxu0
    %v955 = vadd.f32 %v153, %v880
    %v956 = vadd.f32 %v155, %v882
    %v957 = vadd.f32 %v224, %v951
    %v958 = vadd.f32 %v226, %v953
    %v959 = vxor.u32 %v955, 2147483648
    %v960 = vmul.f32 %v959, 1.442695
    %v961 = vpow.pop %v960
    %v962 = vadd.f32 %v961, 1.0
    %v963 = vrcp.pop %v962
    %v964 = vmul.f32 1.0, %v963
    %v965 = vxor.u32 %v956, 2147483648
    %v966 = vmul.f32 %v965, 1.442695
    %v967 = vpow.pop %v966
    %v968 = vadd.f32 %v967, 1.0
    %v969 = vrcp.pop %v968
    %v970 = vmul.f32 1.0, %v969
    %v971 = vtanh.pop %v957
    %v972 = vxor.u32 %v958, 2147483648
    %v973 = vmul.f32 %v972, 1.442695
    %v974 = vpow.pop %v973
    %v975 = vadd.f32 %v974, 1.0
    %v976 = vrcp.pop %v975
    %v977 = vmul.f32 1.0, %v976
    %v978 = vmul.f32 %v970, %v806
    %v979 = vmul.f32 %v964, %v971
    %v980 = vadd.f32 %v978, %v979
    %v981 = vtanh.pop %v980
    %v982 = vmul.f32 %v977, %v981
    %s983 = scalar_lea.vmem [#allocation2], 24
    %984 = vst [vmem:[%s983] sm:$0xff] %v982
    %s985 = scalar_lea.vmem [#allocation3], 32
    %986 = vst [vmem:[%s985] sm:$0xff] %v982
    %987 = vmatprep.subr.mxu0 %v229
    %988 = vmatpush1.msra.mxu0 %v228
    %989 = vmatprep.subr.mxu0 %v233
    %990 = vmatpush1.msra.mxu0 %v232
    %991 = vmatprep.subr.mxu0 %v237
    %992 = vmatpush1.msra.mxu0 %v236
    %993 = vmatprep.subr.mxu0 %v241
    %994 = vmatpush1.msra.mxu0 %v240
    %995 = vmatprep.subr.mxu0 %v245
    %996 = vmatpush1.msra.mxu0 %v244
    %997 = vmatprep.subr.mxu0 %v249
    %998 = vmatpush1.msra.mxu0 %v248
    %999 = vmatprep.subr.mxu0 %v253
    %1000 = vmatpush1.msra.mxu0 %v252
    %1001 = vmatprep.subr.mxu0 %v257
    %1002 = vmatpush1.msra.mxu0 %v256
    %1003 = vmatprep.subr.mxu0 %v261
    %1004 = vmatpush1.msra.mxu0 %v260
    %1005 = vmatprep.subr.mxu0 %v265
    %1006 = vmatpush1.msra.mxu0 %v264
    %1007 = vmatprep.subr.mxu0 %v269
    %1008 = vmatpush1.msra.mxu0 %v268
    %1009 = vmatprep.subr.mxu0 %v273
    %1010 = vmatpush1.msra.mxu0 %v272
    %1011 = vmatprep.subr.mxu0 %v277
    %1012 = vmatpush1.msra.mxu0 %v276
    %1013 = vmatprep.subr.mxu0 %v281
    %1014 = vmatpush1.msra.mxu0 %v280
    %1015 = vmatprep.subr.mxu0 %v285
    %1016 = vmatpush1.msra.mxu0 %v284
    %1017 = vmatprep.subr.mxu0 %v289
    %1018 = vmatpush1.msra.mxu0 %v288
    %1019 = vmatprep.subr.mxu0 0.0
    %1020 = vmatpush1.msra.mxu0 0.0
    %1021 = vmatprep.subr.mxu0 0.0
    %1022 = vmatpush1.msra.mxu0 0.0
    %1023 = vmatprep.subr.mxu0 0.0
    %1024 = vmatpush1.msra.mxu0 0.0
    %1025 = vmatprep.subr.mxu0 0.0
    %1026 = vmatpush1.msra.mxu0 0.0
    %1027 = vmatprep.subr.mxu0 0.0
    %1028 = vmatpush1.msra.mxu0 0.0
    %1029 = vmatprep.subr.mxu0 0.0
    %1030 = vmatpush1.msra.mxu0 0.0
    %1031 = vmatprep.subr.mxu0 0.0
    %1032 = vmatpush1.msra.mxu0 0.0
    %1033 = vmatprep.subr.mxu0 0.0
    %1034 = vmatpush1.msra.mxu0 0.0
    %1035 = vmatprep.subr.mxu0 0.0
    %1036 = vmatpush1.msra.mxu0 0.0
    %1037 = vmatprep.subr.mxu0 0.0
    %1038 = vmatpush1.msra.mxu0 0.0
    %1039 = vmatprep.subr.mxu0 0.0
    %1040 = vmatpush1.msra.mxu0 0.0
    %1041 = vmatprep.subr.mxu0 0.0
    %1042 = vmatpush1.msra.mxu0 0.0
    %1043 = vmatprep.subr.mxu0 0.0
    %1044 = vmatpush1.msra.mxu0 0.0
    %1045 = vmatprep.subr.mxu0 0.0
    %1046 = vmatpush1.msra.mxu0 0.0
    %1047 = vmatprep.subr.mxu0 0.0
    %1048 = vmatpush1.msra.mxu0 0.0
    %1049 = vmatprep.subr.mxu0 0.0
    %1050 = vmatpush1.msra.mxu0 0.0
    %1051 = vmatprep.mubr.f32.mxu0 0.0
    %1052 = vmatmul.mubr.f32.gmra.mrb[0].mxu0 %v982
    %v1053 = vpop.f32.mrb[0].mxu0
    %v1054 = vadd.f32 0.0, %v1053
    %v1055 = vpop.f32.mrb[0].mxu0
    %v1056 = vadd.f32 0.0, %v1055
    %1057 = vdwg.mxu0
    %1058 = vmatprep.subr.mxu0 %v231
    %1059 = vmatpush1.msra.mxu0 %v230
    %1060 = vmatprep.subr.mxu0 %v235
    %1061 = vmatpush1.msra.mxu0 %v234
    %1062 = vmatprep.subr.mxu0 %v239
    %1063 = vmatpush1.msra.mxu0 %v238
    %1064 = vmatprep.subr.mxu0 %v243
    %1065 = vmatpush1.msra.mxu0 %v242
    %1066 = vmatprep.subr.mxu0 %v247
    %1067 = vmatpush1.msra.mxu0 %v246
    %1068 = vmatprep.subr.mxu0 %v251
    %1069 = vmatpush1.msra.mxu0 %v250
    %1070 = vmatprep.subr.mxu0 %v255
    %1071 = vmatpush1.msra.mxu0 %v254
    %1072 = vmatprep.subr.mxu0 %v259
    %1073 = vmatpush1.msra.mxu0 %v258
    %1074 = vmatprep.subr.mxu0 %v263
    %1075 = vmatpush1.msra.mxu0 %v262
    %1076 = vmatprep.subr.mxu0 %v267
    %1077 = vmatpush1.msra.mxu0 %v266
    %1078 = vmatprep.subr.mxu0 %v271
    %1079 = vmatpush1.msra.mxu0 %v270
    %1080 = vmatprep.subr.mxu0 %v275
    %1081 = vmatpush1.msra.mxu0 %v274
    %1082 = vmatprep.subr.mxu0 %v279
    %1083 = vmatpush1.msra.mxu0 %v278
    %1084 = vmatprep.subr.mxu0 %v283
    %1085 = vmatpush1.msra.mxu0 %v282
    %1086 = vmatprep.subr.mxu0 %v287
    %1087 = vmatpush1.msra.mxu0 %v286
    %1088 = vmatprep.subr.mxu0 %v291
    %1089 = vmatpush1.msra.mxu0 %v290
    %1090 = vmatprep.subr.mxu0 0.0
    %1091 = vmatpush1.msra.mxu0 0.0
    %1092 = vmatprep.subr.mxu0 0.0
    %1093 = vmatpush1.msra.mxu0 0.0
    %1094 = vmatprep.subr.mxu0 0.0
    %1095 = vmatpush1.msra.mxu0 0.0
    %1096 = vmatprep.subr.mxu0 0.0
    %1097 = vmatpush1.msra.mxu0 0.0
    %1098 = vmatprep.subr.mxu0 0.0
    %1099 = vmatpush1.msra.mxu0 0.0
    %1100 = vmatprep.subr.mxu0 0.0
    %1101 = vmatpush1.msra.mxu0 0.0
    %1102 = vmatprep.subr.mxu0 0.0
    %1103 = vmatpush1.msra.mxu0 0.0
    %1104 = vmatprep.subr.mxu0 0.0
    %1105 = vmatpush1.msra.mxu0 0.0
    %1106 = vmatprep.subr.mxu0 0.0
    %1107 = vmatpush1.msra.mxu0 0.0
    %1108 = vmatprep.subr.mxu0 0.0
    %1109 = vmatpush1.msra.mxu0 0.0
    %1110 = vmatprep.subr.mxu0 0.0
    %1111 = vmatpush1.msra.mxu0 0.0
    %1112 = vmatprep.subr.mxu0 0.0
    %1113 = vmatpush1.msra.mxu0 0.0
    %1114 = vmatprep.subr.mxu0 0.0
    %1115 = vmatpush1.msra.mxu0 0.0
    %1116 = vmatprep.subr.mxu0 0.0
    %1117 = vmatpush1.msra.mxu0 0.0
    %1118 = vmatprep.subr.mxu0 0.0
    %1119 = vmatpush1.msra.mxu0 0.0
    %1120 = vmatprep.subr.mxu0 0.0
    %1121 = vmatpush1.msra.mxu0 0.0
    %1122 = vmatprep.mubr.f32.mxu0 0.0
    %1123 = vmatmul.mubr.f32.gmra.mrb[0].mxu0 %v982
    %v1124 = vpop.f32.mrb[0].mxu0
    %v1125 = vadd.f32 0.0, %v1124
    %v1126 = vpop.f32.mrb[0].mxu0
    %v1127 = vadd.f32 0.0, %v1126
    %1128 = vdwg.mxu0
    %v1129 = vadd.f32 %v153, %v1054
    %v1130 = vadd.f32 %v155, %v1056
    %v1131 = vadd.f32 %v224, %v1125
    %v1132 = vadd.f32 %v226, %v1127
    %v1133 = vxor.u32 %v1129, 2147483648
    %v1134 = vmul.f32 %v1133, 1.442695
    %v1135 = vpow.pop %v1134
    %v1136 = vadd.f32 %v1135, 1.0
    %v1137 = vrcp.pop %v1136
    %v1138 = vmul.f32 1.0, %v1137
    %v1139 = vxor.u32 %v1130, 2147483648
    %v1140 = vmul.f32 %v1139, 1.442695
    %v1141 = vpow.pop %v1140
    %v1142 = vadd.f32 %v1141, 1.0
    %v1143 = vrcp.pop %v1142
    %v1144 = vmul.f32 1.0, %v1143
    %v1145 = vtanh.pop %v1131
    %v1146 = vxor.u32 %v1132, 2147483648
    %v1147 = vmul.f32 %v1146, 1.442695
    %v1148 = vpow.pop %v1147
    %v1149 = vadd.f32 %v1148, 1.0
    %v1150 = vrcp.pop %v1149
    %v1151 = vmul.f32 1.0, %v1150
    %v1152 = vmul.f32 %v1144, %v980
    %v1153 = vmul.f32 %v1138, %v1145
    %v1154 = vadd.f32 %v1152, %v1153
    %v1155 = vtanh.pop %v1154
    %v1156 = vmul.f32 %v1151, %v1155
    %s1157 = scalar_lea.vmem [#allocation2], 32
    %1158 = vst [vmem:[%s1157] sm:$0xff] %v1156
    %s1159 = scalar_lea.vmem [#allocation3], 24
    %1160 = vst [vmem:[%s1159] sm:$0xff] %v1156
    %1161 = vmatprep.subr.mxu0 %v229
    %1162 = vmatpush1.msra.mxu0 %v228
    %1163 = vmatprep.subr.mxu0 %v233
    %1164 = vmatpush1.msra.mxu0 %v232
    %1165 = vmatprep.subr.mxu0 %v237
    %1166 = vmatpush1.msra.mxu0 %v236
    %1167 = vmatprep.subr.mxu0 %v241
    %1168 = vmatpush1.msra.mxu0 %v240
    %1169 = vmatprep.subr.mxu0 %v245
    %1170 = vmatpush1.msra.mxu0 %v244
    %1171 = vmatprep.subr.mxu0 %v249
    %1172 = vmatpush1.msra.mxu0 %v248
    %1173 = vmatprep.subr.mxu0 %v253
    %1174 = vmatpush1.msra.mxu0 %v252
    %1175 = vmatprep.subr.mxu0 %v257
    %1176 = vmatpush1.msra.mxu0 %v256
    %1177 = vmatprep.subr.mxu0 %v261
    %1178 = vmatpush1.msra.mxu0 %v260
    %1179 = vmatprep.subr.mxu0 %v265
    %1180 = vmatpush1.msra.mxu0 %v264
    %1181 = vmatprep.subr.mxu0 %v269
    %1182 = vmatpush1.msra.mxu0 %v268
    %1183 = vmatprep.subr.mxu0 %v273
    %1184 = vmatpush1.msra.mxu0 %v272
    %1185 = vmatprep.subr.mxu0 %v277
    %1186 = vmatpush1.msra.mxu0 %v276
    %1187 = vmatprep.subr.mxu0 %v281
    %1188 = vmatpush1.msra.mxu0 %v280
    %1189 = vmatprep.subr.mxu0 %v285
    %1190 = vmatpush1.msra.mxu0 %v284
    %1191 = vmatprep.subr.mxu0 %v289
    %1192 = vmatpush1.msra.mxu0 %v288
    %1193 = vmatprep.subr.mxu0 0.0
    %1194 = vmatpush1.msra.mxu0 0.0
    %1195 = vmatprep.subr.mxu0 0.0
    %1196 = vmatpush1.msra.mxu0 0.0
    %1197 = vmatprep.subr.mxu0 0.0
    %1198 = vmatpush1.msra.mxu0 0.0
    %1199 = vmatprep.subr.mxu0 0.0
    %1200 = vmatpush1.msra.mxu0 0.0
    %1201 = vmatprep.subr.mxu0 0.0
    %1202 = vmatpush1.msra.mxu0 0.0
    %1203 = vmatprep.subr.mxu0 0.0
    %1204 = vmatpush1.msra.mxu0 0.0
    %1205 = vmatprep.subr.mxu0 0.0
    %1206 = vmatpush1.msra.mxu0 0.0
    %1207 = vmatprep.subr.mxu0 0.0
    %1208 = vmatpush1.msra.mxu0 0.0
    %1209 = vmatprep.subr.mxu0 0.0
    %1210 = vmatpush1.msra.mxu0 0.0
    %1211 = vmatprep.subr.mxu0 0.0
    %1212 = vmatpush1.msra.mxu0 0.0
    %1213 = vmatprep.subr.mxu0 0.0
    %1214 = vmatpush1.msra.mxu0 0.0
    %1215 = vmatprep.subr.mxu0 0.0
    %1216 = vmatpush1.msra.mxu0 0.0
    %1217 = vmatprep.subr.mxu0 0.0
    %1218 = vmatpush1.msra.mxu0 0.0
    %1219 = vmatprep.subr.mxu0 0.0
    %1220 = vmatpush1.msra.mxu0 0.0
    %1221 = vmatprep.subr.mxu0 0.0
    %1222 = vmatpush1.msra.mxu0 0.0
    %1223 = vmatprep.subr.mxu0 0.0
    %1224 = vmatpush1.msra.mxu0 0.0
    %1225 = vmatprep.mubr.f32.mxu0 0.0
    %1226 = vmatmul.mubr.f32.gmra.mrb[0].mxu0 %v1156
    %v1227 = vpop.f32.mrb[0].mxu0
    %v1228 = vadd.f32 0.0, %v1227
    %v1229 = vpop.f32.mrb[0].mxu0
    %v1230 = vadd.f32 0.0, %v1229
    %1231 = vdwg.mxu0
    %1232 = vmatprep.subr.mxu0 %v231
    %1233 = vmatpush1.msra.mxu0 %v230
    %1234 = vmatprep.subr.mxu0 %v235
    %1235 = vmatpush1.msra.mxu0 %v234
    %1236 = vmatprep.subr.mxu0 %v239
    %1237 = vmatpush1.msra.mxu0 %v238
    %1238 = vmatprep.subr.mxu0 %v243
    %1239 = vmatpush1.msra.mxu0 %v242
    %1240 = vmatprep.subr.mxu0 %v247
    %1241 = vmatpush1.msra.mxu0 %v246
    %1242 = vmatprep.subr.mxu0 %v251
    %1243 = vmatpush1.msra.mxu0 %v250
    %1244 = vmatprep.subr.mxu0 %v255
    %1245 = vmatpush1.msra.mxu0 %v254
    %1246 = vmatprep.subr.mxu0 %v259
    %1247 = vmatpush1.msra.mxu0 %v258
    %1248 = vmatprep.subr.mxu0 %v263
    %1249 = vmatpush1.msra.mxu0 %v262
    %1250 = vmatprep.subr.mxu0 %v267
    %1251 = vmatpush1.msra.mxu0 %v266
    %1252 = vmatprep.subr.mxu0 %v271
    %1253 = vmatpush1.msra.mxu0 %v270
    %1254 = vmatprep.subr.mxu0 %v275
    %1255 = vmatpush1.msra.mxu0 %v274
    %1256 = vmatprep.subr.mxu0 %v279
    %1257 = vmatpush1.msra.mxu0 %v278
    %1258 = vmatprep.subr.mxu0 %v283
    %1259 = vmatpush1.msra.mxu0 %v282
    %1260 = vmatprep.subr.mxu0 %v287
    %1261 = vmatpush1.msra.mxu0 %v286
    %1262 = vmatprep.subr.mxu0 %v291
    %1263 = vmatpush1.msra.mxu0 %v290
    %1264 = vmatprep.subr.mxu0 0.0
    %1265 = vmatpush1.msra.mxu0 0.0
    %1266 = vmatprep.subr.mxu0 0.0
    %1267 = vmatpush1.msra.mxu0 0.0
    %1268 = vmatprep.subr.mxu0 0.0
    %1269 = vmatpush1.msra.mxu0 0.0
    %1270 = vmatprep.subr.mxu0 0.0
    %1271 = vmatpush1.msra.mxu0 0.0
    %1272 = vmatprep.subr.mxu0 0.0
    %1273 = vmatpush1.msra.mxu0 0.0
    %1274 = vmatprep.subr.mxu0 0.0
    %1275 = vmatpush1.msra.mxu0 0.0
    %1276 = vmatprep.subr.mxu0 0.0
    %1277 = vmatpush1.msra.mxu0 0.0
    %1278 = vmatprep.subr.mxu0 0.0
    %1279 = vmatpush1.msra.mxu0 0.0
    %1280 = vmatprep.subr.mxu0 0.0
    %1281 = vmatpush1.msra.mxu0 0.0
    %1282 = vmatprep.subr.mxu0 0.0
    %1283 = vmatpush1.msra.mxu0 0.0
    %1284 = vmatprep.subr.mxu0 0.0
    %1285 = vmatpush1.msra.mxu0 0.0
    %1286 = vmatprep.subr.mxu0 0.0
    %1287 = vmatpush1.msra.mxu0 0.0
    %1288 = vmatprep.subr.mxu0 0.0
    %1289 = vmatpush1.msra.mxu0 0.0
    %1290 = vmatprep.subr.mxu0 0.0
    %1291 = vmatpush1.msra.mxu0 0.0
    %1292 = vmatprep.subr.mxu0 0.0
    %1293 = vmatpush1.msra.mxu0 0.0
    %1294 = vmatprep.subr.mxu0 0.0
    %1295 = vmatpush1.msra.mxu0 0.0
    %1296 = vmatprep.mubr.f32.mxu0 0.0
    %1297 = vmatmul.mubr.f32.gmra.mrb[0].mxu0 %v1156
    %v1298 = vpop.f32.mrb[0].mxu0
    %v1299 = vadd.f32 0.0, %v1298
    %v1300 = vpop.f32.mrb[0].mxu0
    %v1301 = vadd.f32 0.0, %v1300
    %1302 = vdwg.mxu0
    %v1303 = vadd.f32 %v153, %v1228
    %v1304 = vadd.f32 %v155, %v1230
    %v1305 = vadd.f32 %v224, %v1299
    %v1306 = vadd.f32 %v226, %v1301
    %v1307 = vxor.u32 %v1303, 2147483648
    %v1308 = vmul.f32 %v1307, 1.442695
    %v1309 = vpow.pop %v1308
    %v1310 = vadd.f32 %v1309, 1.0
    %v1311 = vrcp.pop %v1310
    %v1312 = vmul.f32 1.0, %v1311
    %v1313 = vxor.u32 %v1304, 2147483648
    %v1314 = vmul.f32 %v1313, 1.442695
    %v1315 = vpow.pop %v1314
    %v1316 = vadd.f32 %v1315, 1.0
    %v1317 = vrcp.pop %v1316
    %v1318 = vmul.f32 1.0, %v1317
    %v1319 = vtanh.pop %v1305
    %v1320 = vxor.u32 %v1306, 2147483648
    %v1321 = vmul.f32 %v1320, 1.442695
    %v1322 = vpow.pop %v1321
    %v1323 = vadd.f32 %v1322, 1.0
    %v1324 = vrcp.pop %v1323
    %v1325 = vmul.f32 1.0, %v1324
    %v1326 = vmul.f32 %v1318, %v1154
    %v1327 = vmul.f32 %v1312, %v1319
    %v1328 = vadd.f32 %v1326, %v1327
    %v1329 = vtanh.pop %v1328
    %v1330 = vmul.f32 %v1325, %v1329
    %s1331 = scalar_lea.vmem [#allocation2], 40
    %1332 = vst [vmem:[%s1331] sm:$0xff] %v1330
    %s1333 = scalar_lea.vmem [#allocation3], 16
    %1334 = vst [vmem:[%s1333] sm:$0xff] %v1330
    %1335 = vmatprep.subr.mxu0 %v229
    %1336 = vmatpush1.msra.mxu0 %v228
    %1337 = vmatprep.subr.mxu0 %v233
    %1338 = vmatpush1.msra.mxu0 %v232
    %1339 = vmatprep.subr.mxu0 %v237
    %1340 = vmatpush1.msra.mxu0 %v236
    %1341 = vmatprep.subr.mxu0 %v241
    %1342 = vmatpush1.msra.mxu0 %v240
    %1343 = vmatprep.subr.mxu0 %v245
    %1344 = vmatpush1.msra.mxu0 %v244
    %1345 = vmatprep.subr.mxu0 %v249
    %1346 = vmatpush1.msra.mxu0 %v248
    %1347 = vmatprep.subr.mxu0 %v253
    %1348 = vmatpush1.msra.mxu0 %v252
    %1349 = vmatprep.subr.mxu0 %v257
    %1350 = vmatpush1.msra.mxu0 %v256
    %1351 = vmatprep.subr.mxu0 %v261
    %1352 = vmatpush1.msra.mxu0 %v260
    %1353 = vmatprep.subr.mxu0 %v265
    %1354 = vmatpush1.msra.mxu0 %v264
    %1355 = vmatprep.subr.mxu0 %v269
    %1356 = vmatpush1.msra.mxu0 %v268
    %1357 = vmatprep.subr.mxu0 %v273
    %1358 = vmatpush1.msra.mxu0 %v272
    %1359 = vmatprep.subr.mxu0 %v277
    %1360 = vmatpush1.msra.mxu0 %v276
    %1361 = vmatprep.subr.mxu0 %v281
    %1362 = vmatpush1.msra.mxu0 %v280
    %1363 = vmatprep.subr.mxu0 %v285
    %1364 = vmatpush1.msra.mxu0 %v284
    %1365 = vmatprep.subr.mxu0 %v289
    %1366 = vmatpush1.msra.mxu0 %v288
    %1367 = vmatprep.subr.mxu0 0.0
    %1368 = vmatpush1.msra.mxu0 0.0
    %1369 = vmatprep.subr.mxu0 0.0
    %1370 = vmatpush1.msra.mxu0 0.0
    %1371 = vmatprep.subr.mxu0 0.0
    %1372 = vmatpush1.msra.mxu0 0.0
    %1373 = vmatprep.subr.mxu0 0.0
    %1374 = vmatpush1.msra.mxu0 0.0
    %1375 = vmatprep.subr.mxu0 0.0
    %1376 = vmatpush1.msra.mxu0 0.0
    %1377 = vmatprep.subr.mxu0 0.0
    %1378 = vmatpush1.msra.mxu0 0.0
    %1379 = vmatprep.subr.mxu0 0.0
    %1380 = vmatpush1.msra.mxu0 0.0
    %1381 = vmatprep.subr.mxu0 0.0
    %1382 = vmatpush1.msra.mxu0 0.0
    %1383 = vmatprep.subr.mxu0 0.0
    %1384 = vmatpush1.msra.mxu0 0.0
    %1385 = vmatprep.subr.mxu0 0.0
    %1386 = vmatpush1.msra.mxu0 0.0
    %1387 = vmatprep.subr.mxu0 0.0
    %1388 = vmatpush1.msra.mxu0 0.0
    %1389 = vmatprep.subr.mxu0 0.0
    %1390 = vmatpush1.msra.mxu0 0.0
    %1391 = vmatprep.subr.mxu0 0.0
    %1392 = vmatpush1.msra.mxu0 0.0
    %1393 = vmatprep.subr.mxu0 0.0
    %1394 = vmatpush1.msra.mxu0 0.0
    %1395 = vmatprep.subr.mxu0 0.0
    %1396 = vmatpush1.msra.mxu0 0.0
    %1397 = vmatprep.subr.mxu0 0.0
    %1398 = vmatpush1.msra.mxu0 0.0
    %1399 = vmatprep.mubr.f32.mxu0 0.0
    %1400 = vmatmul.mubr.f32.gmra.mrb[0].mxu0 %v1330
    %v1401 = vpop.f32.mrb[0].mxu0
    %v1402 = vadd.f32 0.0, %v1401
    %v1403 = vpop.f32.mrb[0].mxu0
    %v1404 = vadd.f32 0.0, %v1403
    %1405 = vdwg.mxu0
    %1406 = vmatprep.subr.mxu0 %v231
    %1407 = vmatpush1.msra.mxu0 %v230
    %1408 = vmatprep.subr.mxu0 %v235
    %1409 = vmatpush1.msra.mxu0 %v234
    %1410 = vmatprep.subr.mxu0 %v239
    %1411 = vmatpush1.msra.mxu0 %v238
    %1412 = vmatprep.subr.mxu0 %v243
    %1413 = vmatpush1.msra.mxu0 %v242
    %1414 = vmatprep.subr.mxu0 %v247
    %1415 = vmatpush1.msra.mxu0 %v246
    %1416 = vmatprep.subr.mxu0 %v251
    %1417 = vmatpush1.msra.mxu0 %v250
    %1418 = vmatprep.subr.mxu0 %v255
    %1419 = vmatpush1.msra.mxu0 %v254
    %1420 = vmatprep.subr.mxu0 %v259
    %1421 = vmatpush1.msra.mxu0 %v258
    %1422 = vmatprep.subr.mxu0 %v263
    %1423 = vmatpush1.msra.mxu0 %v262
    %1424 = vmatprep.subr.mxu0 %v267
    %1425 = vmatpush1.msra.mxu0 %v266
    %1426 = vmatprep.subr.mxu0 %v271
    %1427 = vmatpush1.msra.mxu0 %v270
    %1428 = vmatprep.subr.mxu0 %v275
    %1429 = vmatpush1.msra.mxu0 %v274
    %1430 = vmatprep.subr.mxu0 %v279
    %1431 = vmatpush1.msra.mxu0 %v278
    %1432 = vmatprep.subr.mxu0 %v283
    %1433 = vmatpush1.msra.mxu0 %v282
    %1434 = vmatprep.subr.mxu0 %v287
    %1435 = vmatpush1.msra.mxu0 %v286
    %1436 = vmatprep.subr.mxu0 %v291
    %1437 = vmatpush1.msra.mxu0 %v290
    %1438 = vmatprep.subr.mxu0 0.0
    %1439 = vmatpush1.msra.mxu0 0.0
    %1440 = vmatprep.subr.mxu0 0.0
    %1441 = vmatpush1.msra.mxu0 0.0
    %1442 = vmatprep.subr.mxu0 0.0
    %1443 = vmatpush1.msra.mxu0 0.0
    %1444 = vmatprep.subr.mxu0 0.0
    %1445 = vmatpush1.msra.mxu0 0.0
    %1446 = vmatprep.subr.mxu0 0.0
    %1447 = vmatpush1.msra.mxu0 0.0
    %1448 = vmatprep.subr.mxu0 0.0
    %1449 = vmatpush1.msra.mxu0 0.0
    %1450 = vmatprep.subr.mxu0 0.0
    %1451 = vmatpush1.msra.mxu0 0.0
    %1452 = vmatprep.subr.mxu0 0.0
    %1453 = vmatpush1.msra.mxu0 0.0
    %1454 = vmatprep.subr.mxu0 0.0
    %1455 = vmatpush1.msra.mxu0 0.0
    %1456 = vmatprep.subr.mxu0 0.0
    %1457 = vmatpush1.msra.mxu0 0.0
    %1458 = vmatprep.subr.mxu0 0.0
    %1459 = vmatpush1.msra.mxu0 0.0
    %1460 = vmatprep.subr.mxu0 0.0
    %1461 = vmatpush1.msra.mxu0 0.0
    %1462 = vmatprep.subr.mxu0 0.0
    %1463 = vmatpush1.msra.mxu0 0.0
    %1464 = vmatprep.subr.mxu0 0.0
    %1465 = vmatpush1.msra.mxu0 0.0
    %1466 = vmatprep.subr.mxu0 0.0
    %1467 = vmatpush1.msra.mxu0 0.0
    %1468 = vmatprep.subr.mxu0 0.0
    %1469 = vmatpush1.msra.mxu0 0.0
    %1470 = vmatprep.mubr.f32.mxu0 0.0
    %1471 = vmatmul.mubr.f32.gmra.mrb[0].mxu0 %v1330
    %v1472 = vpop.f32.mrb[0].mxu0
    %v1473 = vadd.f32 0.0, %v1472
    %v1474 = vpop.f32.mrb[0].mxu0
    %v1475 = vadd.f32 0.0, %v1474
    %1476 = vdwg.mxu0
    %v1477 = vadd.f32 %v153, %v1402
    %v1478 = vadd.f32 %v155, %v1404
    %v1479 = vadd.f32 %v224, %v1473
    %v1480 = vadd.f32 %v226, %v1475
    %v1481 = vxor.u32 %v1477, 2147483648
    %v1482 = vmul.f32 %v1481, 1.442695
    %v1483 = vpow.pop %v1482
    %v1484 = vadd.f32 %v1483, 1.0
    %v1485 = vrcp.pop %v1484
    %v1486 = vmul.f32 1.0, %v1485
    %v1487 = vxor.u32 %v1478, 2147483648
    %v1488 = vmul.f32 %v1487, 1.442695
    %v1489 = vpow.pop %v1488
    %v1490 = vadd.f32 %v1489, 1.0
    %v1491 = vrcp.pop %v1490
    %v1492 = vmul.f32 1.0, %v1491
    %v1493 = vtanh.pop %v1479
    %v1494 = vxor.u32 %v1480, 2147483648
    %v1495 = vmul.f32 %v1494, 1.442695
    %v1496 = vpow.pop %v1495
    %v1497 = vadd.f32 %v1496, 1.0
    %v1498 = vrcp.pop %v1497
    %v1499 = vmul.f32 1.0, %v1498
    %v1500 = vmul.f32 %v1492, %v1328
    %v1501 = vmul.f32 %v1486, %v1493
    %v1502 = vadd.f32 %v1500, %v1501
    %v1503 = vtanh.pop %v1502
    %v1504 = vmul.f32 %v1499, %v1503
    %s1505 = scalar_lea.vmem [#allocation2], 48
    %1506 = vst [vmem:[%s1505] sm:$0xff] %v1504
    %s1507 = scalar_lea.vmem [#allocation3], 8
    %1508 = vst [vmem:[%s1507] sm:$0xff] %v1504
    %1509 = vmatprep.subr.mxu0 %v229
    %1510 = vmatpush1.msra.mxu0 %v228
    %1511 = vmatprep.subr.mxu0 %v233
    %1512 = vmatpush1.msra.mxu0 %v232
    %1513 = vmatprep.subr.mxu0 %v237
    %1514 = vmatpush1.msra.mxu0 %v236
    %1515 = vmatprep.subr.mxu0 %v241
    %1516 = vmatpush1.msra.mxu0 %v240
    %1517 = vmatprep.subr.mxu0 %v245
    %1518 = vmatpush1.msra.mxu0 %v244
    %1519 = vmatprep.subr.mxu0 %v249
    %1520 = vmatpush1.msra.mxu0 %v248
    %1521 = vmatprep.subr.mxu0 %v253
    %1522 = vmatpush1.msra.mxu0 %v252
    %1523 = vmatprep.subr.mxu0 %v257
    %1524 = vmatpush1.msra.mxu0 %v256
    %1525 = vmatprep.subr.mxu0 %v261
    %1526 = vmatpush1.msra.mxu0 %v260
    %1527 = vmatprep.subr.mxu0 %v265
    %1528 = vmatpush1.msra.mxu0 %v264
    %1529 = vmatprep.subr.mxu0 %v269
    %1530 = vmatpush1.msra.mxu0 %v268
    %1531 = vmatprep.subr.mxu0 %v273
    %1532 = vmatpush1.msra.mxu0 %v272
    %1533 = vmatprep.subr.mxu0 %v277
    %1534 = vmatpush1.msra.mxu0 %v276
    %1535 = vmatprep.subr.mxu0 %v281
    %1536 = vmatpush1.msra.mxu0 %v280
    %1537 = vmatprep.subr.mxu0 %v285
    %1538 = vmatpush1.msra.mxu0 %v284
    %1539 = vmatprep.subr.mxu0 %v289
    %1540 = vmatpush1.msra.mxu0 %v288
    %1541 = vmatprep.subr.mxu0 0.0
    %1542 = vmatpush1.msra.mxu0 0.0
    %1543 = vmatprep.subr.mxu0 0.0
    %1544 = vmatpush1.msra.mxu0 0.0
    %1545 = vmatprep.subr.mxu0 0.0
    %1546 = vmatpush1.msra.mxu0 0.0
    %1547 = vmatprep.subr.mxu0 0.0
    %1548 = vmatpush1.msra.mxu0 0.0
    %1549 = vmatprep.subr.mxu0 0.0
    %1550 = vmatpush1.msra.mxu0 0.0
    %1551 = vmatprep.subr.mxu0 0.0
    %1552 = vmatpush1.msra.mxu0 0.0
    %1553 = vmatprep.subr.mxu0 0.0
    %1554 = vmatpush1.msra.mxu0 0.0
    %1555 = vmatprep.subr.mxu0 0.0
    %1556 = vmatpush1.msra.mxu0 0.0
    %1557 = vmatprep.subr.mxu0 0.0
    %1558 = vmatpush1.msra.mxu0 0.0
    %1559 = vmatprep.subr.mxu0 0.0
    %1560 = vmatpush1.msra.mxu0 0.0
    %1561 = vmatprep.subr.mxu0 0.0
    %1562 = vmatpush1.msra.mxu0 0.0
    %1563 = vmatprep.subr.mxu0 0.0
    %1564 = vmatpush1.msra.mxu0 0.0
    %1565 = vmatprep.subr.mxu0 0.0
    %1566 = vmatpush1.msra.mxu0 0.0
    %1567 = vmatprep.subr.mxu0 0.0
    %1568 = vmatpush1.msra.mxu0 0.0
    %1569 = vmatprep.subr.mxu0 0.0
    %1570 = vmatpush1.msra.mxu0 0.0
    %1571 = vmatprep.subr.mxu0 0.0
    %1572 = vmatpush1.msra.mxu0 0.0
    %1573 = vmatprep.mubr.f32.mxu0 0.0
    %1574 = vmatmul.mubr.f32.gmra.mrb[0].mxu0 %v1504
    %v1575 = vpop.f32.mrb[0].mxu0
    %v1576 = vadd.f32 0.0, %v1575
    %v1577 = vpop.f32.mrb[0].mxu0
    %v1578 = vadd.f32 0.0, %v1577
    %1579 = vdwg.mxu0
    %1580 = vmatprep.subr.mxu0 %v231
    %1581 = vmatpush1.msra.mxu0 %v230
    %1582 = vmatprep.subr.mxu0 %v235
    %1583 = vmatpush1.msra.mxu0 %v234
    %1584 = vmatprep.subr.mxu0 %v239
    %1585 = vmatpush1.msra.mxu0 %v238
    %1586 = vmatprep.subr.mxu0 %v243
    %1587 = vmatpush1.msra.mxu0 %v242
    %1588 = vmatprep.subr.mxu0 %v247
    %1589 = vmatpush1.msra.mxu0 %v246
    %1590 = vmatprep.subr.mxu0 %v251
    %1591 = vmatpush1.msra.mxu0 %v250
    %1592 = vmatprep.subr.mxu0 %v255
    %1593 = vmatpush1.msra.mxu0 %v254
    %1594 = vmatprep.subr.mxu0 %v259
    %1595 = vmatpush1.msra.mxu0 %v258
    %1596 = vmatprep.subr.mxu0 %v263
    %1597 = vmatpush1.msra.mxu0 %v262
    %1598 = vmatprep.subr.mxu0 %v267
    %1599 = vmatpush1.msra.mxu0 %v266
    %1600 = vmatprep.subr.mxu0 %v271
    %1601 = vmatpush1.msra.mxu0 %v270
    %1602 = vmatprep.subr.mxu0 %v275
    %1603 = vmatpush1.msra.mxu0 %v274
    %1604 = vmatprep.subr.mxu0 %v279
    %1605 = vmatpush1.msra.mxu0 %v278
    %1606 = vmatprep.subr.mxu0 %v283
    %1607 = vmatpush1.msra.mxu0 %v282
    %1608 = vmatprep.subr.mxu0 %v287
    %1609 = vmatpush1.msra.mxu0 %v286
    %1610 = vmatprep.subr.mxu0 %v291
    %1611 = vmatpush1.msra.mxu0 %v290
    %1612 = vmatprep.subr.mxu0 0.0
    %1613 = vmatpush1.msra.mxu0 0.0
    %1614 = vmatprep.subr.mxu0 0.0
    %1615 = vmatpush1.msra.mxu0 0.0
    %1616 = vmatprep.subr.mxu0 0.0
    %1617 = vmatpush1.msra.mxu0 0.0
    %1618 = vmatprep.subr.mxu0 0.0
    %1619 = vmatpush1.msra.mxu0 0.0
    %1620 = vmatprep.subr.mxu0 0.0
    %1621 = vmatpush1.msra.mxu0 0.0
    %1622 = vmatprep.subr.mxu0 0.0
    %1623 = vmatpush1.msra.mxu0 0.0
    %1624 = vmatprep.subr.mxu0 0.0
    %1625 = vmatpush1.msra.mxu0 0.0
    %1626 = vmatprep.subr.mxu0 0.0
    %1627 = vmatpush1.msra.mxu0 0.0
    %1628 = vmatprep.subr.mxu0 0.0
    %1629 = vmatpush1.msra.mxu0 0.0
    %1630 = vmatprep.subr.mxu0 0.0
    %1631 = vmatpush1.msra.mxu0 0.0
    %1632 = vmatprep.subr.mxu0 0.0
    %1633 = vmatpush1.msra.mxu0 0.0
    %1634 = vmatprep.subr.mxu0 0.0
    %1635 = vmatpush1.msra.mxu0 0.0
    %1636 = vmatprep.subr.mxu0 0.0
    %1637 = vmatpush1.msra.mxu0 0.0
    %1638 = vmatprep.subr.mxu0 0.0
    %1639 = vmatpush1.msra.mxu0 0.0
    %1640 = vmatprep.subr.mxu0 0.0
    %1641 = vmatpush1.msra.mxu0 0.0
    %1642 = vmatprep.subr.mxu0 0.0
    %1643 = vmatpush1.msra.mxu0 0.0
    %1644 = vmatprep.mubr.f32.mxu0 0.0
    %1645 = vmatmul.mubr.f32.gmra.mrb[0].mxu0 %v1504
    %v1646 = vpop.f32.mrb[0].mxu0
    %v1647 = vadd.f32 0.0, %v1646
    %v1648 = vpop.f32.mrb[0].mxu0
    %v1649 = vadd.f32 0.0, %v1648
    %1650 = vdwg.mxu0
    %v1651 = vadd.f32 %v153, %v1576
    %v1652 = vadd.f32 %v155, %v1578
    %v1653 = vadd.f32 %v224, %v1647
    %v1654 = vadd.f32 %v226, %v1649
    %v1655 = vxor.u32 %v1651, 2147483648
    %v1656 = vmul.f32 %v1655, 1.442695
    %v1657 = vpow.pop %v1656
    %v1658 = vadd.f32 %v1657, 1.0
    %v1659 = vrcp.pop %v1658
    %v1660 = vmul.f32 1.0, %v1659
    %v1661 = vxor.u32 %v1652, 2147483648
    %v1662 = vmul.f32 %v1661, 1.442695
    %v1663 = vpow.pop %v1662
    %v1664 = vadd.f32 %v1663, 1.0
    %v1665 = vrcp.pop %v1664
    %v1666 = vmul.f32 1.0, %v1665
    %v1667 = vtanh.pop %v1653
    %v1668 = vxor.u32 %v1654, 2147483648
    %v1669 = vmul.f32 %v1668, 1.442695
    %v1670 = vpow.pop %v1669
    %v1671 = vadd.f32 %v1670, 1.0
    %v1672 = vrcp.pop %v1671
    %v1673 = vmul.f32 1.0, %v1672
    %v1674 = vmul.f32 %v1666, %v1502
    %v1675 = vmul.f32 %v1660, %v1667
    %v1676 = vadd.f32 %v1674, %v1675
    %v1677 = vtanh.pop %v1676
    %v1678 = vmul.f32 %v1673, %v1677
    %s1679 = scalar_lea.vmem [#allocation2], 56
    %1680 = vst [vmem:[%s1679] sm:$0xff] %v1678
    %1681 = vst [vmem:[#allocation3] sm:$0xff] %v1678
    %v1682 = vld [vmem:[#allocation2] sm:$0xff]
    %v1683 = vld [vmem:[#allocation2 + $0x8] sm:$0xff]
    %v1684 = vld [vmem:[#allocation2 + $0x10] sm:$0xff]
    %v1685 = vld [vmem:[#allocation2 + $0x18] sm:$0xff]
    %v1686 = vld [vmem:[#allocation2 + $0x20] sm:$0xff]
    %v1687 = vld [vmem:[#allocation2 + $0x28] sm:$0xff]
    %v1688 = vld [vmem:[#allocation2 + $0x30] sm:$0xff]
    %v1689 = vld [vmem:[#allocation2 + $0x38] sm:$0xff]
    %v1690 = vld [vmem:[#allocation3] sm:$0xff]
    %v1691 = vld [vmem:[#allocation3 + $0x8] sm:$0xff]
    %v1692 = vld [vmem:[#allocation3 + $0x10] sm:$0xff]
    %v1693 = vld [vmem:[#allocation3 + $0x18] sm:$0xff]
    %v1694 = vld [vmem:[#allocation3 + $0x20] sm:$0xff]
    %v1695 = vld [vmem:[#allocation3 + $0x28] sm:$0xff]
    %v1696 = vld [vmem:[#allocation3 + $0x30] sm:$0xff]
    %v1697 = vld [vmem:[#allocation3 + $0x38] sm:$0xff]
    %v1698 = vld [vmem:[%s4] sm:$0xff]
    %v1699 = vld [vmem:[%s4 + $0x8] sm:$0xff]
    %v1700 = vld [vmem:[%s4 + $0x10] sm:$0xff]
    %v1701 = vld [vmem:[%s4 + $0x18] sm:$0xff]
    %v1702 = vld [vmem:[%s4 + $0x20] sm:$0xff]
    %v1703 = vld [vmem:[%s4 + $0x28] sm:$0xff]
    %v1704 = vld [vmem:[%s4 + $0x30] sm:$0xff]
    %v1705 = vld [vmem:[%s4 + $0x38] sm:$0xff]
    %v1706 = vld [vmem:[%s4 + $0x40] sm:$0xff]
    %v1707 = vld [vmem:[%s4 + $0x48] sm:$0xff]
    %v1708 = vld [vmem:[%s4 + $0x50] sm:$0xff]
    %v1709 = vld [vmem:[%s4 + $0x58] sm:$0xff]
    %v1710 = vld [vmem:[%s4 + $0x60] sm:$0xff]
    %v1711 = vld [vmem:[%s4 + $0x68] sm:$0xff]
    %v1712 = vld [vmem:[%s4 + $0x70] sm:$0xff]
    %v1713 = vld [vmem:[%s4 + $0x78] sm:$0xff]
    %v1714 = vld [vmem:[%s5] sm:$0xff]
    %v1715 = vld [vmem:[%s5 + $0x8] sm:$0xff]
    %v1716 = vld [vmem:[%s5 + $0x10] sm:$0xff]
    %v1717 = vld [vmem:[%s5 + $0x18] sm:$0xff]
    %v1718 = vld [vmem:[%s5 + $0x20] sm:$0xff]
    %v1719 = vld [vmem:[%s5 + $0x28] sm:$0xff]
    %v1720 = vld [vmem:[%s5 + $0x30] sm:$0xff]
    %v1721 = vld [vmem:[%s5 + $0x38] sm:$0xff]
    %v1722 = vld [vmem:[%s5 + $0x40] sm:$0xff]
    %v1723 = vld [vmem:[%s5 + $0x48] sm:$0xff]
    %v1724 = vld [vmem:[%s5 + $0x50] sm:$0xff]
    %v1725 = vld [vmem:[%s5 + $0x58] sm:$0xff]
    %v1726 = vld [vmem:[%s5 + $0x60] sm:$0xff]
    %v1727 = vld [vmem:[%s5 + $0x68] sm:$0xff]
    %v1728 = vld [vmem:[%s5 + $0x70] sm:$0xff]
    %v1729 = vld [vmem:[%s5 + $0x78] sm:$0xff]
    %1730 = vmatprep.subr.mxu0 0.0
    %1731 = vmatpush1.msra.mxu0 %v1714
    %1732 = vmatprep.subr.mxu0 0.0
    %1733 = vmatpush1.msra.mxu0 %v1715
    %1734 = vmatprep.subr.mxu0 0.0
    %1735 = vmatpush1.msra.mxu0 %v1716
    %1736 = vmatprep.subr.mxu0 0.0
    %1737 = vmatpush1.msra.mxu0 %v1717
    %1738 = vmatprep.subr.mxu0 0.0
    %1739 = vmatpush1.msra.mxu0 %v1718
    %1740 = vmatprep.subr.mxu0 0.0
    %1741 = vmatpush1.msra.mxu0 %v1719
    %1742 = vmatprep.subr.mxu0 0.0
    %1743 = vmatpush1.msra.mxu0 %v1720
    %1744 = vmatprep.subr.mxu0 0.0
    %1745 = vmatpush1.msra.mxu0 %v1721
    %1746 = vmatprep.subr.mxu0 0.0
    %1747 = vmatpush1.msra.mxu0 %v1722
    %1748 = vmatprep.subr.mxu0 0.0
    %1749 = vmatpush1.msra.mxu0 %v1723
    %1750 = vmatprep.subr.mxu0 0.0
    %1751 = vmatpush1.msra.mxu0 %v1724
    %1752 = vmatprep.subr.mxu0 0.0
    %1753 = vmatpush1.msra.mxu0 %v1725
    %1754 = vmatprep.subr.mxu0 0.0
    %1755 = vmatpush1.msra.mxu0 %v1726
    %1756 = vmatprep.subr.mxu0 0.0
    %1757 = vmatpush1.msra.mxu0 %v1727
    %1758 = vmatprep.subr.mxu0 0.0
    %1759 = vmatpush1.msra.mxu0 %v1728
    %1760 = vmatprep.subr.mxu0 0.0
    %1761 = vmatpush1.msra.mxu0 %v1729
    %1762 = vmatprep.subr.mxu0 0.0
    %1763 = vmatpush1.msra.mxu0 0.0
    %1764 = vmatprep.subr.mxu0 0.0
    %1765 = vmatpush1.msra.mxu0 0.0
    %1766 = vmatprep.subr.mxu0 0.0
    %1767 = vmatpush1.msra.mxu0 0.0
    %1768 = vmatprep.subr.mxu0 0.0
    %1769 = vmatpush1.msra.mxu0 0.0
    %1770 = vmatprep.subr.mxu0 0.0
    %1771 = vmatpush1.msra.mxu0 0.0
    %1772 = vmatprep.subr.mxu0 0.0
    %1773 = vmatpush1.msra.mxu0 0.0
    %1774 = vmatprep.subr.mxu0 0.0
    %1775 = vmatpush1.msra.mxu0 0.0
    %1776 = vmatprep.subr.mxu0 0.0
    %1777 = vmatpush1.msra.mxu0 0.0
    %1778 = vmatprep.subr.mxu0 0.0
    %1779 = vmatpush1.msra.mxu0 0.0
    %1780 = vmatprep.subr.mxu0 0.0
    %1781 = vmatpush1.msra.mxu0 0.0
    %1782 = vmatprep.subr.mxu0 0.0
    %1783 = vmatpush1.msra.mxu0 0.0
    %1784 = vmatprep.subr.mxu0 0.0
    %1785 = vmatpush1.msra.mxu0 0.0
    %1786 = vmatprep.subr.mxu0 0.0
    %1787 = vmatpush1.msra.mxu0 0.0
    %1788 = vmatprep.subr.mxu0 0.0
    %1789 = vmatpush1.msra.mxu0 0.0
    %1790 = vmatprep.subr.mxu0 0.0
    %1791 = vmatpush1.msra.mxu0 0.0
    %1792 = vmatprep.subr.mxu0 0.0
    %1793 = vmatpush1.msra.mxu0 0.0
    %1794 = vmatprep.mubr.f32.mxu0 0.0
    %1795 = vmatmul.mubr.f32.gmra.mrb[0].mxu0 %v1690
    %v1796 = vpop.f32.mrb[0].mxu0
    %v1797 = vadd.f32 0.0, %v1796
    %v1798 = vpop.f32.mrb[0].mxu0
    %1799 = vmatprep.mubr.f32.mxu0 0.0
    %1800 = vmatmul.mubr.f32.gmra.mrb[0].mxu0 %v1691
    %v1801 = vpop.f32.mrb[0].mxu0
    %v1802 = vadd.f32 0.0, %v1801
    %v1803 = vpop.f32.mrb[0].mxu0
    %1804 = vmatprep.mubr.f32.mxu0 0.0
    %1805 = vmatmul.mubr.f32.gmra.mrb[0].mxu0 %v1692
    %v1806 = vpop.f32.mrb[0].mxu0
    %v1807 = vadd.f32 0.0, %v1806
    %v1808 = vpop.f32.mrb[0].mxu0
    %1809 = vmatprep.mubr.f32.mxu0 0.0
    %1810 = vmatmul.mubr.f32.gmra.mrb[0].mxu0 %v1693
    %v1811 = vpop.f32.mrb[0].mxu0
    %v1812 = vadd.f32 0.0, %v1811
    %v1813 = vpop.f32.mrb[0].mxu0
    %1814 = vmatprep.mubr.f32.mxu0 0.0
    %1815 = vmatmul.mubr.f32.gmra.mrb[0].mxu0 %v1694
    %v1816 = vpop.f32.mrb[0].mxu0
    %v1817 = vadd.f32 0.0, %v1816
    %v1818 = vpop.f32.mrb[0].mxu0
    %1819 = vmatprep.mubr.f32.mxu0 0.0
    %1820 = vmatmul.mubr.f32.gmra.mrb[0].mxu0 %v1695
    %v1821 = vpop.f32.mrb[0].mxu0
    %v1822 = vadd.f32 0.0, %v1821
    %v1823 = vpop.f32.mrb[0].mxu0
    %1824 = vmatprep.mubr.f32.mxu0 0.0
    %1825 = vmatmul.mubr.f32.gmra.mrb[0].mxu0 %v1696
    %v1826 = vpop.f32.mrb[0].mxu0
    %v1827 = vadd.f32 0.0, %v1826
    %v1828 = vpop.f32.mrb[0].mxu0
    %1829 = vmatprep.mubr.f32.mxu0 0.0
    %1830 = vmatmul.mubr.f32.gmra.mrb[0].mxu0 %v1697
    %v1831 = vpop.f32.mrb[0].mxu0
    %v1832 = vadd.f32 0.0, %v1831
    %v1833 = vpop.f32.mrb[0].mxu0
    %1834 = vdwg.mxu0
    %1835 = vmatprep.subr.mxu0 0.0
    %1836 = vmatpush1.msra.mxu0 %v1698
    %1837 = vmatprep.subr.mxu0 0.0
    %1838 = vmatpush1.msra.mxu0 %v1699
    %1839 = vmatprep.subr.mxu0 0.0
    %1840 = vmatpush1.msra.mxu0 %v1700
    %1841 = vmatprep.subr.mxu0 0.0
    %1842 = vmatpush1.msra.mxu0 %v1701
    %1843 = vmatprep.subr.mxu0 0.0
    %1844 = vmatpush1.msra.mxu0 %v1702
    %1845 = vmatprep.subr.mxu0 0.0
    %1846 = vmatpush1.msra.mxu0 %v1703
    %1847 = vmatprep.subr.mxu0 0.0
    %1848 = vmatpush1.msra.mxu0 %v1704
    %1849 = vmatprep.subr.mxu0 0.0
    %1850 = vmatpush1.msra.mxu0 %v1705
    %1851 = vmatprep.subr.mxu0 0.0
    %1852 = vmatpush1.msra.mxu0 %v1706
    %1853 = vmatprep.subr.mxu0 0.0
    %1854 = vmatpush1.msra.mxu0 %v1707
    %1855 = vmatprep.subr.mxu0 0.0
    %1856 = vmatpush1.msra.mxu0 %v1708
    %1857 = vmatprep.subr.mxu0 0.0
    %1858 = vmatpush1.msra.mxu0 %v1709
    %1859 = vmatprep.subr.mxu0 0.0
    %1860 = vmatpush1.msra.mxu0 %v1710
    %1861 = vmatprep.subr.mxu0 0.0
    %1862 = vmatpush1.msra.mxu0 %v1711
    %1863 = vmatprep.subr.mxu0 0.0
    %1864 = vmatpush1.msra.mxu0 %v1712
    %1865 = vmatprep.subr.mxu0 0.0
    %1866 = vmatpush1.msra.mxu0 %v1713
    %1867 = vmatprep.subr.mxu0 0.0
    %1868 = vmatpush1.msra.mxu0 0.0
    %1869 = vmatprep.subr.mxu0 0.0
    %1870 = vmatpush1.msra.mxu0 0.0
    %1871 = vmatprep.subr.mxu0 0.0
    %1872 = vmatpush1.msra.mxu0 0.0
    %1873 = vmatprep.subr.mxu0 0.0
    %1874 = vmatpush1.msra.mxu0 0.0
    %1875 = vmatprep.subr.mxu0 0.0
    %1876 = vmatpush1.msra.mxu0 0.0
    %1877 = vmatprep.subr.mxu0 0.0
    %1878 = vmatpush1.msra.mxu0 0.0
    %1879 = vmatprep.subr.mxu0 0.0
    %1880 = vmatpush1.msra.mxu0 0.0
    %1881 = vmatprep.subr.mxu0 0.0
    %1882 = vmatpush1.msra.mxu0 0.0
    %1883 = vmatprep.subr.mxu0 0.0
    %1884 = vmatpush1.msra.mxu0 0.0
    %1885 = vmatprep.subr.mxu0 0.0
    %1886 = vmatpush1.msra.mxu0 0.0
    %1887 = vmatprep.subr.mxu0 0.0
    %1888 = vmatpush1.msra.mxu0 0.0
    %1889 = vmatprep.subr.mxu0 0.0
    %1890 = vmatpush1.msra.mxu0 0.0
    %1891 = vmatprep.subr.mxu0 0.0
    %1892 = vmatpush1.msra.mxu0 0.0
    %1893 = vmatprep.subr.mxu0 0.0
    %1894 = vmatpush1.msra.mxu0 0.0
    %1895 = vmatprep.subr.mxu0 0.0
    %1896 = vmatpush1.msra.mxu0 0.0
    %1897 = vmatprep.subr.mxu0 0.0
    %1898 = vmatpush1.msra.mxu0 0.0
    %1899 = vmatprep.mubr.f32.mxu0 0.0
    %1900 = vmatmul.mubr.f32.gmra.mrb[0].mxu0 %v1682
    %v1901 = vpop.f32.mrb[0].mxu0
    %v1902 = vadd.f32 %v1797, %v1901
    %v1903 = vpop.f32.mrb[0].mxu0
    %1904 = vmatprep.mubr.f32.mxu0 0.0
    %1905 = vmatmul.mubr.f32.gmra.mrb[0].mxu0 %v1683
    %v1906 = vpop.f32.mrb[0].mxu0
    %v1907 = vadd.f32 %v1802, %v1906
    %v1908 = vpop.f32.mrb[0].mxu0
    %1909 = vmatprep.mubr.f32.mxu0 0.0
    %1910 = vmatmul.mubr.f32.gmra.mrb[0].mxu0 %v1684
    %v1911 = vpop.f32.mrb[0].mxu0
    %v1912 = vadd.f32 %v1807, %v1911
    %v1913 = vpop.f32.mrb[0].mxu0
    %1914 = vmatprep.mubr.f32.mxu0 0.0
    %1915 = vmatmul.mubr.f32.gmra.mrb[0].mxu0 %v1685
    %v1916 = vpop.f32.mrb[0].mxu0
    %v1917 = vadd.f32 %v1812, %v1916
    %v1918 = vpop.f32.mrb[0].mxu0
    %1919 = vmatprep.mubr.f32.mxu0 0.0
    %1920 = vmatmul.mubr.f32.gmra.mrb[0].mxu0 %v1686
    %v1921 = vpop.f32.mrb[0].mxu0
    %v1922 = vadd.f32 %v1817, %v1921
    %v1923 = vpop.f32.mrb[0].mxu0
    %1924 = vmatprep.mubr.f32.mxu0 0.0
    %1925 = vmatmul.mubr.f32.gmra.mrb[0].mxu0 %v1687
    %v1926 = vpop.f32.mrb[0].mxu0
    %v1927 = vadd.f32 %v1822, %v1926
    %v1928 = vpop.f32.mrb[0].mxu0
    %1929 = vmatprep.mubr.f32.mxu0 0.0
    %1930 = vmatmul.mubr.f32.gmra.mrb[0].mxu0 %v1688
    %v1931 = vpop.f32.mrb[0].mxu0
    %v1932 = vadd.f32 %v1827, %v1931
    %v1933 = vpop.f32.mrb[0].mxu0
    %1934 = vmatprep.mubr.f32.mxu0 0.0
    %1935 = vmatmul.mubr.f32.gmra.mrb[0].mxu0 %v1689
    %v1936 = vpop.f32.mrb[0].mxu0
    %v1937 = vadd.f32 %v1832, %v1936
    %v1938 = vpop.f32.mrb[0].mxu0
    %1939 = vdwg.mxu0
    %v1940 = vld [vmem:[%s6] sm:$0x1]
    %v1942 = vlaneseq
    %v1943 = vshrl.u32 %v1942, 7
    %v1944 = vsub.s32 0, %v1943
    %v1945 = vrot.slane %v1940, %v1944
    %v1947 = vadd.f32 %v1902, %v1945
    %v1948 = vadd.f32 %v1907, %v1945
    %v1949 = vadd.f32 %v1912, %v1945
    %v1950 = vadd.f32 %v1917, %v1945
    %v1951 = vadd.f32 %v1922, %v1945
    %v1952 = vadd.f32 %v1927, %v1945
    %v1953 = vadd.f32 %v1932, %v1945
    %v1954 = vadd.f32 %v1937, %v1945
    %vm1955 = vcmask 64512
    %1956 = vst.msk [vmem:[#allocation4] sm:$0xff] %vm1955, %v1947
    %1957 = vst.msk [vmem:[#allocation4 + $0x8] sm:$0xff] %vm1955, %v1948
    %1958 = vst.msk [vmem:[#allocation4 + $0x10] sm:$0xff] %vm1955, %v1949
    %1959 = vst.msk [vmem:[#allocation4 + $0x18] sm:$0xff] %vm1955, %v1950
    %1960 = vst.msk [vmem:[#allocation4 + $0x20] sm:$0xff] %vm1955, %v1951
    %1961 = vst.msk [vmem:[#allocation4 + $0x28] sm:$0xff] %vm1955, %v1952
    %1962 = vst.msk [vmem:[#allocation4 + $0x30] sm:$0xff] %vm1955, %v1953
    %1963 = vst.msk [vmem:[#allocation4 + $0x38] sm:$0xff] %vm1955, %v1954
    %1972 = vrot.lane.b32.xlu0 %v1947, 120
    %v1973 = vpop.permute.xlu0 %1972
    %1974 = vrot.lane.b32.xlu0 %v1948, 120
    %v1975 = vpop.permute.xlu0 %1974
    %1976 = vrot.lane.b32.xlu0 %v1949, 120
    %v1977 = vpop.permute.xlu0 %1976
    %1978 = vrot.lane.b32.xlu0 %v1950, 120
    %v1979 = vpop.permute.xlu0 %1978
    %1980 = vrot.lane.b32.xlu0 %v1951, 120
    %v1981 = vpop.permute.xlu0 %1980
    %1982 = vrot.lane.b32.xlu0 %v1952, 120
    %v1983 = vpop.permute.xlu0 %1982
    %1984 = vrot.lane.b32.xlu0 %v1953, 120
    %v1985 = vpop.permute.xlu0 %1984
    %1986 = vrot.lane.b32.xlu0 %v1954, 120
    %v1987 = vpop.permute.xlu0 %1986
    %1996 = vst.msk [vmem:[#allocation5] sm:$0xff] %vm1955, %v1973
    %1997 = vst.msk [vmem:[#allocation5 + $0x8] sm:$0xff] %vm1955, %v1975
    %1998 = vst.msk [vmem:[#allocation5 + $0x10] sm:$0xff] %vm1955, %v1977
    %1999 = vst.msk [vmem:[#allocation5 + $0x18] sm:$0xff] %vm1955, %v1979
    %2000 = vst.msk [vmem:[#allocation5 + $0x20] sm:$0xff] %vm1955, %v1981
    %2001 = vst.msk [vmem:[#allocation5 + $0x28] sm:$0xff] %vm1955, %v1983
    %2002 = vst.msk [vmem:[#allocation5 + $0x30] sm:$0xff] %vm1955, %v1985
    %2003 = vst.msk [vmem:[#allocation5 + $0x38] sm:$0xff] %vm1955, %v1987
    %v2004 = vld [vmem:[%s7] sm:$0x1]
    %v2005 = vld [vmem:[#allocation4] sm:$0xff]
    %s2006 = scalar_lea.vmem [#allocation5], 56
    %v2007 = vld [vmem:[%s2006] sm:$0xff]
    %v2008 = vadd.f32 %v2005, %v2007
    %v2010 = vlaneseq
    %v2011 = vshrl.u32 %v2010, 7
    %v2012 = vsub.s32 0, %v2011
    %v2013 = vrot.slane %v2004, %v2012
    %v2015 = vmul.f32 %v2013, 0.0
    %v2016 = vadd.f32 %v2008, %v2015
    %v2017 = vxor.u32 %v2016, 2147483648
    %v2018 = vmul.f32 %v2017, 1.442695
    %v2019 = vpow.pop %v2018
    %v2020 = vadd.f32 %v2019, 1.0
    %v2021 = vrcp.pop %v2020
    %v2022 = vmul.f32 1.0, %v2021
    %v2023 = vtanh.pop %v2016
    %v2024 = vmul.f32 %v2022, 0.0
    %2026 = vrot.lane.b32.xlu0 %v2023, 124
    %v2027 = vpop.permute.xlu0 %2026
    %v2029 = vmul.f32 %v2022, %v2027
    %2031 = vrot.lane.b32.xlu0 %v2029, 2
    %v2032 = vpop.permute.xlu0 %2031
    %v2034 = vadd.f32 %v2024, %v2032
    %v2035 = vtanh.pop %v2034
    %2037 = vrot.lane.b32.xlu0 %v2035, 4
    %v2038 = vpop.permute.xlu0 %2037
    %v2040 = vmul.f32 %v2022, %v2038
    %2042 = vset.pattern.permute.xlu0 6
    %2043 = vperm.xlu0 %2042, %v2040
    %v2044 = vpop.permute.xlu0 %2043
    %v2045 = vlaneseq
    %v2046 = vand.u32 %v2045, 127
    %v2047 = vlaneseq
    %v2048 = vshrl.u32 %v2047, 7
    %v2049 = vsub.s32 %v2046, %v2048
    %v2050 = vrot.slane %v2044, %v2049
    %vm2052 = vcmask 57344
    %2053 = vst.msk [vmem:[#allocation6] sm:$0x1] %vm2052, %v2050
    %2054 = vset.pattern.permute.xlu0 7
    %2055 = vperm.xlu0 %2054, %v2040
    %v2056 = vpop.permute.xlu0 %2055
    %v2057 = vlaneseq
    %v2058 = vshrl.u32 %v2057, 7
    %v2059 = vsub.s32 %v2046, %v2058
    %v2060 = vrot.slane %v2056, %v2059
    %2062 = vst.msk [vmem:[#allocation7 + $0x7] sm:$0x1] %vm2052, %v2060
    %s2063 = scalar_lea.vmem [#allocation4], 8
    %v2064 = vld [vmem:[%s2063] sm:$0xff]
    %s2065 = scalar_lea.vmem [#allocation5], 48
    %v2066 = vld [vmem:[%s2065] sm:$0xff]
    %v2067 = vadd.f32 %v2064, %v2066
    %2068 = vrot.lane.b32.xlu0 %v2040, 122
    %v2069 = vpop.permute.xlu0 %2068
    %2071 = vrot.lane.b32.xlu0 %v2040, 124
    %v2072 = vpop.permute.xlu0 %2071
    %2074 = vrot.lane.b32.xlu0 %v2040, 126
    %v2075 = vpop.permute.xlu0 %2074
    %vm2077 = vcmask 15360
    %v2078 = vsel %vm2077, %v2069, %v2072
    %vm2079 = vcmask 31744
    %v2080 = vsel %vm2079, %v2078, %v2075
    %vm2081 = vcmask 48128
    %v2082 = vsel %vm2081, %v2080, %v2040
    %v2083 = vmul.f32 %v2082, %v2013
    %v2084 = vadd.f32 %v2067, %v2083
    %v2085 = vxor.u32 %v2084, 2147483648
    %v2086 = vmul.f32 %v2085, 1.442695
    %v2087 = vpow.pop %v2086
    %v2088 = vadd.f32 %v2087, 1.0
    %v2089 = vrcp.pop %v2088
    %v2090 = vmul.f32 1.0, %v2089
    %v2091 = vtanh.pop %v2084
    %v2092 = vmul.f32 %v2090, %v2034
    %2094 = vrot.lane.b32.xlu0 %v2091, 124
    %v2095 = vpop.permute.xlu0 %2094
    %v2097 = vmul.f32 %v2090, %v2095
    %2099 = vrot.lane.b32.xlu0 %v2097, 2
    %v2100 = vpop.permute.xlu0 %2099
    %v2102 = vadd.f32 %v2092, %v2100
    %v2103 = vtanh.pop %v2102
    %2105 = vrot.lane.b32.xlu0 %v2103, 4
    %v2106 = vpop.permute.xlu0 %2105
    %v2108 = vmul.f32 %v2090, %v2106
    %2110 = vset.pattern.permute.xlu0 6
    %2111 = vperm.xlu0 %2110, %v2108
    %v2112 = vpop.permute.xlu0 %2111
    %v2113 = vlaneseq
    %v2114 = vshrl.u32 %v2113, 7
    %v2115 = vsub.s32 %v2046, %v2114
    %v2116 = vrot.slane %v2112, %v2115
    %2118 = vst.msk [vmem:[#allocation6 + $0x1] sm:$0x1] %vm2052, %v2116
    %2119 = vset.pattern.permute.xlu0 7
    %2120 = vperm.xlu0 %2119, %v2108
    %v2121 = vpop.permute.xlu0 %2120
    %v2122 = vlaneseq
    %v2123 = vshrl.u32 %v2122, 7
    %v2124 = vsub.s32 %v2046, %v2123
    %v2125 = vrot.slane %v2121, %v2124
    %2127 = vst.msk [vmem:[#allocation7 + $0x6] sm:$0x1] %vm2052, %v2125
    %s2128 = scalar_lea.vmem [#allocation4], 16
    %v2129 = vld [vmem:[%s2128] sm:$0xff]
    %s2130 = scalar_lea.vmem [#allocation5], 40
    %v2131 = vld [vmem:[%s2130] sm:$0xff]
    %v2132 = vadd.f32 %v2129, %v2131
    %2133 = vrot.lane.b32.xlu0 %v2108, 122
    %v2134 = vpop.permute.xlu0 %2133
    %2136 = vrot.lane.b32.xlu0 %v2108, 124
    %v2137 = vpop.permute.xlu0 %2136
    %2139 = vrot.lane.b32.xlu0 %v2108, 126
    %v2140 = vpop.permute.xlu0 %2139
    %v2142 = vsel %vm2077, %v2134, %v2137
    %v2143 = vsel %vm2079, %v2142, %v2140
    %v2144 = vsel %vm2081, %v2143, %v2108
    %v2145 = vmul.f32 %v2144, %v2013
    %v2146 = vadd.f32 %v2132, %v2145
    %v2147 = vxor.u32 %v2146, 2147483648
    %v2148 = vmul.f32 %v2147, 1.442695
    %v2149 = vpow.pop %v2148
    %v2150 = vadd.f32 %v2149, 1.0
    %v2151 = vrcp.pop %v2150
    %v2152 = vmul.f32 1.0, %v2151
    %v2153 = vtanh.pop %v2146
    %v2154 = vmul.f32 %v2152, %v2102
    %2156 = vrot.lane.b32.xlu0 %v2153, 124
    %v2157 = vpop.permute.xlu0 %2156
    %v2159 = vmul.f32 %v2152, %v2157
    %2161 = vrot.lane.b32.xlu0 %v2159, 2
    %v2162 = vpop.permute.xlu0 %2161
    %v2164 = vadd.f32 %v2154, %v2162
    %v2165 = vtanh.pop %v2164
    %2167 = vrot.lane.b32.xlu0 %v2165, 4
    %v2168 = vpop.permute.xlu0 %2167
    %v2170 = vmul.f32 %v2152, %v2168
    %2172 = vset.pattern.permute.xlu0 6
    %2173 = vperm.xlu0 %2172, %v2170
    %v2174 = vpop.permute.xlu0 %2173
    %v2175 = vlaneseq
    %v2176 = vshrl.u32 %v2175, 7
    %v2177 = vsub.s32 %v2046, %v2176
    %v2178 = vrot.slane %v2174, %v2177
    %2180 = vst.msk [vmem:[#allocation6 + $0x2] sm:$0x1] %vm2052, %v2178
    %2181 = vset.pattern.permute.xlu0 7
    %2182 = vperm.xlu0 %2181, %v2170
    %v2183 = vpop.permute.xlu0 %2182
    %v2184 = vlaneseq
    %v2185 = vshrl.u32 %v2184, 7
    %v2186 = vsub.s32 %v2046, %v2185
    %v2187 = vrot.slane %v2183, %v2186
    %2189 = vst.msk [vmem:[#allocation7 + $0x5] sm:$0x1] %vm2052, %v2187
    %s2190 = scalar_lea.vmem [#allocation4], 24
    %v2191 = vld [vmem:[%s2190] sm:$0xff]
    %s2192 = scalar_lea.vmem [#allocation5], 32
    %v2193 = vld [vmem:[%s2192] sm:$0xff]
    %v2194 = vadd.f32 %v2191, %v2193
    %2195 = vrot.lane.b32.xlu0 %v2170, 122
    %v2196 = vpop.permute.xlu0 %2195
    %2198 = vrot.lane.b32.xlu0 %v2170, 124
    %v2199 = vpop.permute.xlu0 %2198
    %2201 = vrot.lane.b32.xlu0 %v2170, 126
    %v2202 = vpop.permute.xlu0 %2201
    %v2204 = vsel %vm2077, %v2196, %v2199
    %v2205 = vsel %vm2079, %v2204, %v2202
    %v2206 = vsel %vm2081, %v2205, %v2170
    %v2207 = vmul.f32 %v2206, %v2013
    %v2208 = vadd.f32 %v2194, %v2207
    %v2209 = vxor.u32 %v2208, 2147483648
    %v2210 = vmul.f32 %v2209, 1.442695
    %v2211 = vpow.pop %v2210
    %v2212 = vadd.f32 %v2211, 1.0
    %v2213 = vrcp.pop %v2212
    %v2214 = vmul.f32 1.0, %v2213
    %v2215 = vtanh.pop %v2208
    %v2216 = vmul.f32 %v2214, %v2164
    %2218 = vrot.lane.b32.xlu0 %v2215, 124
    %v2219 = vpop.permute.xlu0 %2218
    %v2221 = vmul.f32 %v2214, %v2219
    %2223 = vrot.lane.b32.xlu0 %v2221, 2
    %v2224 = vpop.permute.xlu0 %2223
    %v2226 = vadd.f32 %v2216, %v2224
    %v2227 = vtanh.pop %v2226
    %2229 = vrot.lane.b32.xlu0 %v2227, 4
    %v2230 = vpop.permute.xlu0 %2229
    %v2232 = vmul.f32 %v2214, %v2230
    %2234 = vset.pattern.permute.xlu0 6
    %2235 = vperm.xlu0 %2234, %v2232
    %v2236 = vpop.permute.xlu0 %2235
    %v2237 = vlaneseq
    %v2238 = vshrl.u32 %v2237, 7
    %v2239 = vsub.s32 %v2046, %v2238
    %v2240 = vrot.slane %v2236, %v2239
    %2242 = vst.msk [vmem:[#allocation6 + $0x3] sm:$0x1] %vm2052, %v2240
    %2243 = vset.pattern.permute.xlu0 7
    %2244 = vperm.xlu0 %2243, %v2232
    %v2245 = vpop.permute.xlu0 %2244
    %v2246 = vlaneseq
    %v2247 = vshrl.u32 %v2246, 7
    %v2248 = vsub.s32 %v2046, %v2247
    %v2249 = vrot.slane %v2245, %v2248
    %2251 = vst.msk [vmem:[#allocation7 + $0x4] sm:$0x1] %vm2052, %v2249
    %s2252 = scalar_lea.vmem [#allocation4], 32
    %v2253 = vld [vmem:[%s2252] sm:$0xff]
    %s2254 = scalar_lea.vmem [#allocation5], 24
    %v2255 = vld [vmem:[%s2254] sm:$0xff]
    %v2256 = vadd.f32 %v2253, %v2255
    %2257 = vrot.lane.b32.xlu0 %v2232, 122
    %v2258 = vpop.permute.xlu0 %2257
    %2260 = vrot.lane.b32.xlu0 %v2232, 124
    %v2261 = vpop.permute.xlu0 %2260
    %2263 = vrot.lane.b32.xlu0 %v2232, 126
    %v2264 = vpop.permute.xlu0 %2263
    %v2266 = vsel %vm2077, %v2258, %v2261
    %v2267 = vsel %vm2079, %v2266, %v2264
    %v2268 = vsel %vm2081, %v2267, %v2232
    %v2269 = vmul.f32 %v2268, %v2013
    %v2270 = vadd.f32 %v2256, %v2269
    %v2271 = vxor.u32 %v2270, 2147483648
    %v2272 = vmul.f32 %v2271, 1.442695
    %v2273 = vpow.pop %v2272
    %v2274 = vadd.f32 %v2273, 1.0
    %v2275 = vrcp.pop %v2274
    %v2276 = vmul.f32 1.0, %v2275
    %v2277 = vtanh.pop %v2270
    %v2278 = vmul.f32 %v2276, %v2226
    %2280 = vrot.lane.b32.xlu0 %v2277, 124
    %v2281 = vpop.permute.xlu0 %2280
    %v2283 = vmul.f32 %v2276, %v2281
    %2285 = vrot.lane.b32.xlu0 %v2283, 2
    %v2286 = vpop.permute.xlu0 %2285
    %v2288 = vadd.f32 %v2278, %v2286
    %v2289 = vtanh.pop %v2288
    %2291 = vrot.lane.b32.xlu0 %v2289, 4
    %v2292 = vpop.permute.xlu0 %2291
    %v2294 = vmul.f32 %v2276, %v2292
    %2296 = vset.pattern.permute.xlu0 6
    %2297 = vperm.xlu0 %2296, %v2294
    %v2298 = vpop.permute.xlu0 %2297
    %v2299 = vlaneseq
    %v2300 = vshrl.u32 %v2299, 7
    %v2301 = vsub.s32 %v2046, %v2300
    %v2302 = vrot.slane %v2298, %v2301
    %2304 = vst.msk [vmem:[#allocation6 + $0x4] sm:$0x1] %vm2052, %v2302
    %2305 = vset.pattern.permute.xlu0 7
    %2306 = vperm.xlu0 %2305, %v2294
    %v2307 = vpop.permute.xlu0 %2306
    %v2308 = vlaneseq
    %v2309 = vshrl.u32 %v2308, 7
    %v2310 = vsub.s32 %v2046, %v2309
    %v2311 = vrot.slane %v2307, %v2310
    %2313 = vst.msk [vmem:[#allocation7 + $0x3] sm:$0x1] %vm2052, %v2311
    %s2314 = scalar_lea.vmem [#allocation4], 40
    %v2315 = vld [vmem:[%s2314] sm:$0xff]
    %s2316 = scalar_lea.vmem [#allocation5], 16
    %v2317 = vld [vmem:[%s2316] sm:$0xff]
    %v2318 = vadd.f32 %v2315, %v2317
    %2319 = vrot.lane.b32.xlu0 %v2294, 122
    %v2320 = vpop.permute.xlu0 %2319
    %2322 = vrot.lane.b32.xlu0 %v2294, 124
    %v2323 = vpop.permute.xlu0 %2322
    %2325 = vrot.lane.b32.xlu0 %v2294, 126
    %v2326 = vpop.permute.xlu0 %2325
    %v2328 = vsel %vm2077, %v2320, %v2323
    %v2329 = vsel %vm2079, %v2328, %v2326
    %v2330 = vsel %vm2081, %v2329, %v2294
    %v2331 = vmul.f32 %v2330, %v2013
    %v2332 = vadd.f32 %v2318, %v2331
    %v2333 = vxor.u32 %v2332, 2147483648
    %v2334 = vmul.f32 %v2333, 1.442695
    %v2335 = vpow.pop %v2334
    %v2336 = vadd.f32 %v2335, 1.0
    %v2337 = vrcp.pop %v2336
    %v2338 = vmul.f32 1.0, %v2337
    %v2339 = vtanh.pop %v2332
    %v2340 = vmul.f32 %v2338, %v2288
    %2342 = vrot.lane.b32.xlu0 %v2339, 124
    %v2343 = vpop.permute.xlu0 %2342
    %v2345 = vmul.f32 %v2338, %v2343
    %2347 = vrot.lane.b32.xlu0 %v2345, 2
    %v2348 = vpop.permute.xlu0 %2347
    %v2350 = vadd.f32 %v2340, %v2348
    %v2351 = vtanh.pop %v2350
    %2353 = vrot.lane.b32.xlu0 %v2351, 4
    %v2354 = vpop.permute.xlu0 %2353
    %v2356 = vmul.f32 %v2338, %v2354
    %2358 = vset.pattern.permute.xlu0 6
    %2359 = vperm.xlu0 %2358, %v2356
    %v2360 = vpop.permute.xlu0 %2359
    %v2361 = vlaneseq
    %v2362 = vshrl.u32 %v2361, 7
    %v2363 = vsub.s32 %v2046, %v2362
    %v2364 = vrot.slane %v2360, %v2363
    %2366 = vst.msk [vmem:[#allocation6 + $0x5] sm:$0x1] %vm2052, %v2364
    %2367 = vset.pattern.permute.xlu0 7
    %2368 = vperm.xlu0 %2367, %v2356
    %v2369 = vpop.permute.xlu0 %2368
    %v2370 = vlaneseq
    %v2371 = vshrl.u32 %v2370, 7
    %v2372 = vsub.s32 %v2046, %v2371
    %v2373 = vrot.slane %v2369, %v2372
    %2375 = vst.msk [vmem:[#allocation7 + $0x2] sm:$0x1] %vm2052, %v2373
    %s2376 = scalar_lea.vmem [#allocation4], 48
    %v2377 = vld [vmem:[%s2376] sm:$0xff]
    %s2378 = scalar_lea.vmem [#allocation5], 8
    %v2379 = vld [vmem:[%s2378] sm:$0xff]
    %v2380 = vadd.f32 %v2377, %v2379
    %2381 = vrot.lane.b32.xlu0 %v2356, 122
    %v2382 = vpop.permute.xlu0 %2381
    %2384 = vrot.lane.b32.xlu0 %v2356, 124
    %v2385 = vpop.permute.xlu0 %2384
    %2387 = vrot.lane.b32.xlu0 %v2356, 126
    %v2388 = vpop.permute.xlu0 %2387
    %v2390 = vsel %vm2077, %v2382, %v2385
    %v2391 = vsel %vm2079, %v2390, %v2388
    %v2392 = vsel %vm2081, %v2391, %v2356
    %v2393 = vmul.f32 %v2392, %v2013
    %v2394 = vadd.f32 %v2380, %v2393
    %v2395 = vxor.u32 %v2394, 2147483648
    %v2396 = vmul.f32 %v2395, 1.442695
    %v2397 = vpow.pop %v2396
    %v2398 = vadd.f32 %v2397, 1.0
    %v2399 = vrcp.pop %v2398
    %v2400 = vmul.f32 1.0, %v2399
    %v2401 = vtanh.pop %v2394
    %v2402 = vmul.f32 %v2400, %v2350
    %2404 = vrot.lane.b32.xlu0 %v2401, 124
    %v2405 = vpop.permute.xlu0 %2404
    %v2407 = vmul.f32 %v2400, %v2405
    %2409 = vrot.lane.b32.xlu0 %v2407, 2
    %v2410 = vpop.permute.xlu0 %2409
    %v2412 = vadd.f32 %v2402, %v2410
    %v2413 = vtanh.pop %v2412
    %2415 = vrot.lane.b32.xlu0 %v2413, 4
    %v2416 = vpop.permute.xlu0 %2415
    %v2418 = vmul.f32 %v2400, %v2416
    %2420 = vset.pattern.permute.xlu0 6
    %2421 = vperm.xlu0 %2420, %v2418
    %v2422 = vpop.permute.xlu0 %2421
    %v2423 = vlaneseq
    %v2424 = vshrl.u32 %v2423, 7
    %v2425 = vsub.s32 %v2046, %v2424
    %v2426 = vrot.slane %v2422, %v2425
    %2428 = vst.msk [vmem:[#allocation6 + $0x6] sm:$0x1] %vm2052, %v2426
    %2429 = vset.pattern.permute.xlu0 7
    %2430 = vperm.xlu0 %2429, %v2418
    %v2431 = vpop.permute.xlu0 %2430
    %v2432 = vlaneseq
    %v2433 = vshrl.u32 %v2432, 7
    %v2434 = vsub.s32 %v2046, %v2433
    %v2435 = vrot.slane %v2431, %v2434
    %2437 = vst.msk [vmem:[#allocation7 + $0x1] sm:$0x1] %vm2052, %v2435
    %s2438 = scalar_lea.vmem [#allocation4], 56
    %v2439 = vld [vmem:[%s2438] sm:$0xff]
    %v2440 = vld [vmem:[#allocation5] sm:$0xff]
    %v2441 = vadd.f32 %v2439, %v2440
    %2442 = vrot.lane.b32.xlu0 %v2418, 122
    %v2443 = vpop.permute.xlu0 %2442
    %2445 = vrot.lane.b32.xlu0 %v2418, 124
    %v2446 = vpop.permute.xlu0 %2445
    %2448 = vrot.lane.b32.xlu0 %v2418, 126
    %v2449 = vpop.permute.xlu0 %2448
    %v2451 = vsel %vm2077, %v2443, %v2446
    %v2452 = vsel %vm2079, %v2451, %v2449
    %v2453 = vsel %vm2081, %v2452, %v2418
    %v2454 = vmul.f32 %v2453, %v2013
    %v2455 = vadd.f32 %v2441, %v2454
    %v2456 = vxor.u32 %v2455, 2147483648
    %v2457 = vmul.f32 %v2456, 1.442695
    %v2458 = vpow.pop %v2457
    %v2459 = vadd.f32 %v2458, 1.0
    %v2460 = vrcp.pop %v2459
    %v2461 = vmul.f32 1.0, %v2460
    %v2462 = vtanh.pop %v2455
    %v2463 = vmul.f32 %v2461, %v2412
    %2465 = vrot.lane.b32.xlu0 %v2462, 124
    %v2466 = vpop.permute.xlu0 %2465
    %v2468 = vmul.f32 %v2461, %v2466
    %2470 = vrot.lane.b32.xlu0 %v2468, 2
    %v2471 = vpop.permute.xlu0 %2470
    %v2473 = vadd.f32 %v2463, %v2471
    %v2474 = vtanh.pop %v2473
    %2476 = vrot.lane.b32.xlu0 %v2474, 4
    %v2477 = vpop.permute.xlu0 %2476
    %v2479 = vmul.f32 %v2461, %v2477
    %2481 = vset.pattern.permute.xlu0 6
    %2482 = vperm.xlu0 %2481, %v2479
    %v2483 = vpop.permute.xlu0 %2482
    %v2484 = vlaneseq
    %v2485 = vshrl.u32 %v2484, 7
    %v2486 = vsub.s32 %v2046, %v2485
    %v2487 = vrot.slane %v2483, %v2486
    %2489 = vst.msk [vmem:[#allocation6 + $0x7] sm:$0x1] %vm2052, %v2487
    %2490 = vset.pattern.permute.xlu0 7
    %2491 = vperm.xlu0 %2490, %v2479
    %v2492 = vpop.permute.xlu0 %2491
    %v2493 = vlaneseq
    %v2494 = vshrl.u32 %v2493, 7
    %v2495 = vsub.s32 %v2046, %v2494
    %v2496 = vrot.slane %v2492, %v2495
    %2498 = vst.msk [vmem:[#allocation7] sm:$0x1] %vm2052, %v2496
    %v2499 = vld [vmem:[#allocation6] sm:$0xff]
    %v2500 = vld [vmem:[#allocation7] sm:$0xff]
    %v2501 = vadd.f32 %v2499, %v2500
    %2502 = vst.msk [vmem:[%s8] sm:$0xff] %vm1955, %v2501
    // Predicated region
    $region38: #{lstm_decoder_forward.1} parent=1 // pred_check
      _
    $region39: #{lstm_decoder_forward.1} parent=1 // pred_check_branch
      %2504 = sbr.rel (0) target = $region41
    $region40: #{lstm_decoder_forward.1} parent=1 // pred_region
      _
    $region41: #{lstm_decoder_forward.1} parent=1 // pred_fallthru
      _
    // Predicated region
    $region42: #{lstm_decoder_forward.1} parent=1 // pred_check
      _
    $region43: #{lstm_decoder_forward.1} parent=1 // pred_check_branch
      %2506 = sbr.rel (0) target = $region45
    $region44: #{lstm_decoder_forward.1} parent=1 // pred_region
      _
    $region45: #{lstm_decoder_forward.1} parent=1 // pred_fallthru
      _
    %2507 = vsyncpa [#allocation9], 1

</llo_original>
